<compile_context>
chip_gen: v7x
topology: tpu7x:2x2x1
jax: 0.10.0
libtpu: 0.0.40
codegen_flags: <defaults>
</compile_context>

<pallas_src>
import jax
import jax.numpy as jnp
from jax.experimental import pallas as pl
from jax.experimental.pallas import tpu as pltpu

H_DIM = 256     # matches Model.h_dim
OUT_PAD = 128   # lane-dense padded width for the classifier head


def gru_classifier_kernel(x_ref, w_ih_ref, bias_ref, w_hh_ref, b_hn_ref,
                          w_out_ref, b_out_ref, out_ref, gi_sc):
    """x_ref:    (T*B, in_dim) f32, time-major flattened input
       w_ih_ref: (in_dim, 3H) f32
       bias_ref: (1, 3H) f32  (b_ih with b_hh r/z slices folded in)
       w_hh_ref: (H, 3H) f32
       b_hn_ref: (1, H) f32   (n-gate hh bias, must stay inside r*(...))
       w_out_ref:(H, OUT_PAD) bf16, b_out_ref: (1, OUT_PAD) f32
       out_ref:  (B, OUT_PAD) f32
       gi_sc:    (T*B, 3H) f32 VMEM scratch for the hoisted input projection."""
    H = H_DIM
    B = out_ref.shape[0]
    T = x_ref.shape[0] // B

    # ---- Prologue: input projection for all timesteps in one MXU matmul ----
    gi_all = jnp.dot(x_ref[...], w_ih_ref[...],
                     preferred_element_type=jnp.float32) + bias_ref[...]
    gi_sc[...] = gi_all                                   # (T*B, 3H) in VMEM

    w_hh = w_hh_ref[...]                                  # (H, 3H) f32, loaded once
    # Hoisted broadcast (not CSE'd by JAX; unroll=True would emit T copies).
    b_hn_b = jnp.broadcast_to(b_hn_ref[...], (B, H))      # (B, H)

    # ---- Serial GRU recurrence (f32 state + gates) ----
    def step(t, h):
        row0 = pl.multiple_of(t * B, 8)                   # aligned sublane start
        gi = gi_sc[pl.ds(row0, B), :]                     # (B, 3H)
        gh = jnp.dot(h, w_hh, preferred_element_type=jnp.float32)   # (B, 3H)
        r = jax.nn.sigmoid(gi[:, 0:H] + gh[:, 0:H])
        z = jax.nn.sigmoid(gi[:, H:2 * H] + gh[:, H:2 * H])
        n = jnp.tanh(gi[:, 2 * H:] + r * (gh[:, 2 * H:] + b_hn_b))
        return (1.0 - z) * n + z * h

    h0 = jnp.zeros((B, H), jnp.float32)
    # T=8: full unroll is right. For T in the hundreds, cap unroll (e.g. 8).
    h = jax.lax.fori_loop(0, T, step, h0, unroll=True)

    # ---- Classifier head: bf16 operands, f32 accumulation, lane-dense store ----
    out_ref[...] = (jnp.dot(h.astype(jnp.bfloat16), w_out_ref[...],
                            preferred_element_type=jnp.float32)
                    + b_out_ref[...])


def gru_classifier(x, params):
    """x: (B, T, in_dim) f32 -> logits (B, num_classes) f32 (eval-mode forward)."""
    w_ih, w_hh, b_ih, b_hh, w_out, b_out = params
    B, T, in_dim = x.shape
    num_classes = w_out.shape[1]
    H = H_DIM

    # Pad batch to the f32 sublane tile (8); no-op for B=8.
    B_pad = -(-B // 8) * 8
    if B_pad != B:
        x = jnp.pad(x, ((0, B_pad - B), (0, 0), (0, 0)))

    # Tiny time-major flatten (~T*B*in_dim*4 bytes). The big gi matmul and its
    # HBM round trip now live inside the kernel prologue.
    x_tm = jnp.swapaxes(x, 0, 1).reshape(T * B_pad, in_dim)

    # Fold b_ih and the r/z slices of b_hh; keep the n-gate hh-bias separate.
    bias_fold = b_ih.at[:, :2 * H].add(b_hh[:, :2 * H])           # (1, 3H)
    b_hn = b_hh[:, 2 * H:]                                        # (1, H)

    # Lane-dense bf16 classifier head weight (pad to 128 lanes, slice afterwards).
    w_out_p = jnp.zeros((H, OUT_PAD), jnp.bfloat16).at[:, :num_classes].set(
        w_out.astype(jnp.bfloat16))
    b_out_p = jnp.zeros((1, OUT_PAD), jnp.float32).at[:, :num_classes].set(b_out)

    # Advisory cost hint for XLA scheduling around this tiny custom call.
    flops = (2 * T * B_pad * in_dim * 3 * H          # input projection
             + 2 * T * B_pad * H * 3 * H             # recurrence
             + 2 * B_pad * H * OUT_PAD)              # head
    transcendentals = 3 * T * B_pad * H              # 2x sigmoid + tanh per step
    bytes_accessed = 4 * (x_tm.size + w_ih.size + bias_fold.size + w_hh.size
                          + b_hn.size + b_out_p.size + B_pad * OUT_PAD) \
                     + 2 * w_out_p.size

    # Footprint (~0.7 MB) is trivially VMEM-resident on v5e/v6e/v7x. If T*B grows
    # (e.g. T=512, B=64 => gi ~ 24 MB f32), tile gi over T with an 'arbitrary'
    # grid axis carrying h in scratch, and on v7x add a 'parallel' batch axis
    # once B >~ 128 to use the second TensorCore.
    vmem = pl.BlockSpec(memory_space=pltpu.MemorySpace.VMEM)
    out = pl.pallas_call(
        gru_classifier_kernel,
        out_shape=jax.ShapeDtypeStruct((B_pad, OUT_PAD), jnp.float32),
        in_specs=[vmem] * 7,
        out_specs=vmem,
        scratch_shapes=[pltpu.VMEM((T * B_pad, 3 * H), jnp.float32)],
        cost_estimate=pl.CostEstimate(flops=flops,
                                      transcendentals=transcendentals,
                                      bytes_accessed=bytes_accessed),
    )(x_tm, w_ih, bias_fold, w_hh, b_hn, w_out_p, b_out_p)
    return out[:B, :num_classes]


def init_params(key, in_dim, num_classes):
    """Deterministic init mimicking PyTorch uniform(-1/sqrt(H), 1/sqrt(H))."""
    ks = jax.random.split(key, 6)
    k_gru = 1.0 / jnp.sqrt(H_DIM)
    k_lin = 1.0 / jnp.sqrt(H_DIM)
    # stored transposed relative to PyTorch: (in_dim, 3H), (H, 3H), (H, C)
    w_ih = jax.random.uniform(ks[0], (in_dim, 3 * H_DIM), jnp.float32, -k_gru, k_gru)
    w_hh = jax.random.uniform(ks[1], (H_DIM, 3 * H_DIM), jnp.float32, -k_gru, k_gru)
    b_ih = jax.random.uniform(ks[2], (1, 3 * H_DIM), jnp.float32, -k_gru, k_gru)
    b_hh = jax.random.uniform(ks[3], (1, 3 * H_DIM), jnp.float32, -k_gru, k_gru)
    w_out = jax.random.uniform(ks[4], (H_DIM, num_classes), jnp.float32, -k_lin, k_lin)
    b_out = jax.random.uniform(ks[5], (1, num_classes), jnp.float32, -k_lin, k_lin)
    return (w_ih, w_hh, b_ih, b_hh, w_out, b_out)


def reference(x, params):
    """Pure-JAX f32 reference of the same forward pass (eval-mode dropout)."""
    w_ih, w_hh, b_ih, b_hh, w_out, b_out = params
    B, T, _ = x.shape
    h = jnp.zeros((B, H_DIM), jnp.float32)
    H = H_DIM
    for t in range(T):
        gi = x[:, t, :] @ w_ih + b_ih
        gh = h @ w_hh + b_hh
        r = jax.nn.sigmoid(gi[:, :H] + gh[:, :H])
        z = jax.nn.sigmoid(gi[:, H:2 * H] + gh[:, H:2 * H])
        n = jnp.tanh(gi[:, 2 * H:] + r * gh[:, 2 * H:])
        h = (1.0 - z) * n + z * h
    return h @ w_out + b_out


if __name__ == "__main__":
    key = jax.random.PRNGKey(0)
    k_x, k_p = jax.random.split(key)

    B, T, IN_DIM, NUM_CLASSES = 8, 8, 32, 10
    x = jax.random.normal(k_x, (B, T, IN_DIM), jnp.float32)
    params = init_params(k_p, IN_DIM, NUM_CLASSES)

    out = jax.block_until_ready(gru_classifier(x, params))
    ref = reference(x, params)

    assert out.shape == (B, NUM_CLASSES)
    # Recurrence is fully f32 (matches the reference to ~1e-6); the only reduced
    # precision is the bf16 classifier-head matmul (f32 accumulate), whose error
    # on these logits is ~1e-3 -> 1e-2 tolerance is comfortable and discriminating.
    assert jnp.allclose(out, ref, atol=1e-2, rtol=1e-2), \
        float(jnp.max(jnp.abs(out - ref)))

    print("KERNEL_OK")
</pallas_src>

<mosaic_0001>
module attributes {stable_mosaic.version = 11 : i64} {
  func.func @gru_classifier_kernel(%arg0: memref<64x32xf32, #tpu.memory_space<vmem>>, %arg1: memref<32x768xf32, #tpu.memory_space<vmem>>, %arg2: memref<1x768xf32, #tpu.memory_space<vmem>>, %arg3: memref<256x768xf32, #tpu.memory_space<vmem>>, %arg4: memref<1x256xf32, #tpu.memory_space<vmem>>, %arg5: memref<256x128xbf16, #tpu.memory_space<vmem>>, %arg6: memref<1x128xf32, #tpu.memory_space<vmem>>, %arg7: memref<8x128xf32, #tpu.memory_space<vmem>>, %arg8: memref<64x768xf32, #tpu.memory_space<vmem>>) attributes {dimension_semantics = [], scalar_prefetch = 0 : i64, scratch_operands = 1 : i64, tpu.core_type = #tpu.core_type<tc>} {
    %c0 = arith.constant 0 : index
    %c0_0 = arith.constant 0 : index
    %0 = vector.load %arg0[%c0, %c0_0] : memref<64x32xf32, #tpu.memory_space<vmem>>, vector<64x32xf32>
    %c0_1 = arith.constant 0 : index
    %c0_2 = arith.constant 0 : index
    %1 = vector.load %arg1[%c0_1, %c0_2] : memref<32x768xf32, #tpu.memory_space<vmem>>, vector<32x768xf32>
    %cst = arith.constant dense<0.000000e+00> : vector<64x768xf32>
    %2 = tpu.matmul %0, %1, %cst {dimension_numbers = #tpu.dot_dimension_numbers<[1], [0], [0], [1], [0, 0, 1, 1], [], []>} : vector<64x32xf32>, vector<32x768xf32>, vector<64x768xf32> -> vector<64x768xf32>
    %c0_3 = arith.constant 0 : index
    %c0_4 = arith.constant 0 : index
    %3 = vector.load %arg2[%c0_3, %c0_4] : memref<1x768xf32, #tpu.memory_space<vmem>>, vector<1x768xf32>
    %4 = vector.broadcast %3 : vector<1x768xf32> to vector<64x768xf32>
    %5 = arith.addf %2, %4 : vector<64x768xf32>
    %c0_5 = arith.constant 0 : index
    %c0_6 = arith.constant 0 : index
    %6 = vector.load %arg8[%c0_5, %c0_6] : memref<64x768xf32, #tpu.memory_space<vmem>>, vector<64x768xf32>
    tpu.vector_store %arg8[%c0_5, %c0_6], %5 {strides = array<i32>} : memref<64x768xf32, #tpu.memory_space<vmem>>, vector<64x768xf32>,
    %c0_7 = arith.constant 0 : index
    %c0_8 = arith.constant 0 : index
    %7 = vector.load %arg3[%c0_7, %c0_8] : memref<256x768xf32, #tpu.memory_space<vmem>>, vector<256x768xf32>
    %c0_9 = arith.constant 0 : index
    %c0_10 = arith.constant 0 : index
    %8 = vector.load %arg4[%c0_9, %c0_10] : memref<1x256xf32, #tpu.memory_space<vmem>>, vector<1x256xf32>
    %9 = vector.shape_cast %8 : vector<1x256xf32> to vector<1x256xf32>
    %10 = vector.broadcast %9 : vector<1x256xf32> to vector<8x256xf32>
    %cst_11 = arith.constant 0.000000e+00 : f32
    %11 = vector.broadcast %cst_11 : f32 to vector<8x256xf32>
    %c0_i32 = arith.constant 0 : i32
    %c8_i32 = arith.constant 8 : i32
    %12 = arith.muli %c0_i32, %c8_i32 : i32
    %13 = tpu.assume_multiple %12, 8 : i32
    %14 = arith.index_cast %13 : i32 to index
    %c0_12 = arith.constant 0 : index
    %15 = vector.load %arg8[%14, %c0_12] : memref<64x768xf32, #tpu.memory_space<vmem>>, vector<8x768xf32>
    %cst_13 = arith.constant dense<0.000000e+00> : vector<8x768xf32>
    %16 = tpu.matmul %11, %7, %cst_13 {dimension_numbers = #tpu.dot_dimension_numbers<[1], [0], [0], [1], [0, 0, 1, 1], [], []>} : vector<8x256xf32>, vector<256x768xf32>, vector<8x768xf32> -> vector<8x768xf32>
    %17 = vector.extract_strided_slice %15 {offsets = [0, 0], sizes = [8, 256], strides = [1, 1]} : vector<8x768xf32> to vector<8x256xf32>
    %18 = vector.extract_strided_slice %16 {offsets = [0, 0], sizes = [8, 256], strides = [1, 1]} : vector<8x768xf32> to vector<8x256xf32>
    %19 = arith.addf %17, %18 : vector<8x256xf32>
    %20 = arith.negf %19 : vector<8x256xf32>
    %21 = math.exp %20 : vector<8x256xf32>
    %cst_14 = arith.constant 1.000000e+00 : f32
    %22 = vector.broadcast %cst_14 : f32 to vector<8x256xf32>
    %23 = arith.addf %22, %21 : vector<8x256xf32>
    %24 = arith.divf %22, %23 : vector<8x256xf32>
    %25 = vector.extract_strided_slice %15 {offsets = [0, 256], sizes = [8, 256], strides = [1, 1]} : vector<8x768xf32> to vector<8x256xf32>
    %26 = vector.extract_strided_slice %16 {offsets = [0, 256], sizes = [8, 256], strides = [1, 1]} : vector<8x768xf32> to vector<8x256xf32>
    %27 = arith.addf %25, %26 : vector<8x256xf32>
    %28 = arith.negf %27 : vector<8x256xf32>
    %29 = math.exp %28 : vector<8x256xf32>
    %cst_15 = arith.constant 1.000000e+00 : f32
    %30 = vector.broadcast %cst_15 : f32 to vector<8x256xf32>
    %31 = arith.addf %30, %29 : vector<8x256xf32>
    %32 = arith.divf %30, %31 : vector<8x256xf32>
    %33 = vector.extract_strided_slice %15 {offsets = [0, 512], sizes = [8, 256], strides = [1, 1]} : vector<8x768xf32> to vector<8x256xf32>
    %34 = vector.extract_strided_slice %16 {offsets = [0, 512], sizes = [8, 256], strides = [1, 1]} : vector<8x768xf32> to vector<8x256xf32>
    %35 = arith.addf %34, %10 : vector<8x256xf32>
    %36 = arith.mulf %24, %35 : vector<8x256xf32>
    %37 = arith.addf %33, %36 : vector<8x256xf32>
    %38 = math.tanh %37 : vector<8x256xf32>
    %cst_16 = arith.constant 1.000000e+00 : f32
    %39 = vector.broadcast %cst_16 : f32 to vector<8x256xf32>
    %40 = arith.subf %39, %32 : vector<8x256xf32>
    %41 = arith.mulf %40, %38 : vector<8x256xf32>
    %42 = arith.mulf %32, %11 : vector<8x256xf32>
    %43 = arith.addf %41, %42 : vector<8x256xf32>
    %c1_i32 = arith.constant 1 : i32
    %c8_i32_17 = arith.constant 8 : i32
    %44 = arith.muli %c1_i32, %c8_i32_17 : i32
    %45 = tpu.assume_multiple %44, 8 : i32
    %46 = arith.index_cast %45 : i32 to index
    %c0_18 = arith.constant 0 : index
    %47 = vector.load %arg8[%46, %c0_18] : memref<64x768xf32, #tpu.memory_space<vmem>>, vector<8x768xf32>
    %cst_19 = arith.constant dense<0.000000e+00> : vector<8x768xf32>
    %48 = tpu.matmul %43, %7, %cst_19 {dimension_numbers = #tpu.dot_dimension_numbers<[1], [0], [0], [1], [0, 0, 1, 1], [], []>} : vector<8x256xf32>, vector<256x768xf32>, vector<8x768xf32> -> vector<8x768xf32>
    %49 = vector.extract_strided_slice %47 {offsets = [0, 0], sizes = [8, 256], strides = [1, 1]} : vector<8x768xf32> to vector<8x256xf32>
    %50 = vector.extract_strided_slice %48 {offsets = [0, 0], sizes = [8, 256], strides = [1, 1]} : vector<8x768xf32> to vector<8x256xf32>
    %51 = arith.addf %49, %50 : vector<8x256xf32>
    %52 = arith.negf %51 : vector<8x256xf32>
    %53 = math.exp %52 : vector<8x256xf32>
    %cst_20 = arith.constant 1.000000e+00 : f32
    %54 = vector.broadcast %cst_20 : f32 to vector<8x256xf32>
    %55 = arith.addf %54, %53 : vector<8x256xf32>
    %56 = arith.divf %54, %55 : vector<8x256xf32>
    %57 = vector.extract_strided_slice %47 {offsets = [0, 256], sizes = [8, 256], strides = [1, 1]} : vector<8x768xf32> to vector<8x256xf32>
    %58 = vector.extract_strided_slice %48 {offsets = [0, 256], sizes = [8, 256], strides = [1, 1]} : vector<8x768xf32> to vector<8x256xf32>
    %59 = arith.addf %57, %58 : vector<8x256xf32>
    %60 = arith.negf %59 : vector<8x256xf32>
    %61 = math.exp %60 : vector<8x256xf32>
    %cst_21 = arith.constant 1.000000e+00 : f32
    %62 = vector.broadcast %cst_21 : f32 to vector<8x256xf32>
    %63 = arith.addf %62, %61 : vector<8x256xf32>
    %64 = arith.divf %62, %63 : vector<8x256xf32>
    %65 = vector.extract_strided_slice %47 {offsets = [0, 512], sizes = [8, 256], strides = [1, 1]} : vector<8x768xf32> to vector<8x256xf32>
    %66 = vector.extract_strided_slice %48 {offsets = [0, 512], sizes = [8, 256], strides = [1, 1]} : vector<8x768xf32> to vector<8x256xf32>
    %67 = arith.addf %66, %10 : vector<8x256xf32>
    %68 = arith.mulf %56, %67 : vector<8x256xf32>
    %69 = arith.addf %65, %68 : vector<8x256xf32>
    %70 = math.tanh %69 : vector<8x256xf32>
    %cst_22 = arith.constant 1.000000e+00 : f32
    %71 = vector.broadcast %cst_22 : f32 to vector<8x256xf32>
    %72 = arith.subf %71, %64 : vector<8x256xf32>
    %73 = arith.mulf %72, %70 : vector<8x256xf32>
    %74 = arith.mulf %64, %43 : vector<8x256xf32>
    %75 = arith.addf %73, %74 : vector<8x256xf32>
    %c2_i32 = arith.constant 2 : i32
    %c8_i32_23 = arith.constant 8 : i32
    %76 = arith.muli %c2_i32, %c8_i32_23 : i32
    %77 = tpu.assume_multiple %76, 8 : i32
    %78 = arith.index_cast %77 : i32 to index
    %c0_24 = arith.constant 0 : index
    %79 = vector.load %arg8[%78, %c0_24] : memref<64x768xf32, #tpu.memory_space<vmem>>, vector<8x768xf32>
    %cst_25 = arith.constant dense<0.000000e+00> : vector<8x768xf32>
    %80 = tpu.matmul %75, %7, %cst_25 {dimension_numbers = #tpu.dot_dimension_numbers<[1], [0], [0], [1], [0, 0, 1, 1], [], []>} : vector<8x256xf32>, vector<256x768xf32>, vector<8x768xf32> -> vector<8x768xf32>
    %81 = vector.extract_strided_slice %79 {offsets = [0, 0], sizes = [8, 256], strides = [1, 1]} : vector<8x768xf32> to vector<8x256xf32>
    %82 = vector.extract_strided_slice %80 {offsets = [0, 0], sizes = [8, 256], strides = [1, 1]} : vector<8x768xf32> to vector<8x256xf32>
    %83 = arith.addf %81, %82 : vector<8x256xf32>
    %84 = arith.negf %83 : vector<8x256xf32>
    %85 = math.exp %84 : vector<8x256xf32>
    %cst_26 = arith.constant 1.000000e+00 : f32
    %86 = vector.broadcast %cst_26 : f32 to vector<8x256xf32>
    %87 = arith.addf %86, %85 : vector<8x256xf32>
    %88 = arith.divf %86, %87 : vector<8x256xf32>
    %89 = vector.extract_strided_slice %79 {offsets = [0, 256], sizes = [8, 256], strides = [1, 1]} : vector<8x768xf32> to vector<8x256xf32>
    %90 = vector.extract_strided_slice %80 {offsets = [0, 256], sizes = [8, 256], strides = [1, 1]} : vector<8x768xf32> to vector<8x256xf32>
    %91 = arith.addf %89, %90 : vector<8x256xf32>
    %92 = arith.negf %91 : vector<8x256xf32>
    %93 = math.exp %92 : vector<8x256xf32>
    %cst_27 = arith.constant 1.000000e+00 : f32
    %94 = vector.broadcast %cst_27 : f32 to vector<8x256xf32>
    %95 = arith.addf %94, %93 : vector<8x256xf32>
    %96 = arith.divf %94, %95 : vector<8x256xf32>
    %97 = vector.extract_strided_slice %79 {offsets = [0, 512], sizes = [8, 256], strides = [1, 1]} : vector<8x768xf32> to vector<8x256xf32>
    %98 = vector.extract_strided_slice %80 {offsets = [0, 512], sizes = [8, 256], strides = [1, 1]} : vector<8x768xf32> to vector<8x256xf32>
    %99 = arith.addf %98, %10 : vector<8x256xf32>
    %100 = arith.mulf %88, %99 : vector<8x256xf32>
    %101 = arith.addf %97, %100 : vector<8x256xf32>
    %102 = math.tanh %101 : vector<8x256xf32>
    %cst_28 = arith.constant 1.000000e+00 : f32
    %103 = vector.broadcast %cst_28 : f32 to vector<8x256xf32>
    %104 = arith.subf %103, %96 : vector<8x256xf32>
    %105 = arith.mulf %104, %102 : vector<8x256xf32>
    %106 = arith.mulf %96, %75 : vector<8x256xf32>
    %107 = arith.addf %105, %106 : vector<8x256xf32>
    %c3_i32 = arith.constant 3 : i32
    %c8_i32_29 = arith.constant 8 : i32
    %108 = arith.muli %c3_i32, %c8_i32_29 : i32
    %109 = tpu.assume_multiple %108, 8 : i32
    %110 = arith.index_cast %109 : i32 to index
    %c0_30 = arith.constant 0 : index
    %111 = vector.load %arg8[%110, %c0_30] : memref<64x768xf32, #tpu.memory_space<vmem>>, vector<8x768xf32>
    %cst_31 = arith.constant dense<0.000000e+00> : vector<8x768xf32>
    %112 = tpu.matmul %107, %7, %cst_31 {dimension_numbers = #tpu.dot_dimension_numbers<[1], [0], [0], [1], [0, 0, 1, 1], [], []>} : vector<8x256xf32>, vector<256x768xf32>, vector<8x768xf32> -> vector<8x768xf32>
    %113 = vector.extract_strided_slice %111 {offsets = [0, 0], sizes = [8, 256], strides = [1, 1]} : vector<8x768xf32> to vector<8x256xf32>
    %114 = vector.extract_strided_slice %112 {offsets = [0, 0], sizes = [8, 256], strides = [1, 1]} : vector<8x768xf32> to vector<8x256xf32>
    %115 = arith.addf %113, %114 : vector<8x256xf32>
    %116 = arith.negf %115 : vector<8x256xf32>
    %117 = math.exp %116 : vector<8x256xf32>
    %cst_32 = arith.constant 1.000000e+00 : f32
    %118 = vector.broadcast %cst_32 : f32 to vector<8x256xf32>
    %119 = arith.addf %118, %117 : vector<8x256xf32>
    %120 = arith.divf %118, %119 : vector<8x256xf32>
    %121 = vector.extract_strided_slice %111 {offsets = [0, 256], sizes = [8, 256], strides = [1, 1]} : vector<8x768xf32> to vector<8x256xf32>
    %122 = vector.extract_strided_slice %112 {offsets = [0, 256], sizes = [8, 256], strides = [1, 1]} : vector<8x768xf32> to vector<8x256xf32>
    %123 = arith.addf %121, %122 : vector<8x256xf32>
    %124 = arith.negf %123 : vector<8x256xf32>
    %125 = math.exp %124 : vector<8x256xf32>
    %cst_33 = arith.constant 1.000000e+00 : f32
    %126 = vector.broadcast %cst_33 : f32 to vector<8x256xf32>
    %127 = arith.addf %126, %125 : vector<8x256xf32>
    %128 = arith.divf %126, %127 : vector<8x256xf32>
    %129 = vector.extract_strided_slice %111 {offsets = [0, 512], sizes = [8, 256], strides = [1, 1]} : vector<8x768xf32> to vector<8x256xf32>
    %130 = vector.extract_strided_slice %112 {offsets = [0, 512], sizes = [8, 256], strides = [1, 1]} : vector<8x768xf32> to vector<8x256xf32>
    %131 = arith.addf %130, %10 : vector<8x256xf32>
    %132 = arith.mulf %120, %131 : vector<8x256xf32>
    %133 = arith.addf %129, %132 : vector<8x256xf32>
    %134 = math.tanh %133 : vector<8x256xf32>
    %cst_34 = arith.constant 1.000000e+00 : f32
    %135 = vector.broadcast %cst_34 : f32 to vector<8x256xf32>
    %136 = arith.subf %135, %128 : vector<8x256xf32>
    %137 = arith.mulf %136, %134 : vector<8x256xf32>
    %138 = arith.mulf %128, %107 : vector<8x256xf32>
    %139 = arith.addf %137, %138 : vector<8x256xf32>
    %c4_i32 = arith.constant 4 : i32
    %c8_i32_35 = arith.constant 8 : i32
    %140 = arith.muli %c4_i32, %c8_i32_35 : i32
    %141 = tpu.assume_multiple %140, 8 : i32
    %142 = arith.index_cast %141 : i32 to index
    %c0_36 = arith.constant 0 : index
    %143 = vector.load %arg8[%142, %c0_36] : memref<64x768xf32, #tpu.memory_space<vmem>>, vector<8x768xf32>
    %cst_37 = arith.constant dense<0.000000e+00> : vector<8x768xf32>
    %144 = tpu.matmul %139, %7, %cst_37 {dimension_numbers = #tpu.dot_dimension_numbers<[1], [0], [0], [1], [0, 0, 1, 1], [], []>} : vector<8x256xf32>, vector<256x768xf32>, vector<8x768xf32> -> vector<8x768xf32>
    %145 = vector.extract_strided_slice %143 {offsets = [0, 0], sizes = [8, 256], strides = [1, 1]} : vector<8x768xf32> to vector<8x256xf32>
    %146 = vector.extract_strided_slice %144 {offsets = [0, 0], sizes = [8, 256], strides = [1, 1]} : vector<8x768xf32> to vector<8x256xf32>
    %147 = arith.addf %145, %146 : vector<8x256xf32>
    %148 = arith.negf %147 : vector<8x256xf32>
    %149 = math.exp %148 : vector<8x256xf32>
    %cst_38 = arith.constant 1.000000e+00 : f32
    %150 = vector.broadcast %cst_38 : f32 to vector<8x256xf32>
    %151 = arith.addf %150, %149 : vector<8x256xf32>
    %152 = arith.divf %150, %151 : vector<8x256xf32>
    %153 = vector.extract_strided_slice %143 {offsets = [0, 256], sizes = [8, 256], strides = [1, 1]} : vector<8x768xf32> to vector<8x256xf32>
    %154 = vector.extract_strided_slice %144 {offsets = [0, 256], sizes = [8, 256], strides = [1, 1]} : vector<8x768xf32> to vector<8x256xf32>
    %155 = arith.addf %153, %154 : vector<8x256xf32>
    %156 = arith.negf %155 : vector<8x256xf32>
    %157 = math.exp %156 : vector<8x256xf32>
    %cst_39 = arith.constant 1.000000e+00 : f32
    %158 = vector.broadcast %cst_39 : f32 to vector<8x256xf32>
    %159 = arith.addf %158, %157 : vector<8x256xf32>
    %160 = arith.divf %158, %159 : vector<8x256xf32>
    %161 = vector.extract_strided_slice %143 {offsets = [0, 512], sizes = [8, 256], strides = [1, 1]} : vector<8x768xf32> to vector<8x256xf32>
    %162 = vector.extract_strided_slice %144 {offsets = [0, 512], sizes = [8, 256], strides = [1, 1]} : vector<8x768xf32> to vector<8x256xf32>
    %163 = arith.addf %162, %10 : vector<8x256xf32>
    %164 = arith.mulf %152, %163 : vector<8x256xf32>
    %165 = arith.addf %161, %164 : vector<8x256xf32>
    %166 = math.tanh %165 : vector<8x256xf32>
    %cst_40 = arith.constant 1.000000e+00 : f32
    %167 = vector.broadcast %cst_40 : f32 to vector<8x256xf32>
    %168 = arith.subf %167, %160 : vector<8x256xf32>
    %169 = arith.mulf %168, %166 : vector<8x256xf32>
    %170 = arith.mulf %160, %139 : vector<8x256xf32>
    %171 = arith.addf %169, %170 : vector<8x256xf32>
    %c5_i32 = arith.constant 5 : i32
    %c8_i32_41 = arith.constant 8 : i32
    %172 = arith.muli %c5_i32, %c8_i32_41 : i32
    %173 = tpu.assume_multiple %172, 8 : i32
    %174 = arith.index_cast %173 : i32 to index
    %c0_42 = arith.constant 0 : index
    %175 = vector.load %arg8[%174, %c0_42] : memref<64x768xf32, #tpu.memory_space<vmem>>, vector<8x768xf32>
    %cst_43 = arith.constant dense<0.000000e+00> : vector<8x768xf32>
    %176 = tpu.matmul %171, %7, %cst_43 {dimension_numbers = #tpu.dot_dimension_numbers<[1], [0], [0], [1], [0, 0, 1, 1], [], []>} : vector<8x256xf32>, vector<256x768xf32>, vector<8x768xf32> -> vector<8x768xf32>
    %177 = vector.extract_strided_slice %175 {offsets = [0, 0], sizes = [8, 256], strides = [1, 1]} : vector<8x768xf32> to vector<8x256xf32>
    %178 = vector.extract_strided_slice %176 {offsets = [0, 0], sizes = [8, 256], strides = [1, 1]} : vector<8x768xf32> to vector<8x256xf32>
    %179 = arith.addf %177, %178 : vector<8x256xf32>
    %180 = arith.negf %179 : vector<8x256xf32>
    %181 = math.exp %180 : vector<8x256xf32>
    %cst_44 = arith.constant 1.000000e+00 : f32
    %182 = vector.broadcast %cst_44 : f32 to vector<8x256xf32>
    %183 = arith.addf %182, %181 : vector<8x256xf32>
    %184 = arith.divf %182, %183 : vector<8x256xf32>
    %185 = vector.extract_strided_slice %175 {offsets = [0, 256], sizes = [8, 256], strides = [1, 1]} : vector<8x768xf32> to vector<8x256xf32>
    %186 = vector.extract_strided_slice %176 {offsets = [0, 256], sizes = [8, 256], strides = [1, 1]} : vector<8x768xf32> to vector<8x256xf32>
    %187 = arith.addf %185, %186 : vector<8x256xf32>
    %188 = arith.negf %187 : vector<8x256xf32>
    %189 = math.exp %188 : vector<8x256xf32>
    %cst_45 = arith.constant 1.000000e+00 : f32
    %190 = vector.broadcast %cst_45 : f32 to vector<8x256xf32>
    %191 = arith.addf %190, %189 : vector<8x256xf32>
    %192 = arith.divf %190, %191 : vector<8x256xf32>
    %193 = vector.extract_strided_slice %175 {offsets = [0, 512], sizes = [8, 256], strides = [1, 1]} : vector<8x768xf32> to vector<8x256xf32>
    %194 = vector.extract_strided_slice %176 {offsets = [0, 512], sizes = [8, 256], strides = [1, 1]} : vector<8x768xf32> to vector<8x256xf32>
    %195 = arith.addf %194, %10 : vector<8x256xf32>
    %196 = arith.mulf %184, %195 : vector<8x256xf32>
    %197 = arith.addf %193, %196 : vector<8x256xf32>
    %198 = math.tanh %197 : vector<8x256xf32>
    %cst_46 = arith.constant 1.000000e+00 : f32
    %199 = vector.broadcast %cst_46 : f32 to vector<8x256xf32>
    %200 = arith.subf %199, %192 : vector<8x256xf32>
    %201 = arith.mulf %200, %198 : vector<8x256xf32>
    %202 = arith.mulf %192, %171 : vector<8x256xf32>
    %203 = arith.addf %201, %202 : vector<8x256xf32>
    %c6_i32 = arith.constant 6 : i32
    %c8_i32_47 = arith.constant 8 : i32
    %204 = arith.muli %c6_i32, %c8_i32_47 : i32
    %205 = tpu.assume_multiple %204, 8 : i32
    %206 = arith.index_cast %205 : i32 to index
    %c0_48 = arith.constant 0 : index
    %207 = vector.load %arg8[%206, %c0_48] : memref<64x768xf32, #tpu.memory_space<vmem>>, vector<8x768xf32>
    %cst_49 = arith.constant dense<0.000000e+00> : vector<8x768xf32>
    %208 = tpu.matmul %203, %7, %cst_49 {dimension_numbers = #tpu.dot_dimension_numbers<[1], [0], [0], [1], [0, 0, 1, 1], [], []>} : vector<8x256xf32>, vector<256x768xf32>, vector<8x768xf32> -> vector<8x768xf32>
    %209 = vector.extract_strided_slice %207 {offsets = [0, 0], sizes = [8, 256], strides = [1, 1]} : vector<8x768xf32> to vector<8x256xf32>
    %210 = vector.extract_strided_slice %208 {offsets = [0, 0], sizes = [8, 256], strides = [1, 1]} : vector<8x768xf32> to vector<8x256xf32>
    %211 = arith.addf %209, %210 : vector<8x256xf32>
    %212 = arith.negf %211 : vector<8x256xf32>
    %213 = math.exp %212 : vector<8x256xf32>
    %cst_50 = arith.constant 1.000000e+00 : f32
    %214 = vector.broadcast %cst_50 : f32 to vector<8x256xf32>
    %215 = arith.addf %214, %213 : vector<8x256xf32>
    %216 = arith.divf %214, %215 : vector<8x256xf32>
    %217 = vector.extract_strided_slice %207 {offsets = [0, 256], sizes = [8, 256], strides = [1, 1]} : vector<8x768xf32> to vector<8x256xf32>
    %218 = vector.extract_strided_slice %208 {offsets = [0, 256], sizes = [8, 256], strides = [1, 1]} : vector<8x768xf32> to vector<8x256xf32>
    %219 = arith.addf %217, %218 : vector<8x256xf32>
    %220 = arith.negf %219 : vector<8x256xf32>
    %221 = math.exp %220 : vector<8x256xf32>
    %cst_51 = arith.constant 1.000000e+00 : f32
    %222 = vector.broadcast %cst_51 : f32 to vector<8x256xf32>
    %223 = arith.addf %222, %221 : vector<8x256xf32>
    %224 = arith.divf %222, %223 : vector<8x256xf32>
    %225 = vector.extract_strided_slice %207 {offsets = [0, 512], sizes = [8, 256], strides = [1, 1]} : vector<8x768xf32> to vector<8x256xf32>
    %226 = vector.extract_strided_slice %208 {offsets = [0, 512], sizes = [8, 256], strides = [1, 1]} : vector<8x768xf32> to vector<8x256xf32>
    %227 = arith.addf %226, %10 : vector<8x256xf32>
    %228 = arith.mulf %216, %227 : vector<8x256xf32>
    %229 = arith.addf %225, %228 : vector<8x256xf32>
    %230 = math.tanh %229 : vector<8x256xf32>
    %cst_52 = arith.constant 1.000000e+00 : f32
    %231 = vector.broadcast %cst_52 : f32 to vector<8x256xf32>
    %232 = arith.subf %231, %224 : vector<8x256xf32>
    %233 = arith.mulf %232, %230 : vector<8x256xf32>
    %234 = arith.mulf %224, %203 : vector<8x256xf32>
    %235 = arith.addf %233, %234 : vector<8x256xf32>
    %c7_i32 = arith.constant 7 : i32
    %c8_i32_53 = arith.constant 8 : i32
    %236 = arith.muli %c7_i32, %c8_i32_53 : i32
    %237 = tpu.assume_multiple %236, 8 : i32
    %238 = arith.index_cast %237 : i32 to index
    %c0_54 = arith.constant 0 : index
    %239 = vector.load %arg8[%238, %c0_54] : memref<64x768xf32, #tpu.memory_space<vmem>>, vector<8x768xf32>
    %cst_55 = arith.constant dense<0.000000e+00> : vector<8x768xf32>
    %240 = tpu.matmul %235, %7, %cst_55 {dimension_numbers = #tpu.dot_dimension_numbers<[1], [0], [0], [1], [0, 0, 1, 1], [], []>} : vector<8x256xf32>, vector<256x768xf32>, vector<8x768xf32> -> vector<8x768xf32>
    %241 = vector.extract_strided_slice %239 {offsets = [0, 0], sizes = [8, 256], strides = [1, 1]} : vector<8x768xf32> to vector<8x256xf32>
    %242 = vector.extract_strided_slice %240 {offsets = [0, 0], sizes = [8, 256], strides = [1, 1]} : vector<8x768xf32> to vector<8x256xf32>
    %243 = arith.addf %241, %242 : vector<8x256xf32>
    %244 = arith.negf %243 : vector<8x256xf32>
    %245 = math.exp %244 : vector<8x256xf32>
    %cst_56 = arith.constant 1.000000e+00 : f32
    %246 = vector.broadcast %cst_56 : f32 to vector<8x256xf32>
    %247 = arith.addf %246, %245 : vector<8x256xf32>
    %248 = arith.divf %246, %247 : vector<8x256xf32>
    %249 = vector.extract_strided_slice %239 {offsets = [0, 256], sizes = [8, 256], strides = [1, 1]} : vector<8x768xf32> to vector<8x256xf32>
    %250 = vector.extract_strided_slice %240 {offsets = [0, 256], sizes = [8, 256], strides = [1, 1]} : vector<8x768xf32> to vector<8x256xf32>
    %251 = arith.addf %249, %250 : vector<8x256xf32>
    %252 = arith.negf %251 : vector<8x256xf32>
    %253 = math.exp %252 : vector<8x256xf32>
    %cst_57 = arith.constant 1.000000e+00 : f32
    %254 = vector.broadcast %cst_57 : f32 to vector<8x256xf32>
    %255 = arith.addf %254, %253 : vector<8x256xf32>
    %256 = arith.divf %254, %255 : vector<8x256xf32>
    %257 = vector.extract_strided_slice %239 {offsets = [0, 512], sizes = [8, 256], strides = [1, 1]} : vector<8x768xf32> to vector<8x256xf32>
    %258 = vector.extract_strided_slice %240 {offsets = [0, 512], sizes = [8, 256], strides = [1, 1]} : vector<8x768xf32> to vector<8x256xf32>
    %259 = arith.addf %258, %10 : vector<8x256xf32>
    %260 = arith.mulf %248, %259 : vector<8x256xf32>
    %261 = arith.addf %257, %260 : vector<8x256xf32>
    %262 = math.tanh %261 : vector<8x256xf32>
    %cst_58 = arith.constant 1.000000e+00 : f32
    %263 = vector.broadcast %cst_58 : f32 to vector<8x256xf32>
    %264 = arith.subf %263, %256 : vector<8x256xf32>
    %265 = arith.mulf %264, %262 : vector<8x256xf32>
    %266 = arith.mulf %256, %235 : vector<8x256xf32>
    %267 = arith.addf %265, %266 : vector<8x256xf32>
    %c8_i32_59 = arith.constant 8 : i32
    %268 = arith.truncf %267 : vector<8x256xf32> to vector<8x256xbf16>
    %c0_60 = arith.constant 0 : index
    %c0_61 = arith.constant 0 : index
    %269 = vector.load %arg5[%c0_60, %c0_61] : memref<256x128xbf16, #tpu.memory_space<vmem>>, vector<256x128xbf16>
    %cst_62 = arith.constant dense<0.000000e+00> : vector<8x128xf32>
    %270 = tpu.matmul %268, %269, %cst_62 {dimension_numbers = #tpu.dot_dimension_numbers<[1], [0], [0], [1], [0, 0, 1, 1], [], []>} : vector<8x256xbf16>, vector<256x128xbf16>, vector<8x128xf32> -> vector<8x128xf32>
    %c0_63 = arith.constant 0 : index
    %c0_64 = arith.constant 0 : index
    %271 = vector.load %arg6[%c0_63, %c0_64] : memref<1x128xf32, #tpu.memory_space<vmem>>, vector<1x128xf32>
    %272 = vector.broadcast %271 : vector<1x128xf32> to vector<8x128xf32>
    %273 = arith.addf %270, %272 : vector<8x128xf32>
    %c0_65 = arith.constant 0 : index
    %c0_66 = arith.constant 0 : index
    %274 = vector.load %arg7[%c0_65, %c0_66] : memref<8x128xf32, #tpu.memory_space<vmem>>, vector<8x128xf32>
    tpu.vector_store %arg7[%c0_65, %c0_66], %273 {strides = array<i32>} : memref<8x128xf32, #tpu.memory_space<vmem>>, vector<8x128xf32>,
    return
  }
}

</mosaic_0001>

<llo_original>
// kernel: tpu_custom_call.1
$region0: #{tpu_custom_call.1}
  #allocation0 [shape = 'u32[]', space=smem, size = 0x4, offset = 0x4, fixed_abs, tag = 'smem constant byte address 0x4 - core index']
  #allocation1 [shape = 'u32[144,128]{1,0:T(1,128)}', space=vmem, size = 0x12000, scoped, tag = 'internal scratch']
  #allocation2 [shape = 'f32[64,768]{1,0:T(8,128)}', space=vmem, size = 0x30000, scoped, tag = 'scratch operand']
  %s0 = inlined_call_operand.vmem [shape: f32[64,32], index: 0, kind: input, shape index: {}]
  %s1 = inlined_call_operand.hbm [shape: f32[32,768], index: 1, kind: input, shape index: {}]
  %s2 = inlined_call_operand.vmem [shape: f32[1,768], index: 2, kind: input, shape index: {}]
  %s3 = inlined_call_operand.hbm [shape: f32[256,768], index: 3, kind: input, shape index: {}]
  %s4 = inlined_call_operand.vmem [shape: f32[1,256], index: 4, kind: input, shape index: {}]
  %s5 = inlined_call_operand.hbm [shape: bf16[256,128], index: 5, kind: input, shape index: {}]
  %s6 = inlined_call_operand.vmem [shape: f32[1,128], index: 6, kind: input, shape index: {}]
  %s7 = inlined_call_operand.hbm [shape: f32[8,128], index: 7, kind: output, shape index: {}]
  %s8 = sld [smem:[#allocation0]]
  $region50: #{tpu_custom_call.1} parent=0
    _
  %s10 = ssub.s32 1, %s8
  %s11 = scalar_select 0, %s10, %s8
  $region1: #{tpu_custom_call.1} parent=0
    #allocation3 [shape = 'u8[98304]{0}', space=vmem, size = 0x18000, scoped, tag = 'input window, operand 1, single buffered']
    #allocation4 [shape = 's32[1]{0}', space=sflag, size = 0x4, scoped, tag = 'scoped memory for tpu_custom_call.1']
    #allocation5 [shape = 's32[1]{0}', space=sflag, size = 0x4, scoped, tag = 'scoped memory for tpu_custom_call.1']
    #allocation6 [shape = 'u8[786432]{0}', space=vmem, size = 0xc0000, scoped, tag = 'input window, operand 3, single buffered']
    #allocation7 [shape = 's32[1]{0}', space=sflag, size = 0x4, scoped, tag = 'scoped memory for tpu_custom_call.1']
    #allocation8 [shape = 'u8[65536]{0}', space=vmem, size = 0x10000, scoped, tag = 'input window, operand 5, single buffered']
    #allocation9 [shape = 'u8[4096]{0}', space=vmem, size = 0x1000, scoped, tag = 'output window, operand 0, single buffered']
    %12 = vsyncpa [#allocation4], 0
    %13 = vsyncpa [#allocation7], 0
    %14 = vsyncpa [#allocation5], 0
    // Predicated region
    $region2: #{tpu_custom_call.1} parent=1 // pred_check
      _
    $region3: #{tpu_custom_call.1} parent=1 // pred_check_branch
      %16 = sbr.rel (0) target = $region5
    $region4: #{tpu_custom_call.1} parent=1 // pred_region
      _
    $region5: #{tpu_custom_call.1} parent=1 // pred_fallthru
      _
    // Predicated region
    $region6: #{tpu_custom_call.1} parent=1 // pred_check
      _
    $region7: #{tpu_custom_call.1} parent=1 // pred_check_branch
      %18 = sbr.rel (0) target = $region9
    $region8: #{tpu_custom_call.1} parent=1 // pred_region
      %s20 = ssub.s32 3072, 3072
      %21 = vsyncadd [#allocation4], %s20
      %s22 = sshll.u32 [#allocation3], 4
      %s23 = int_to_ptr.vmem [resolvable:$true] %s22
      %28 = dma.hbm_to_vmem [thread:$0]  %s1, 3072, %s23, [#allocation4], 768, 768, 48
    $region9: #{tpu_custom_call.1} parent=1 // pred_fallthru
      _
    // Predicated region
    $region10: #{tpu_custom_call.1} parent=1 // pred_check
      _
    $region11: #{tpu_custom_call.1} parent=1 // pred_check_branch
      %30 = sbr.rel (0) target = $region13
    $region12: #{tpu_custom_call.1} parent=1 // pred_region
      _
    $region13: #{tpu_custom_call.1} parent=1 // pred_fallthru
      _
    // Predicated region
    $region14: #{tpu_custom_call.1} parent=1 // pred_check
      _
    $region15: #{tpu_custom_call.1} parent=1 // pred_check_branch
      %32 = sbr.rel (0) target = $region17
    $region16: #{tpu_custom_call.1} parent=1 // pred_region
      %s34 = ssub.s32 24576, 24576
      %35 = vsyncadd [#allocation7], %s34
      %s36 = sshll.u32 [#allocation6], 4
      %s37 = int_to_ptr.vmem [resolvable:$true] %s36
      %42 = dma.hbm_to_vmem [thread:$0]  %s3, 24576, %s37, [#allocation7], 768, 768, 48
    $region17: #{tpu_custom_call.1} parent=1 // pred_fallthru
      _
    // Predicated region
    $region18: #{tpu_custom_call.1} parent=1 // pred_check
      _
    $region19: #{tpu_custom_call.1} parent=1 // pred_check_branch
      %44 = sbr.rel (0) target = $region21
    $region20: #{tpu_custom_call.1} parent=1 // pred_region
      _
    $region21: #{tpu_custom_call.1} parent=1 // pred_fallthru
      _
    // Predicated region
    $region22: #{tpu_custom_call.1} parent=1 // pred_check
      _
    $region23: #{tpu_custom_call.1} parent=1 // pred_check_branch
      %46 = sbr.rel (0) target = $region25
    $region24: #{tpu_custom_call.1} parent=1 // pred_region
      %s48 = ssub.s32 2048, 2048
      %49 = vsyncadd [#allocation7], %s48
      %s50 = sshll.u32 [#allocation8], 4
      %s51 = int_to_ptr.vmem [resolvable:$true] %s50
      %56 = dma.hbm_to_vmem [thread:$0]  %s5, 2048, %s51, [#allocation7], 64, 64, 4
    $region25: #{tpu_custom_call.1} parent=1 // pred_fallthru
      _
    // Predicated region
    $region26: #{tpu_custom_call.1} parent=1 // pred_check
      _
    $region27: #{tpu_custom_call.1} parent=1 // pred_check_branch
      %58 = sbr.rel (0) target = $region29
    $region28: #{tpu_custom_call.1} parent=1 // pred_region
      _
    $region29: #{tpu_custom_call.1} parent=1 // pred_fallthru
      _
    // Predicated region
    $region30: #{tpu_custom_call.1} parent=1 // pred_check
      _
    $region31: #{tpu_custom_call.1} parent=1 // pred_check_branch
      %60 = sbr.rel (0) target = $region33
    $region32: #{tpu_custom_call.1} parent=1 // pred_region
      %61 = dma.done [#allocation4], 3072
    $region33: #{tpu_custom_call.1} parent=1 // pred_fallthru
      _
    // Predicated region
    $region34: #{tpu_custom_call.1} parent=1 // pred_check
      _
    $region35: #{tpu_custom_call.1} parent=1 // pred_check_branch
      %63 = sbr.rel (0) target = $region37
    $region36: #{tpu_custom_call.1} parent=1 // pred_region
      %64 = dma.done [#allocation7], 24576
    $region37: #{tpu_custom_call.1} parent=1 // pred_fallthru
      _
    // Predicated region
    $region38: #{tpu_custom_call.1} parent=1 // pred_check
      _
    $region39: #{tpu_custom_call.1} parent=1 // pred_check_branch
      %66 = sbr.rel (0) target = $region41
    $region40: #{tpu_custom_call.1} parent=1 // pred_region
      %67 = dma.done [#allocation7], 2048
    $region41: #{tpu_custom_call.1} parent=1 // pred_fallthru
      _
    %v69 = vld [vmem:[%s0] sm:$0xff]
    %v70 = vld [vmem:[%s0 + $0x8] sm:$0xff]
    %v71 = vld [vmem:[%s0 + $0x10] sm:$0xff]
    %v72 = vld [vmem:[%s0 + $0x18] sm:$0xff]
    %v73 = vld [vmem:[%s0 + $0x20] sm:$0xff]
    %v74 = vld [vmem:[%s0 + $0x28] sm:$0xff]
    %v75 = vld [vmem:[%s0 + $0x30] sm:$0xff]
    %v76 = vld [vmem:[%s0 + $0x38] sm:$0xff]
    %v77 = vld [vmem:[#allocation3] sm:$0xff]
    %v78 = vld [vmem:[#allocation3 + $0x8] sm:$0xff]
    %v79 = vld [vmem:[#allocation3 + $0x10] sm:$0xff]
    %v80 = vld [vmem:[#allocation3 + $0x18] sm:$0xff]
    %v81 = vld [vmem:[#allocation3 + $0x20] sm:$0xff]
    %v82 = vld [vmem:[#allocation3 + $0x28] sm:$0xff]
    %v83 = vld [vmem:[#allocation3 + $0x30] sm:$0xff]
    %v84 = vld [vmem:[#allocation3 + $0x38] sm:$0xff]
    %v85 = vld [vmem:[#allocation3 + $0x40] sm:$0xff]
    %v86 = vld [vmem:[#allocation3 + $0x48] sm:$0xff]
    %v87 = vld [vmem:[#allocation3 + $0x50] sm:$0xff]
    %v88 = vld [vmem:[#allocation3 + $0x58] sm:$0xff]
    %v89 = vld [vmem:[#allocation3 + $0x60] sm:$0xff]
    %v90 = vld [vmem:[#allocation3 + $0x68] sm:$0xff]
    %v91 = vld [vmem:[#allocation3 + $0x70] sm:$0xff]
    %v92 = vld [vmem:[#allocation3 + $0x78] sm:$0xff]
    %v93 = vld [vmem:[#allocation3 + $0x80] sm:$0xff]
    %v94 = vld [vmem:[#allocation3 + $0x88] sm:$0xff]
    %v95 = vld [vmem:[#allocation3 + $0x90] sm:$0xff]
    %v96 = vld [vmem:[#allocation3 + $0x98] sm:$0xff]
    %v97 = vld [vmem:[#allocation3 + $0xa0] sm:$0xff]
    %v98 = vld [vmem:[#allocation3 + $0xa8] sm:$0xff]
    %v99 = vld [vmem:[#allocation3 + $0xb0] sm:$0xff]
    %v100 = vld [vmem:[#allocation3 + $0xb8] sm:$0xff]
    %v101 = vld [vmem:[%s2] sm:$0x3f]
    %v103 = vlaneseq
    %v104 = vshrl.u32 %v103, 7
    %v105 = vsub.s32 0, %v104
    %v106 = vrot.slane %v101, %v105
    %v107 = vlaneseq
    %v108 = vshrl.u32 %v107, 7
    %v109 = vsub.s32 1, %v108
    %v110 = vrot.slane %v101, %v109
    %v111 = vlaneseq
    %v112 = vshrl.u32 %v111, 7
    %v113 = vsub.s32 2, %v112
    %v114 = vrot.slane %v101, %v113
    %v115 = vlaneseq
    %v116 = vshrl.u32 %v115, 7
    %v117 = vsub.s32 3, %v116
    %v118 = vrot.slane %v101, %v117
    %v119 = vlaneseq
    %v120 = vshrl.u32 %v119, 7
    %v121 = vsub.s32 4, %v120
    %v122 = vrot.slane %v101, %v121
    %v123 = vlaneseq
    %v124 = vshrl.u32 %v123, 7
    %v125 = vsub.s32 5, %v124
    %v126 = vrot.slane %v101, %v125
    %vm133 = vcmask 261120
    %v135 = vsel %vm133, %v69, 0
    %v138 = vsel %vm133, %v70, 0
    %v141 = vsel %vm133, %v71, 0
    %v144 = vsel %vm133, %v72, 0
    %v147 = vsel %vm133, %v73, 0
    %v150 = vsel %vm133, %v74, 0
    %v153 = vsel %vm133, %v75, 0
    %v156 = vsel %vm133, %v76, 0
    %158 = vmatprep.subr.mxu0 %v78
    %159 = vmatpush1.msra.mxu0 %v77
    %160 = vmatprep.subr.mxu0 %v84
    %161 = vmatpush1.msra.mxu0 %v83
    %162 = vmatprep.subr.mxu0 %v90
    %163 = vmatpush1.msra.mxu0 %v89
    %164 = vmatprep.subr.mxu0 %v96
    %165 = vmatpush1.msra.mxu0 %v95
    %166 = vmatprep.subr.mxu0 0.0
    %167 = vmatpush1.msra.mxu0 0.0
    %168 = vmatprep.subr.mxu0 0.0
    %169 = vmatpush1.msra.mxu0 0.0
    %170 = vmatprep.subr.mxu0 0.0
    %171 = vmatpush1.msra.mxu0 0.0
    %172 = vmatprep.subr.mxu0 0.0
    %173 = vmatpush1.msra.mxu0 0.0
    %174 = vmatprep.subr.mxu0 0.0
    %175 = vmatpush1.msra.mxu0 0.0
    %176 = vmatprep.subr.mxu0 0.0
    %177 = vmatpush1.msra.mxu0 0.0
    %178 = vmatprep.subr.mxu0 0.0
    %179 = vmatpush1.msra.mxu0 0.0
    %180 = vmatprep.subr.mxu0 0.0
    %181 = vmatpush1.msra.mxu0 0.0
    %182 = vmatprep.subr.mxu0 0.0
    %183 = vmatpush1.msra.mxu0 0.0
    %184 = vmatprep.subr.mxu0 0.0
    %185 = vmatpush1.msra.mxu0 0.0
    %186 = vmatprep.subr.mxu0 0.0
    %187 = vmatpush1.msra.mxu0 0.0
    %188 = vmatprep.subr.mxu0 0.0
    %189 = vmatpush1.msra.mxu0 0.0
    %190 = vmatprep.subr.mxu0 0.0
    %191 = vmatpush1.msra.mxu0 0.0
    %192 = vmatprep.subr.mxu0 0.0
    %193 = vmatpush1.msra.mxu0 0.0
    %194 = vmatprep.subr.mxu0 0.0
    %195 = vmatpush1.msra.mxu0 0.0
    %196 = vmatprep.subr.mxu0 0.0
    %197 = vmatpush1.msra.mxu0 0.0
    %198 = vmatprep.subr.mxu0 0.0
    %199 = vmatpush1.msra.mxu0 0.0
    %200 = vmatprep.subr.mxu0 0.0
    %201 = vmatpush1.msra.mxu0 0.0
    %202 = vmatprep.subr.mxu0 0.0
    %203 = vmatpush1.msra.mxu0 0.0
    %204 = vmatprep.subr.mxu0 0.0
    %205 = vmatpush1.msra.mxu0 0.0
    %206 = vmatprep.subr.mxu0 0.0
    %207 = vmatpush1.msra.mxu0 0.0
    %208 = vmatprep.subr.mxu0 0.0
    %209 = vmatpush1.msra.mxu0 0.0
    %210 = vmatprep.subr.mxu0 0.0
    %211 = vmatpush1.msra.mxu0 0.0
    %212 = vmatprep.subr.mxu0 0.0
    %213 = vmatpush1.msra.mxu0 0.0
    %214 = vmatprep.subr.mxu0 0.0
    %215 = vmatpush1.msra.mxu0 0.0
    %216 = vmatprep.subr.mxu0 0.0
    %217 = vmatpush1.msra.mxu0 0.0
    %218 = vmatprep.subr.mxu0 0.0
    %219 = vmatpush1.msra.mxu0 0.0
    %220 = vmatprep.subr.mxu0 0.0
    %221 = vmatpush1.msra.mxu0 0.0
    %222 = vmatprep.mubr.f32.mxu0 0.0
    %223 = vmatmul.mubr.f32.gmra.mrb[0].mxu0 %v135
    %v224 = vpop.f32.mrb[0].mxu0
    %v225 = vadd.f32 %v106, %v224
    %v226 = vpop.f32.mrb[0].mxu0
    %v227 = vadd.f32 %v110, %v226
    %228 = vmatprep.mubr.f32.mxu0 0.0
    %229 = vmatmul.mubr.f32.gmra.mrb[0].mxu0 %v138
    %v230 = vpop.f32.mrb[0].mxu0
    %v231 = vadd.f32 %v106, %v230
    %v232 = vpop.f32.mrb[0].mxu0
    %v233 = vadd.f32 %v110, %v232
    %234 = vmatprep.mubr.f32.mxu0 0.0
    %235 = vmatmul.mubr.f32.gmra.mrb[0].mxu0 %v141
    %v236 = vpop.f32.mrb[0].mxu0
    %v237 = vadd.f32 %v106, %v236
    %v238 = vpop.f32.mrb[0].mxu0
    %v239 = vadd.f32 %v110, %v238
    %240 = vmatprep.mubr.f32.mxu0 0.0
    %241 = vmatmul.mubr.f32.gmra.mrb[0].mxu0 %v144
    %v242 = vpop.f32.mrb[0].mxu0
    %v243 = vadd.f32 %v106, %v242
    %v244 = vpop.f32.mrb[0].mxu0
    %v245 = vadd.f32 %v110, %v244
    %246 = vmatprep.mubr.f32.mxu0 0.0
    %247 = vmatmul.mubr.f32.gmra.mrb[0].mxu0 %v147
    %v248 = vpop.f32.mrb[0].mxu0
    %v249 = vadd.f32 %v106, %v248
    %v250 = vpop.f32.mrb[0].mxu0
    %v251 = vadd.f32 %v110, %v250
    %252 = vmatprep.mubr.f32.mxu0 0.0
    %253 = vmatmul.mubr.f32.gmra.mrb[0].mxu0 %v150
    %v254 = vpop.f32.mrb[0].mxu0
    %v255 = vadd.f32 %v106, %v254
    %v256 = vpop.f32.mrb[0].mxu0
    %v257 = vadd.f32 %v110, %v256
    %258 = vmatprep.mubr.f32.mxu0 0.0
    %259 = vmatmul.mubr.f32.gmra.mrb[0].mxu0 %v153
    %v260 = vpop.f32.mrb[0].mxu0
    %v261 = vadd.f32 %v106, %v260
    %v262 = vpop.f32.mrb[0].mxu0
    %v263 = vadd.f32 %v110, %v262
    %264 = vmatprep.mubr.f32.mxu0 0.0
    %265 = vmatmul.mubr.f32.gmra.mrb[0].mxu0 %v156
    %v266 = vpop.f32.mrb[0].mxu0
    %v267 = vadd.f32 %v106, %v266
    %v268 = vpop.f32.mrb[0].mxu0
    %v269 = vadd.f32 %v110, %v268
    %270 = vdwg.mxu0
    %271 = vmatprep.subr.mxu0 %v80
    %272 = vmatpush1.msra.mxu0 %v79
    %273 = vmatprep.subr.mxu0 %v86
    %274 = vmatpush1.msra.mxu0 %v85
    %275 = vmatprep.subr.mxu0 %v92
    %276 = vmatpush1.msra.mxu0 %v91
    %277 = vmatprep.subr.mxu0 %v98
    %278 = vmatpush1.msra.mxu0 %v97
    %279 = vmatprep.subr.mxu0 0.0
    %280 = vmatpush1.msra.mxu0 0.0
    %281 = vmatprep.subr.mxu0 0.0
    %282 = vmatpush1.msra.mxu0 0.0
    %283 = vmatprep.subr.mxu0 0.0
    %284 = vmatpush1.msra.mxu0 0.0
    %285 = vmatprep.subr.mxu0 0.0
    %286 = vmatpush1.msra.mxu0 0.0
    %287 = vmatprep.subr.mxu0 0.0
    %288 = vmatpush1.msra.mxu0 0.0
    %289 = vmatprep.subr.mxu0 0.0
    %290 = vmatpush1.msra.mxu0 0.0
    %291 = vmatprep.subr.mxu0 0.0
    %292 = vmatpush1.msra.mxu0 0.0
    %293 = vmatprep.subr.mxu0 0.0
    %294 = vmatpush1.msra.mxu0 0.0
    %295 = vmatprep.subr.mxu0 0.0
    %296 = vmatpush1.msra.mxu0 0.0
    %297 = vmatprep.subr.mxu0 0.0
    %298 = vmatpush1.msra.mxu0 0.0
    %299 = vmatprep.subr.mxu0 0.0
    %300 = vmatpush1.msra.mxu0 0.0
    %301 = vmatprep.subr.mxu0 0.0
    %302 = vmatpush1.msra.mxu0 0.0
    %303 = vmatprep.subr.mxu0 0.0
    %304 = vmatpush1.msra.mxu0 0.0
    %305 = vmatprep.subr.mxu0 0.0
    %306 = vmatpush1.msra.mxu0 0.0
    %307 = vmatprep.subr.mxu0 0.0
    %308 = vmatpush1.msra.mxu0 0.0
    %309 = vmatprep.subr.mxu0 0.0
    %310 = vmatpush1.msra.mxu0 0.0
    %311 = vmatprep.subr.mxu0 0.0
    %312 = vmatpush1.msra.mxu0 0.0
    %313 = vmatprep.subr.mxu0 0.0
    %314 = vmatpush1.msra.mxu0 0.0
    %315 = vmatprep.subr.mxu0 0.0
    %316 = vmatpush1.msra.mxu0 0.0
    %317 = vmatprep.subr.mxu0 0.0
    %318 = vmatpush1.msra.mxu0 0.0
    %319 = vmatprep.subr.mxu0 0.0
    %320 = vmatpush1.msra.mxu0 0.0
    %321 = vmatprep.subr.mxu0 0.0
    %322 = vmatpush1.msra.mxu0 0.0
    %323 = vmatprep.subr.mxu0 0.0
    %324 = vmatpush1.msra.mxu0 0.0
    %325 = vmatprep.subr.mxu0 0.0
    %326 = vmatpush1.msra.mxu0 0.0
    %327 = vmatprep.subr.mxu0 0.0
    %328 = vmatpush1.msra.mxu0 0.0
    %329 = vmatprep.subr.mxu0 0.0
    %330 = vmatpush1.msra.mxu0 0.0
    %331 = vmatprep.subr.mxu0 0.0
    %332 = vmatpush1.msra.mxu0 0.0
    %333 = vmatprep.subr.mxu0 0.0
    %334 = vmatpush1.msra.mxu0 0.0
    %335 = vmatprep.mubr.f32.mxu0 0.0
    %336 = vmatmul.mubr.f32.gmra.mrb[0].mxu0 %v135
    %v337 = vpop.f32.mrb[0].mxu0
    %v338 = vadd.f32 %v114, %v337
    %v339 = vpop.f32.mrb[0].mxu0
    %v340 = vadd.f32 %v118, %v339
    %341 = vmatprep.mubr.f32.mxu0 0.0
    %342 = vmatmul.mubr.f32.gmra.mrb[0].mxu0 %v138
    %v343 = vpop.f32.mrb[0].mxu0
    %v344 = vadd.f32 %v114, %v343
    %v345 = vpop.f32.mrb[0].mxu0
    %v346 = vadd.f32 %v118, %v345
    %347 = vmatprep.mubr.f32.mxu0 0.0
    %348 = vmatmul.mubr.f32.gmra.mrb[0].mxu0 %v141
    %v349 = vpop.f32.mrb[0].mxu0
    %v350 = vadd.f32 %v114, %v349
    %v351 = vpop.f32.mrb[0].mxu0
    %v352 = vadd.f32 %v118, %v351
    %353 = vmatprep.mubr.f32.mxu0 0.0
    %354 = vmatmul.mubr.f32.gmra.mrb[0].mxu0 %v144
    %v355 = vpop.f32.mrb[0].mxu0
    %v356 = vadd.f32 %v114, %v355
    %v357 = vpop.f32.mrb[0].mxu0
    %v358 = vadd.f32 %v118, %v357
    %359 = vmatprep.mubr.f32.mxu0 0.0
    %360 = vmatmul.mubr.f32.gmra.mrb[0].mxu0 %v147
    %v361 = vpop.f32.mrb[0].mxu0
    %v362 = vadd.f32 %v114, %v361
    %v363 = vpop.f32.mrb[0].mxu0
    %v364 = vadd.f32 %v118, %v363
    %365 = vmatprep.mubr.f32.mxu0 0.0
    %366 = vmatmul.mubr.f32.gmra.mrb[0].mxu0 %v150
    %v367 = vpop.f32.mrb[0].mxu0
    %v368 = vadd.f32 %v114, %v367
    %v369 = vpop.f32.mrb[0].mxu0
    %v370 = vadd.f32 %v118, %v369
    %371 = vmatprep.mubr.f32.mxu0 0.0
    %372 = vmatmul.mubr.f32.gmra.mrb[0].mxu0 %v153
    %v373 = vpop.f32.mrb[0].mxu0
    %v374 = vadd.f32 %v114, %v373
    %v375 = vpop.f32.mrb[0].mxu0
    %v376 = vadd.f32 %v118, %v375
    %377 = vmatprep.mubr.f32.mxu0 0.0
    %378 = vmatmul.mubr.f32.gmra.mrb[0].mxu0 %v156
    %v379 = vpop.f32.mrb[0].mxu0
    %v380 = vadd.f32 %v114, %v379
    %v381 = vpop.f32.mrb[0].mxu0
    %v382 = vadd.f32 %v118, %v381
    %383 = vdwg.mxu0
    %384 = vmatprep.subr.mxu0 %v82
    %385 = vmatpush1.msra.mxu0 %v81
    %386 = vmatprep.subr.mxu0 %v88
    %387 = vmatpush1.msra.mxu0 %v87
    %388 = vmatprep.subr.mxu0 %v94
    %389 = vmatpush1.msra.mxu0 %v93
    %390 = vmatprep.subr.mxu0 %v100
    %391 = vmatpush1.msra.mxu0 %v99
    %392 = vmatprep.subr.mxu0 0.0
    %393 = vmatpush1.msra.mxu0 0.0
    %394 = vmatprep.subr.mxu0 0.0
    %395 = vmatpush1.msra.mxu0 0.0
    %396 = vmatprep.subr.mxu0 0.0
    %397 = vmatpush1.msra.mxu0 0.0
    %398 = vmatprep.subr.mxu0 0.0
    %399 = vmatpush1.msra.mxu0 0.0
    %400 = vmatprep.subr.mxu0 0.0
    %401 = vmatpush1.msra.mxu0 0.0
    %402 = vmatprep.subr.mxu0 0.0
    %403 = vmatpush1.msra.mxu0 0.0
    %404 = vmatprep.subr.mxu0 0.0
    %405 = vmatpush1.msra.mxu0 0.0
    %406 = vmatprep.subr.mxu0 0.0
    %407 = vmatpush1.msra.mxu0 0.0
    %408 = vmatprep.subr.mxu0 0.0
    %409 = vmatpush1.msra.mxu0 0.0
    %410 = vmatprep.subr.mxu0 0.0
    %411 = vmatpush1.msra.mxu0 0.0
    %412 = vmatprep.subr.mxu0 0.0
    %413 = vmatpush1.msra.mxu0 0.0
    %414 = vmatprep.subr.mxu0 0.0
    %415 = vmatpush1.msra.mxu0 0.0
    %416 = vmatprep.subr.mxu0 0.0
    %417 = vmatpush1.msra.mxu0 0.0
    %418 = vmatprep.subr.mxu0 0.0
    %419 = vmatpush1.msra.mxu0 0.0
    %420 = vmatprep.subr.mxu0 0.0
    %421 = vmatpush1.msra.mxu0 0.0
    %422 = vmatprep.subr.mxu0 0.0
    %423 = vmatpush1.msra.mxu0 0.0
    %424 = vmatprep.subr.mxu0 0.0
    %425 = vmatpush1.msra.mxu0 0.0
    %426 = vmatprep.subr.mxu0 0.0
    %427 = vmatpush1.msra.mxu0 0.0
    %428 = vmatprep.subr.mxu0 0.0
    %429 = vmatpush1.msra.mxu0 0.0
    %430 = vmatprep.subr.mxu0 0.0
    %431 = vmatpush1.msra.mxu0 0.0
    %432 = vmatprep.subr.mxu0 0.0
    %433 = vmatpush1.msra.mxu0 0.0
    %434 = vmatprep.subr.mxu0 0.0
    %435 = vmatpush1.msra.mxu0 0.0
    %436 = vmatprep.subr.mxu0 0.0
    %437 = vmatpush1.msra.mxu0 0.0
    %438 = vmatprep.subr.mxu0 0.0
    %439 = vmatpush1.msra.mxu0 0.0
    %440 = vmatprep.subr.mxu0 0.0
    %441 = vmatpush1.msra.mxu0 0.0
    %442 = vmatprep.subr.mxu0 0.0
    %443 = vmatpush1.msra.mxu0 0.0
    %444 = vmatprep.subr.mxu0 0.0
    %445 = vmatpush1.msra.mxu0 0.0
    %446 = vmatprep.subr.mxu0 0.0
    %447 = vmatpush1.msra.mxu0 0.0
    %448 = vmatprep.mubr.f32.mxu0 0.0
    %449 = vmatmul.mubr.f32.gmra.mrb[0].mxu0 %v135
    %v450 = vpop.f32.mrb[0].mxu0
    %v451 = vadd.f32 %v122, %v450
    %v452 = vpop.f32.mrb[0].mxu0
    %v453 = vadd.f32 %v126, %v452
    %454 = vmatprep.mubr.f32.mxu0 0.0
    %455 = vmatmul.mubr.f32.gmra.mrb[0].mxu0 %v138
    %v456 = vpop.f32.mrb[0].mxu0
    %v457 = vadd.f32 %v122, %v456
    %v458 = vpop.f32.mrb[0].mxu0
    %v459 = vadd.f32 %v126, %v458
    %460 = vmatprep.mubr.f32.mxu0 0.0
    %461 = vmatmul.mubr.f32.gmra.mrb[0].mxu0 %v141
    %v462 = vpop.f32.mrb[0].mxu0
    %v463 = vadd.f32 %v122, %v462
    %v464 = vpop.f32.mrb[0].mxu0
    %v465 = vadd.f32 %v126, %v464
    %466 = vmatprep.mubr.f32.mxu0 0.0
    %467 = vmatmul.mubr.f32.gmra.mrb[0].mxu0 %v144
    %v468 = vpop.f32.mrb[0].mxu0
    %v469 = vadd.f32 %v122, %v468
    %v470 = vpop.f32.mrb[0].mxu0
    %v471 = vadd.f32 %v126, %v470
    %472 = vmatprep.mubr.f32.mxu0 0.0
    %473 = vmatmul.mubr.f32.gmra.mrb[0].mxu0 %v147
    %v474 = vpop.f32.mrb[0].mxu0
    %v475 = vadd.f32 %v122, %v474
    %v476 = vpop.f32.mrb[0].mxu0
    %v477 = vadd.f32 %v126, %v476
    %478 = vmatprep.mubr.f32.mxu0 0.0
    %479 = vmatmul.mubr.f32.gmra.mrb[0].mxu0 %v150
    %v480 = vpop.f32.mrb[0].mxu0
    %v481 = vadd.f32 %v122, %v480
    %v482 = vpop.f32.mrb[0].mxu0
    %v483 = vadd.f32 %v126, %v482
    %484 = vmatprep.mubr.f32.mxu0 0.0
    %485 = vmatmul.mubr.f32.gmra.mrb[0].mxu0 %v153
    %v486 = vpop.f32.mrb[0].mxu0
    %v487 = vadd.f32 %v122, %v486
    %v488 = vpop.f32.mrb[0].mxu0
    %v489 = vadd.f32 %v126, %v488
    %490 = vmatprep.mubr.f32.mxu0 0.0
    %491 = vmatmul.mubr.f32.gmra.mrb[0].mxu0 %v156
    %v492 = vpop.f32.mrb[0].mxu0
    %v493 = vadd.f32 %v122, %v492
    %v494 = vpop.f32.mrb[0].mxu0
    %v495 = vadd.f32 %v126, %v494
    %496 = vdwg.mxu0
    %497 = vst [vmem:[#allocation2] sm:$0xff] %v225
    %498 = vst [vmem:[#allocation2 + $0x8] sm:$0xff] %v227
    %499 = vst [vmem:[#allocation2 + $0x10] sm:$0xff] %v338
    %500 = vst [vmem:[#allocation2 + $0x18] sm:$0xff] %v340
    %501 = vst [vmem:[#allocation2 + $0x20] sm:$0xff] %v451
    %502 = vst [vmem:[#allocation2 + $0x28] sm:$0xff] %v453
    %503 = vst [vmem:[#allocation2 + $0x30] sm:$0xff] %v231
    %504 = vst [vmem:[#allocation2 + $0x38] sm:$0xff] %v233
    %505 = vst [vmem:[#allocation2 + $0x40] sm:$0xff] %v344
    %506 = vst [vmem:[#allocation2 + $0x48] sm:$0xff] %v346
    %507 = vst [vmem:[#allocation2 + $0x50] sm:$0xff] %v457
    %508 = vst [vmem:[#allocation2 + $0x58] sm:$0xff] %v459
    %509 = vst [vmem:[#allocation2 + $0x60] sm:$0xff] %v237
    %510 = vst [vmem:[#allocation2 + $0x68] sm:$0xff] %v239
    %511 = vst [vmem:[#allocation2 + $0x70] sm:$0xff] %v350
    %512 = vst [vmem:[#allocation2 + $0x78] sm:$0xff] %v352
    %513 = vst [vmem:[#allocation2 + $0x80] sm:$0xff] %v463
    %514 = vst [vmem:[#allocation2 + $0x88] sm:$0xff] %v465
    %515 = vst [vmem:[#allocation2 + $0x90] sm:$0xff] %v243
    %516 = vst [vmem:[#allocation2 + $0x98] sm:$0xff] %v245
    %517 = vst [vmem:[#allocation2 + $0xa0] sm:$0xff] %v356
    %518 = vst [vmem:[#allocation2 + $0xa8] sm:$0xff] %v358
    %519 = vst [vmem:[#allocation2 + $0xb0] sm:$0xff] %v469
    %520 = vst [vmem:[#allocation2 + $0xb8] sm:$0xff] %v471
    %521 = vst [vmem:[#allocation2 + $0xc0] sm:$0xff] %v249
    %522 = vst [vmem:[#allocation2 + $0xc8] sm:$0xff] %v251
    %523 = vst [vmem:[#allocation2 + $0xd0] sm:$0xff] %v362
    %524 = vst [vmem:[#allocation2 + $0xd8] sm:$0xff] %v364
    %525 = vst [vmem:[#allocation2 + $0xe0] sm:$0xff] %v475
    %526 = vst [vmem:[#allocation2 + $0xe8] sm:$0xff] %v477
    %527 = vst [vmem:[#allocation2 + $0xf0] sm:$0xff] %v255
    %528 = vst [vmem:[#allocation2 + $0xf8] sm:$0xff] %v257
    %529 = vst [vmem:[#allocation2 + $0x100] sm:$0xff] %v368
    %530 = vst [vmem:[#allocation2 + $0x108] sm:$0xff] %v370
    %531 = vst [vmem:[#allocation2 + $0x110] sm:$0xff] %v481
    %532 = vst [vmem:[#allocation2 + $0x118] sm:$0xff] %v483
    %533 = vst [vmem:[#allocation2 + $0x120] sm:$0xff] %v261
    %534 = vst [vmem:[#allocation2 + $0x128] sm:$0xff] %v263
    %535 = vst [vmem:[#allocation2 + $0x130] sm:$0xff] %v374
    %536 = vst [vmem:[#allocation2 + $0x138] sm:$0xff] %v376
    %537 = vst [vmem:[#allocation2 + $0x140] sm:$0xff] %v487
    %538 = vst [vmem:[#allocation2 + $0x148] sm:$0xff] %v489
    %539 = vst [vmem:[#allocation2 + $0x150] sm:$0xff] %v267
    %540 = vst [vmem:[#allocation2 + $0x158] sm:$0xff] %v269
    %541 = vst [vmem:[#allocation2 + $0x160] sm:$0xff] %v380
    %542 = vst [vmem:[#allocation2 + $0x168] sm:$0xff] %v382
    %543 = vst [vmem:[#allocation2 + $0x170] sm:$0xff] %v493
    %544 = vst [vmem:[#allocation2 + $0x178] sm:$0xff] %v495
    %v545 = vld [vmem:[#allocation6] sm:$0xff]
    %v546 = vld [vmem:[#allocation6 + $0x8] sm:$0xff]
    %v547 = vld [vmem:[#allocation6 + $0x10] sm:$0xff]
    %v548 = vld [vmem:[#allocation6 + $0x18] sm:$0xff]
    %v549 = vld [vmem:[#allocation6 + $0x20] sm:$0xff]
    %v550 = vld [vmem:[#allocation6 + $0x28] sm:$0xff]
    %v551 = vld [vmem:[#allocation6 + $0x30] sm:$0xff]
    %v552 = vld [vmem:[#allocation6 + $0x38] sm:$0xff]
    %v553 = vld [vmem:[#allocation6 + $0x40] sm:$0xff]
    %v554 = vld [vmem:[#allocation6 + $0x48] sm:$0xff]
    %v555 = vld [vmem:[#allocation6 + $0x50] sm:$0xff]
    %v556 = vld [vmem:[#allocation6 + $0x58] sm:$0xff]
    %v557 = vld [vmem:[#allocation6 + $0x60] sm:$0xff]
    %v558 = vld [vmem:[#allocation6 + $0x68] sm:$0xff]
    %v559 = vld [vmem:[#allocation6 + $0x70] sm:$0xff]
    %v560 = vld [vmem:[#allocation6 + $0x78] sm:$0xff]
    %v561 = vld [vmem:[#allocation6 + $0x80] sm:$0xff]
    %v562 = vld [vmem:[#allocation6 + $0x88] sm:$0xff]
    %v563 = vld [vmem:[#allocation6 + $0x90] sm:$0xff]
    %v564 = vld [vmem:[#allocation6 + $0x98] sm:$0xff]
    %v565 = vld [vmem:[#allocation6 + $0xa0] sm:$0xff]
    %v566 = vld [vmem:[#allocation6 + $0xa8] sm:$0xff]
    %v567 = vld [vmem:[#allocation6 + $0xb0] sm:$0xff]
    %v568 = vld [vmem:[#allocation6 + $0xb8] sm:$0xff]
    %v569 = vld [vmem:[#allocation6 + $0xc0] sm:$0xff]
    %v570 = vld [vmem:[#allocation6 + $0xc8] sm:$0xff]
    %v571 = vld [vmem:[#allocation6 + $0xd0] sm:$0xff]
    %v572 = vld [vmem:[#allocation6 + $0xd8] sm:$0xff]
    %v573 = vld [vmem:[#allocation6 + $0xe0] sm:$0xff]
    %v574 = vld [vmem:[#allocation6 + $0xe8] sm:$0xff]
    %v575 = vld [vmem:[#allocation6 + $0xf0] sm:$0xff]
    %v576 = vld [vmem:[#allocation6 + $0xf8] sm:$0xff]
    %v577 = vld [vmem:[#allocation6 + $0x100] sm:$0xff]
    %v578 = vld [vmem:[#allocation6 + $0x108] sm:$0xff]
    %v579 = vld [vmem:[#allocation6 + $0x110] sm:$0xff]
    %v580 = vld [vmem:[#allocation6 + $0x118] sm:$0xff]
    %v581 = vld [vmem:[#allocation6 + $0x120] sm:$0xff]
    %v582 = vld [vmem:[#allocation6 + $0x128] sm:$0xff]
    %v583 = vld [vmem:[#allocation6 + $0x130] sm:$0xff]
    %v584 = vld [vmem:[#allocation6 + $0x138] sm:$0xff]
    %v585 = vld [vmem:[#allocation6 + $0x140] sm:$0xff]
    %v586 = vld [vmem:[#allocation6 + $0x148] sm:$0xff]
    %v587 = vld [vmem:[#allocation6 + $0x150] sm:$0xff]
    %v588 = vld [vmem:[#allocation6 + $0x158] sm:$0xff]
    %v589 = vld [vmem:[#allocation6 + $0x160] sm:$0xff]
    %v590 = vld [vmem:[#allocation6 + $0x168] sm:$0xff]
    %v591 = vld [vmem:[#allocation6 + $0x170] sm:$0xff]
    %v592 = vld [vmem:[#allocation6 + $0x178] sm:$0xff]
    %v593 = vld [vmem:[#allocation6 + $0x180] sm:$0xff]
    %v594 = vld [vmem:[#allocation6 + $0x188] sm:$0xff]
    %v595 = vld [vmem:[#allocation6 + $0x190] sm:$0xff]
    %v596 = vld [vmem:[#allocation6 + $0x198] sm:$0xff]
    %v597 = vld [vmem:[#allocation6 + $0x1a0] sm:$0xff]
    %v598 = vld [vmem:[#allocation6 + $0x1a8] sm:$0xff]
    %v599 = vld [vmem:[#allocation6 + $0x1b0] sm:$0xff]
    %v600 = vld [vmem:[#allocation6 + $0x1b8] sm:$0xff]
    %v601 = vld [vmem:[#allocation6 + $0x1c0] sm:$0xff]
    %v602 = vld [vmem:[#allocation6 + $0x1c8] sm:$0xff]
    %v603 = vld [vmem:[#allocation6 + $0x1d0] sm:$0xff]
    %v604 = vld [vmem:[#allocation6 + $0x1d8] sm:$0xff]
    %v605 = vld [vmem:[#allocation6 + $0x1e0] sm:$0xff]
    %v606 = vld [vmem:[#allocation6 + $0x1e8] sm:$0xff]
    %v607 = vld [vmem:[#allocation6 + $0x1f0] sm:$0xff]
    %v608 = vld [vmem:[#allocation6 + $0x1f8] sm:$0xff]
    %v609 = vld [vmem:[#allocation6 + $0x200] sm:$0xff]
    %v610 = vld [vmem:[#allocation6 + $0x208] sm:$0xff]
    %v611 = vld [vmem:[#allocation6 + $0x210] sm:$0xff]
    %v612 = vld [vmem:[#allocation6 + $0x218] sm:$0xff]
    %v613 = vld [vmem:[#allocation6 + $0x220] sm:$0xff]
    %v614 = vld [vmem:[#allocation6 + $0x228] sm:$0xff]
    %v615 = vld [vmem:[#allocation6 + $0x230] sm:$0xff]
    %v616 = vld [vmem:[#allocation6 + $0x238] sm:$0xff]
    %v617 = vld [vmem:[#allocation6 + $0x240] sm:$0xff]
    %v618 = vld [vmem:[#allocation6 + $0x248] sm:$0xff]
    %v619 = vld [vmem:[#allocation6 + $0x250] sm:$0xff]
    %v620 = vld [vmem:[#allocation6 + $0x258] sm:$0xff]
    %v621 = vld [vmem:[#allocation6 + $0x260] sm:$0xff]
    %v622 = vld [vmem:[#allocation6 + $0x268] sm:$0xff]
    %v623 = vld [vmem:[#allocation6 + $0x270] sm:$0xff]
    %v624 = vld [vmem:[#allocation6 + $0x278] sm:$0xff]
    %v625 = vld [vmem:[#allocation6 + $0x280] sm:$0xff]
    %v626 = vld [vmem:[#allocation6 + $0x288] sm:$0xff]
    %v627 = vld [vmem:[#allocation6 + $0x290] sm:$0xff]
    %v628 = vld [vmem:[#allocation6 + $0x298] sm:$0xff]
    %v629 = vld [vmem:[#allocation6 + $0x2a0] sm:$0xff]
    %v630 = vld [vmem:[#allocation6 + $0x2a8] sm:$0xff]
    %v631 = vld [vmem:[#allocation6 + $0x2b0] sm:$0xff]
    %v632 = vld [vmem:[#allocation6 + $0x2b8] sm:$0xff]
    %v633 = vld [vmem:[#allocation6 + $0x2c0] sm:$0xff]
    %v634 = vld [vmem:[#allocation6 + $0x2c8] sm:$0xff]
    %v635 = vld [vmem:[#allocation6 + $0x2d0] sm:$0xff]
    %v636 = vld [vmem:[#allocation6 + $0x2d8] sm:$0xff]
    %v637 = vld [vmem:[#allocation6 + $0x2e0] sm:$0xff]
    %v638 = vld [vmem:[#allocation6 + $0x2e8] sm:$0xff]
    %v639 = vld [vmem:[#allocation6 + $0x2f0] sm:$0xff]
    %v640 = vld [vmem:[#allocation6 + $0x2f8] sm:$0xff]
    %v641 = vld [vmem:[#allocation6 + $0x300] sm:$0xff]
    %v642 = vld [vmem:[#allocation6 + $0x308] sm:$0xff]
    %v643 = vld [vmem:[#allocation6 + $0x310] sm:$0xff]
    %v644 = vld [vmem:[#allocation6 + $0x318] sm:$0xff]
    %v645 = vld [vmem:[#allocation6 + $0x320] sm:$0xff]
    %v646 = vld [vmem:[#allocation6 + $0x328] sm:$0xff]
    %v647 = vld [vmem:[#allocation6 + $0x330] sm:$0xff]
    %v648 = vld [vmem:[#allocation6 + $0x338] sm:$0xff]
    %v649 = vld [vmem:[#allocation6 + $0x340] sm:$0xff]
    %v650 = vld [vmem:[#allocation6 + $0x348] sm:$0xff]
    %v651 = vld [vmem:[#allocation6 + $0x350] sm:$0xff]
    %v652 = vld [vmem:[#allocation6 + $0x358] sm:$0xff]
    %v653 = vld [vmem:[#allocation6 + $0x360] sm:$0xff]
    %v654 = vld [vmem:[#allocation6 + $0x368] sm:$0xff]
    %v655 = vld [vmem:[#allocation6 + $0x370] sm:$0xff]
    %v656 = vld [vmem:[#allocation6 + $0x378] sm:$0xff]
    %v657 = vld [vmem:[#allocation6 + $0x380] sm:$0xff]
    %v658 = vld [vmem:[#allocation6 + $0x388] sm:$0xff]
    %v659 = vld [vmem:[#allocation6 + $0x390] sm:$0xff]
    %v660 = vld [vmem:[#allocation6 + $0x398] sm:$0xff]
    %v661 = vld [vmem:[#allocation6 + $0x3a0] sm:$0xff]
    %v662 = vld [vmem:[#allocation6 + $0x3a8] sm:$0xff]
    %v663 = vld [vmem:[#allocation6 + $0x3b0] sm:$0xff]
    %v664 = vld [vmem:[#allocation6 + $0x3b8] sm:$0xff]
    %v665 = vld [vmem:[#allocation6 + $0x3c0] sm:$0xff]
    %v666 = vld [vmem:[#allocation6 + $0x3c8] sm:$0xff]
    %v667 = vld [vmem:[#allocation6 + $0x3d0] sm:$0xff]
    %v668 = vld [vmem:[#allocation6 + $0x3d8] sm:$0xff]
    %v669 = vld [vmem:[#allocation6 + $0x3e0] sm:$0xff]
    %v670 = vld [vmem:[#allocation6 + $0x3e8] sm:$0xff]
    %v671 = vld [vmem:[#allocation6 + $0x3f0] sm:$0xff]
    %v672 = vld [vmem:[#allocation6 + $0x3f8] sm:$0xff]
    %v673 = vld [vmem:[#allocation6 + $0x400] sm:$0xff]
    %v674 = vld [vmem:[#allocation6 + $0x408] sm:$0xff]
    %v675 = vld [vmem:[#allocation6 + $0x410] sm:$0xff]
    %v676 = vld [vmem:[#allocation6 + $0x418] sm:$0xff]
    %v677 = vld [vmem:[#allocation6 + $0x420] sm:$0xff]
    %v678 = vld [vmem:[#allocation6 + $0x428] sm:$0xff]
    %v679 = vld [vmem:[#allocation6 + $0x430] sm:$0xff]
    %v680 = vld [vmem:[#allocation6 + $0x438] sm:$0xff]
    %v681 = vld [vmem:[#allocation6 + $0x440] sm:$0xff]
    %v682 = vld [vmem:[#allocation6 + $0x448] sm:$0xff]
    %v683 = vld [vmem:[#allocation6 + $0x450] sm:$0xff]
    %v684 = vld [vmem:[#allocation6 + $0x458] sm:$0xff]
    %v685 = vld [vmem:[#allocation6 + $0x460] sm:$0xff]
    %v686 = vld [vmem:[#allocation6 + $0x468] sm:$0xff]
    %v687 = vld [vmem:[#allocation6 + $0x470] sm:$0xff]
    %v688 = vld [vmem:[#allocation6 + $0x478] sm:$0xff]
    %v689 = vld [vmem:[#allocation6 + $0x480] sm:$0xff]
    %v690 = vld [vmem:[#allocation6 + $0x488] sm:$0xff]
    %v691 = vld [vmem:[#allocation6 + $0x490] sm:$0xff]
    %v692 = vld [vmem:[#allocation6 + $0x498] sm:$0xff]
    %v693 = vld [vmem:[#allocation6 + $0x4a0] sm:$0xff]
    %v694 = vld [vmem:[#allocation6 + $0x4a8] sm:$0xff]
    %v695 = vld [vmem:[#allocation6 + $0x4b0] sm:$0xff]
    %v696 = vld [vmem:[#allocation6 + $0x4b8] sm:$0xff]
    %v697 = vld [vmem:[#allocation6 + $0x4c0] sm:$0xff]
    %v698 = vld [vmem:[#allocation6 + $0x4c8] sm:$0xff]
    %v699 = vld [vmem:[#allocation6 + $0x4d0] sm:$0xff]
    %v700 = vld [vmem:[#allocation6 + $0x4d8] sm:$0xff]
    %v701 = vld [vmem:[#allocation6 + $0x4e0] sm:$0xff]
    %v702 = vld [vmem:[#allocation6 + $0x4e8] sm:$0xff]
    %v703 = vld [vmem:[#allocation6 + $0x4f0] sm:$0xff]
    %v704 = vld [vmem:[#allocation6 + $0x4f8] sm:$0xff]
    %v705 = vld [vmem:[#allocation6 + $0x500] sm:$0xff]
    %v706 = vld [vmem:[#allocation6 + $0x508] sm:$0xff]
    %v707 = vld [vmem:[#allocation6 + $0x510] sm:$0xff]
    %v708 = vld [vmem:[#allocation6 + $0x518] sm:$0xff]
    %v709 = vld [vmem:[#allocation6 + $0x520] sm:$0xff]
    %v710 = vld [vmem:[#allocation6 + $0x528] sm:$0xff]
    %v711 = vld [vmem:[#allocation6 + $0x530] sm:$0xff]
    %v712 = vld [vmem:[#allocation6 + $0x538] sm:$0xff]
    %v713 = vld [vmem:[#allocation6 + $0x540] sm:$0xff]
    %v714 = vld [vmem:[#allocation6 + $0x548] sm:$0xff]
    %v715 = vld [vmem:[#allocation6 + $0x550] sm:$0xff]
    %v716 = vld [vmem:[#allocation6 + $0x558] sm:$0xff]
    %v717 = vld [vmem:[#allocation6 + $0x560] sm:$0xff]
    %v718 = vld [vmem:[#allocation6 + $0x568] sm:$0xff]
    %v719 = vld [vmem:[#allocation6 + $0x570] sm:$0xff]
    %v720 = vld [vmem:[#allocation6 + $0x578] sm:$0xff]
    %v721 = vld [vmem:[#allocation6 + $0x580] sm:$0xff]
    %v722 = vld [vmem:[#allocation6 + $0x588] sm:$0xff]
    %v723 = vld [vmem:[#allocation6 + $0x590] sm:$0xff]
    %v724 = vld [vmem:[#allocation6 + $0x598] sm:$0xff]
    %v725 = vld [vmem:[#allocation6 + $0x5a0] sm:$0xff]
    %v726 = vld [vmem:[#allocation6 + $0x5a8] sm:$0xff]
    %v727 = vld [vmem:[#allocation6 + $0x5b0] sm:$0xff]
    %v728 = vld [vmem:[#allocation6 + $0x5b8] sm:$0xff]
    %v729 = vld [vmem:[#allocation6 + $0x5c0] sm:$0xff]
    %v730 = vld [vmem:[#allocation6 + $0x5c8] sm:$0xff]
    %v731 = vld [vmem:[#allocation6 + $0x5d0] sm:$0xff]
    %v732 = vld [vmem:[#allocation6 + $0x5d8] sm:$0xff]
    %v733 = vld [vmem:[#allocation6 + $0x5e0] sm:$0xff]
    %v734 = vld [vmem:[#allocation6 + $0x5e8] sm:$0xff]
    %v735 = vld [vmem:[#allocation6 + $0x5f0] sm:$0xff]
    %v736 = vld [vmem:[#allocation6 + $0x5f8] sm:$0xff]
    %v737 = vld [vmem:[%s4] sm:$0x3]
    %v739 = vlaneseq
    %v740 = vshrl.u32 %v739, 7
    %v741 = vsub.s32 0, %v740
    %v742 = vrot.slane %v737, %v741
    %v743 = vlaneseq
    %v744 = vshrl.u32 %v743, 7
    %v745 = vsub.s32 1, %v744
    %v746 = vrot.slane %v737, %v745
    %s749 = smul.u32 0, 6
    %s750 = smul.addr %s749, 8
    %s751 = scalar_lea.vmem [#allocation2], %s750
    %v752 = vld [vmem:[%s751] sm:$0xff]
    %v753 = vld [vmem:[%s751 + $0x8] sm:$0xff]
    %v754 = vld [vmem:[%s751 + $0x10] sm:$0xff]
    %v755 = vld [vmem:[%s751 + $0x18] sm:$0xff]
    %v756 = vld [vmem:[%s751 + $0x20] sm:$0xff]
    %v757 = vld [vmem:[%s751 + $0x28] sm:$0xff]
    %758 = vmatprep.subr.mxu0 %v546
    %759 = vmatpush1.msra.mxu0 %v545
    %760 = vmatprep.subr.mxu0 %v552
    %761 = vmatpush1.msra.mxu0 %v551
    %762 = vmatprep.subr.mxu0 %v558
    %763 = vmatpush1.msra.mxu0 %v557
    %764 = vmatprep.subr.mxu0 %v564
    %765 = vmatpush1.msra.mxu0 %v563
    %766 = vmatprep.subr.mxu0 %v570
    %767 = vmatpush1.msra.mxu0 %v569
    %768 = vmatprep.subr.mxu0 %v576
    %769 = vmatpush1.msra.mxu0 %v575
    %770 = vmatprep.subr.mxu0 %v582
    %771 = vmatpush1.msra.mxu0 %v581
    %772 = vmatprep.subr.mxu0 %v588
    %773 = vmatpush1.msra.mxu0 %v587
    %774 = vmatprep.subr.mxu0 %v594
    %775 = vmatpush1.msra.mxu0 %v593
    %776 = vmatprep.subr.mxu0 %v600
    %777 = vmatpush1.msra.mxu0 %v599
    %778 = vmatprep.subr.mxu0 %v606
    %779 = vmatpush1.msra.mxu0 %v605
    %780 = vmatprep.subr.mxu0 %v612
    %781 = vmatpush1.msra.mxu0 %v611
    %782 = vmatprep.subr.mxu0 %v618
    %783 = vmatpush1.msra.mxu0 %v617
    %784 = vmatprep.subr.mxu0 %v624
    %785 = vmatpush1.msra.mxu0 %v623
    %786 = vmatprep.subr.mxu0 %v630
    %787 = vmatpush1.msra.mxu0 %v629
    %788 = vmatprep.subr.mxu0 %v636
    %789 = vmatpush1.msra.mxu0 %v635
    %790 = vmatprep.subr.mxu0 %v642
    %791 = vmatpush1.msra.mxu0 %v641
    %792 = vmatprep.subr.mxu0 %v648
    %793 = vmatpush1.msra.mxu0 %v647
    %794 = vmatprep.subr.mxu0 %v654
    %795 = vmatpush1.msra.mxu0 %v653
    %796 = vmatprep.subr.mxu0 %v660
    %797 = vmatpush1.msra.mxu0 %v659
    %798 = vmatprep.subr.mxu0 %v666
    %799 = vmatpush1.msra.mxu0 %v665
    %800 = vmatprep.subr.mxu0 %v672
    %801 = vmatpush1.msra.mxu0 %v671
    %802 = vmatprep.subr.mxu0 %v678
    %803 = vmatpush1.msra.mxu0 %v677
    %804 = vmatprep.subr.mxu0 %v684
    %805 = vmatpush1.msra.mxu0 %v683
    %806 = vmatprep.subr.mxu0 %v690
    %807 = vmatpush1.msra.mxu0 %v689
    %808 = vmatprep.subr.mxu0 %v696
    %809 = vmatpush1.msra.mxu0 %v695
    %810 = vmatprep.subr.mxu0 %v702
    %811 = vmatpush1.msra.mxu0 %v701
    %812 = vmatprep.subr.mxu0 %v708
    %813 = vmatpush1.msra.mxu0 %v707
    %814 = vmatprep.subr.mxu0 %v714
    %815 = vmatpush1.msra.mxu0 %v713
    %816 = vmatprep.subr.mxu0 %v720
    %817 = vmatpush1.msra.mxu0 %v719
    %818 = vmatprep.subr.mxu0 %v726
    %819 = vmatpush1.msra.mxu0 %v725
    %820 = vmatprep.subr.mxu0 %v732
    %821 = vmatpush1.msra.mxu0 %v731
    %822 = vmatprep.mubr.f32.mxu0 0.0
    %823 = vmatmul.mubr.f32.gmra.mrb[0].mxu0 0.0
    %v824 = vpop.f32.mrb[0].mxu0
    %v825 = vadd.f32 0.0, %v824
    %v826 = vpop.f32.mrb[0].mxu0
    %v827 = vadd.f32 0.0, %v826
    %828 = vdwg.mxu0
    %829 = vmatprep.subr.mxu0 %v548
    %830 = vmatpush1.msra.mxu0 %v547
    %831 = vmatprep.subr.mxu0 %v554
    %832 = vmatpush1.msra.mxu0 %v553
    %833 = vmatprep.subr.mxu0 %v560
    %834 = vmatpush1.msra.mxu0 %v559
    %835 = vmatprep.subr.mxu0 %v566
    %836 = vmatpush1.msra.mxu0 %v565
    %837 = vmatprep.subr.mxu0 %v572
    %838 = vmatpush1.msra.mxu0 %v571
    %839 = vmatprep.subr.mxu0 %v578
    %840 = vmatpush1.msra.mxu0 %v577
    %841 = vmatprep.subr.mxu0 %v584
    %842 = vmatpush1.msra.mxu0 %v583
    %843 = vmatprep.subr.mxu0 %v590
    %844 = vmatpush1.msra.mxu0 %v589
    %845 = vmatprep.subr.mxu0 %v596
    %846 = vmatpush1.msra.mxu0 %v595
    %847 = vmatprep.subr.mxu0 %v602
    %848 = vmatpush1.msra.mxu0 %v601
    %849 = vmatprep.subr.mxu0 %v608
    %850 = vmatpush1.msra.mxu0 %v607
    %851 = vmatprep.subr.mxu0 %v614
    %852 = vmatpush1.msra.mxu0 %v613
    %853 = vmatprep.subr.mxu0 %v620
    %854 = vmatpush1.msra.mxu0 %v619
    %855 = vmatprep.subr.mxu0 %v626
    %856 = vmatpush1.msra.mxu0 %v625
    %857 = vmatprep.subr.mxu0 %v632
    %858 = vmatpush1.msra.mxu0 %v631
    %859 = vmatprep.subr.mxu0 %v638
    %860 = vmatpush1.msra.mxu0 %v637
    %861 = vmatprep.subr.mxu0 %v644
    %862 = vmatpush1.msra.mxu0 %v643
    %863 = vmatprep.subr.mxu0 %v650
    %864 = vmatpush1.msra.mxu0 %v649
    %865 = vmatprep.subr.mxu0 %v656
    %866 = vmatpush1.msra.mxu0 %v655
    %867 = vmatprep.subr.mxu0 %v662
    %868 = vmatpush1.msra.mxu0 %v661
    %869 = vmatprep.subr.mxu0 %v668
    %870 = vmatpush1.msra.mxu0 %v667
    %871 = vmatprep.subr.mxu0 %v674
    %872 = vmatpush1.msra.mxu0 %v673
    %873 = vmatprep.subr.mxu0 %v680
    %874 = vmatpush1.msra.mxu0 %v679
    %875 = vmatprep.subr.mxu0 %v686
    %876 = vmatpush1.msra.mxu0 %v685
    %877 = vmatprep.subr.mxu0 %v692
    %878 = vmatpush1.msra.mxu0 %v691
    %879 = vmatprep.subr.mxu0 %v698
    %880 = vmatpush1.msra.mxu0 %v697
    %881 = vmatprep.subr.mxu0 %v704
    %882 = vmatpush1.msra.mxu0 %v703
    %883 = vmatprep.subr.mxu0 %v710
    %884 = vmatpush1.msra.mxu0 %v709
    %885 = vmatprep.subr.mxu0 %v716
    %886 = vmatpush1.msra.mxu0 %v715
    %887 = vmatprep.subr.mxu0 %v722
    %888 = vmatpush1.msra.mxu0 %v721
    %889 = vmatprep.subr.mxu0 %v728
    %890 = vmatpush1.msra.mxu0 %v727
    %891 = vmatprep.subr.mxu0 %v734
    %892 = vmatpush1.msra.mxu0 %v733
    %893 = vmatprep.mubr.f32.mxu0 0.0
    %894 = vmatmul.mubr.f32.gmra.mrb[0].mxu0 0.0
    %v895 = vpop.f32.mrb[0].mxu0
    %v896 = vadd.f32 0.0, %v895
    %v897 = vpop.f32.mrb[0].mxu0
    %v898 = vadd.f32 0.0, %v897
    %899 = vdwg.mxu0
    %900 = vmatprep.subr.mxu0 %v550
    %901 = vmatpush1.msra.mxu0 %v549
    %902 = vmatprep.subr.mxu0 %v556
    %903 = vmatpush1.msra.mxu0 %v555
    %904 = vmatprep.subr.mxu0 %v562
    %905 = vmatpush1.msra.mxu0 %v561
    %906 = vmatprep.subr.mxu0 %v568
    %907 = vmatpush1.msra.mxu0 %v567
    %908 = vmatprep.subr.mxu0 %v574
    %909 = vmatpush1.msra.mxu0 %v573
    %910 = vmatprep.subr.mxu0 %v580
    %911 = vmatpush1.msra.mxu0 %v579
    %912 = vmatprep.subr.mxu0 %v586
    %913 = vmatpush1.msra.mxu0 %v585
    %914 = vmatprep.subr.mxu0 %v592
    %915 = vmatpush1.msra.mxu0 %v591
    %916 = vmatprep.subr.mxu0 %v598
    %917 = vmatpush1.msra.mxu0 %v597
    %918 = vmatprep.subr.mxu0 %v604
    %919 = vmatpush1.msra.mxu0 %v603
    %920 = vmatprep.subr.mxu0 %v610
    %921 = vmatpush1.msra.mxu0 %v609
    %922 = vmatprep.subr.mxu0 %v616
    %923 = vmatpush1.msra.mxu0 %v615
    %924 = vmatprep.subr.mxu0 %v622
    %925 = vmatpush1.msra.mxu0 %v621
    %926 = vmatprep.subr.mxu0 %v628
    %927 = vmatpush1.msra.mxu0 %v627
    %928 = vmatprep.subr.mxu0 %v634
    %929 = vmatpush1.msra.mxu0 %v633
    %930 = vmatprep.subr.mxu0 %v640
    %931 = vmatpush1.msra.mxu0 %v639
    %932 = vmatprep.subr.mxu0 %v646
    %933 = vmatpush1.msra.mxu0 %v645
    %934 = vmatprep.subr.mxu0 %v652
    %935 = vmatpush1.msra.mxu0 %v651
    %936 = vmatprep.subr.mxu0 %v658
    %937 = vmatpush1.msra.mxu0 %v657
    %938 = vmatprep.subr.mxu0 %v664
    %939 = vmatpush1.msra.mxu0 %v663
    %940 = vmatprep.subr.mxu0 %v670
    %941 = vmatpush1.msra.mxu0 %v669
    %942 = vmatprep.subr.mxu0 %v676
    %943 = vmatpush1.msra.mxu0 %v675
    %944 = vmatprep.subr.mxu0 %v682
    %945 = vmatpush1.msra.mxu0 %v681
    %946 = vmatprep.subr.mxu0 %v688
    %947 = vmatpush1.msra.mxu0 %v687
    %948 = vmatprep.subr.mxu0 %v694
    %949 = vmatpush1.msra.mxu0 %v693
    %950 = vmatprep.subr.mxu0 %v700
    %951 = vmatpush1.msra.mxu0 %v699
    %952 = vmatprep.subr.mxu0 %v706
    %953 = vmatpush1.msra.mxu0 %v705
    %954 = vmatprep.subr.mxu0 %v712
    %955 = vmatpush1.msra.mxu0 %v711
    %956 = vmatprep.subr.mxu0 %v718
    %957 = vmatpush1.msra.mxu0 %v717
    %958 = vmatprep.subr.mxu0 %v724
    %959 = vmatpush1.msra.mxu0 %v723
    %960 = vmatprep.subr.mxu0 %v730
    %961 = vmatpush1.msra.mxu0 %v729
    %962 = vmatprep.subr.mxu0 %v736
    %963 = vmatpush1.msra.mxu0 %v735
    %964 = vmatprep.mubr.f32.mxu0 0.0
    %965 = vmatmul.mubr.f32.gmra.mrb[0].mxu0 0.0
    %v966 = vpop.f32.mrb[0].mxu0
    %v967 = vadd.f32 0.0, %v966
    %v968 = vpop.f32.mrb[0].mxu0
    %v969 = vadd.f32 0.0, %v968
    %970 = vdwg.mxu0
    %v971 = vadd.f32 %v752, %v825
    %v972 = vadd.f32 %v753, %v827
    %v973 = vxor.u32 %v971, 2147483648
    %v974 = vxor.u32 %v972, 2147483648
    %v975 = vmul.f32 %v973, 1.442695
    %v976 = vpow.pop %v975
    %v977 = vmul.f32 %v974, 1.442695
    %v978 = vpow.pop %v977
    %v979 = vadd.f32 %v976, 1.0
    %v980 = vadd.f32 %v978, 1.0
    %v981 = vrcp.pop %v979
    %v982 = vmul.f32 1.0, %v981
    %v983 = vrcp.pop %v980
    %v984 = vmul.f32 1.0, %v983
    %v985 = vadd.f32 %v754, %v896
    %v986 = vadd.f32 %v755, %v898
    %v987 = vxor.u32 %v985, 2147483648
    %v988 = vxor.u32 %v986, 2147483648
    %v989 = vmul.f32 %v987, 1.442695
    %v990 = vpow.pop %v989
    %v991 = vmul.f32 %v988, 1.442695
    %v992 = vpow.pop %v991
    %v993 = vadd.f32 %v990, 1.0
    %v994 = vadd.f32 %v992, 1.0
    %v995 = vrcp.pop %v993
    %v996 = vmul.f32 1.0, %v995
    %v997 = vrcp.pop %v994
    %v998 = vmul.f32 1.0, %v997
    %v999 = vadd.f32 %v967, %v742
    %v1000 = vadd.f32 %v969, %v746
    %v1001 = vmul.f32 %v982, %v999
    %v1002 = vmul.f32 %v984, %v1000
    %v1003 = vadd.f32 %v756, %v1001
    %v1004 = vadd.f32 %v757, %v1002
    %v1005 = vtanh.pop %v1003
    %v1006 = vtanh.pop %v1004
    %v1007 = vsub.f32 1.0, %v996
    %v1008 = vsub.f32 1.0, %v998
    %v1009 = vmul.f32 %v1007, %v1005
    %v1010 = vmul.f32 %v1008, %v1006
    %v1011 = vmul.f32 %v996, 0.0
    %v1012 = vmul.f32 %v998, 0.0
    %v1013 = vadd.f32 %v1009, %v1011
    %v1014 = vadd.f32 %v1010, %v1012
    %s1015 = smul.u32 1, 6
    %s1016 = smul.addr %s1015, 8
    %s1017 = scalar_lea.vmem [#allocation2], %s1016
    %v1018 = vld [vmem:[%s1017] sm:$0xff]
    %v1019 = vld [vmem:[%s1017 + $0x8] sm:$0xff]
    %v1020 = vld [vmem:[%s1017 + $0x10] sm:$0xff]
    %v1021 = vld [vmem:[%s1017 + $0x18] sm:$0xff]
    %v1022 = vld [vmem:[%s1017 + $0x20] sm:$0xff]
    %v1023 = vld [vmem:[%s1017 + $0x28] sm:$0xff]
    %1024 = vmatprep.subr.mxu0 %v546
    %1025 = vmatpush1.msra.mxu0 %v545
    %1026 = vmatprep.subr.mxu0 %v552
    %1027 = vmatpush1.msra.mxu0 %v551
    %1028 = vmatprep.subr.mxu0 %v558
    %1029 = vmatpush1.msra.mxu0 %v557
    %1030 = vmatprep.subr.mxu0 %v564
    %1031 = vmatpush1.msra.mxu0 %v563
    %1032 = vmatprep.subr.mxu0 %v570
    %1033 = vmatpush1.msra.mxu0 %v569
    %1034 = vmatprep.subr.mxu0 %v576
    %1035 = vmatpush1.msra.mxu0 %v575
    %1036 = vmatprep.subr.mxu0 %v582
    %1037 = vmatpush1.msra.mxu0 %v581
    %1038 = vmatprep.subr.mxu0 %v588
    %1039 = vmatpush1.msra.mxu0 %v587
    %1040 = vmatprep.subr.mxu0 %v594
    %1041 = vmatpush1.msra.mxu0 %v593
    %1042 = vmatprep.subr.mxu0 %v600
    %1043 = vmatpush1.msra.mxu0 %v599
    %1044 = vmatprep.subr.mxu0 %v606
    %1045 = vmatpush1.msra.mxu0 %v605
    %1046 = vmatprep.subr.mxu0 %v612
    %1047 = vmatpush1.msra.mxu0 %v611
    %1048 = vmatprep.subr.mxu0 %v618
    %1049 = vmatpush1.msra.mxu0 %v617
    %1050 = vmatprep.subr.mxu0 %v624
    %1051 = vmatpush1.msra.mxu0 %v623
    %1052 = vmatprep.subr.mxu0 %v630
    %1053 = vmatpush1.msra.mxu0 %v629
    %1054 = vmatprep.subr.mxu0 %v636
    %1055 = vmatpush1.msra.mxu0 %v635
    %1056 = vmatprep.subr.mxu0 %v642
    %1057 = vmatpush1.msra.mxu0 %v641
    %1058 = vmatprep.subr.mxu0 %v648
    %1059 = vmatpush1.msra.mxu0 %v647
    %1060 = vmatprep.subr.mxu0 %v654
    %1061 = vmatpush1.msra.mxu0 %v653
    %1062 = vmatprep.subr.mxu0 %v660
    %1063 = vmatpush1.msra.mxu0 %v659
    %1064 = vmatprep.subr.mxu0 %v666
    %1065 = vmatpush1.msra.mxu0 %v665
    %1066 = vmatprep.subr.mxu0 %v672
    %1067 = vmatpush1.msra.mxu0 %v671
    %1068 = vmatprep.subr.mxu0 %v678
    %1069 = vmatpush1.msra.mxu0 %v677
    %1070 = vmatprep.subr.mxu0 %v684
    %1071 = vmatpush1.msra.mxu0 %v683
    %1072 = vmatprep.subr.mxu0 %v690
    %1073 = vmatpush1.msra.mxu0 %v689
    %1074 = vmatprep.subr.mxu0 %v696
    %1075 = vmatpush1.msra.mxu0 %v695
    %1076 = vmatprep.subr.mxu0 %v702
    %1077 = vmatpush1.msra.mxu0 %v701
    %1078 = vmatprep.subr.mxu0 %v708
    %1079 = vmatpush1.msra.mxu0 %v707
    %1080 = vmatprep.subr.mxu0 %v714
    %1081 = vmatpush1.msra.mxu0 %v713
    %1082 = vmatprep.subr.mxu0 %v720
    %1083 = vmatpush1.msra.mxu0 %v719
    %1084 = vmatprep.subr.mxu0 %v726
    %1085 = vmatpush1.msra.mxu0 %v725
    %1086 = vmatprep.subr.mxu0 %v732
    %1087 = vmatpush1.msra.mxu0 %v731
    %1088 = vmatprep.mubr.f32.mxu0 %v1014
    %1089 = vmatmul.mubr.f32.gmra.mrb[0].mxu0 %v1013
    %v1090 = vpop.f32.mrb[0].mxu0
    %v1091 = vadd.f32 0.0, %v1090
    %v1092 = vpop.f32.mrb[0].mxu0
    %v1093 = vadd.f32 0.0, %v1092
    %1094 = vdwg.mxu0
    %1095 = vmatprep.subr.mxu0 %v548
    %1096 = vmatpush1.msra.mxu0 %v547
    %1097 = vmatprep.subr.mxu0 %v554
    %1098 = vmatpush1.msra.mxu0 %v553
    %1099 = vmatprep.subr.mxu0 %v560
    %1100 = vmatpush1.msra.mxu0 %v559
    %1101 = vmatprep.subr.mxu0 %v566
    %1102 = vmatpush1.msra.mxu0 %v565
    %1103 = vmatprep.subr.mxu0 %v572
    %1104 = vmatpush1.msra.mxu0 %v571
    %1105 = vmatprep.subr.mxu0 %v578
    %1106 = vmatpush1.msra.mxu0 %v577
    %1107 = vmatprep.subr.mxu0 %v584
    %1108 = vmatpush1.msra.mxu0 %v583
    %1109 = vmatprep.subr.mxu0 %v590
    %1110 = vmatpush1.msra.mxu0 %v589
    %1111 = vmatprep.subr.mxu0 %v596
    %1112 = vmatpush1.msra.mxu0 %v595
    %1113 = vmatprep.subr.mxu0 %v602
    %1114 = vmatpush1.msra.mxu0 %v601
    %1115 = vmatprep.subr.mxu0 %v608
    %1116 = vmatpush1.msra.mxu0 %v607
    %1117 = vmatprep.subr.mxu0 %v614
    %1118 = vmatpush1.msra.mxu0 %v613
    %1119 = vmatprep.subr.mxu0 %v620
    %1120 = vmatpush1.msra.mxu0 %v619
    %1121 = vmatprep.subr.mxu0 %v626
    %1122 = vmatpush1.msra.mxu0 %v625
    %1123 = vmatprep.subr.mxu0 %v632
    %1124 = vmatpush1.msra.mxu0 %v631
    %1125 = vmatprep.subr.mxu0 %v638
    %1126 = vmatpush1.msra.mxu0 %v637
    %1127 = vmatprep.subr.mxu0 %v644
    %1128 = vmatpush1.msra.mxu0 %v643
    %1129 = vmatprep.subr.mxu0 %v650
    %1130 = vmatpush1.msra.mxu0 %v649
    %1131 = vmatprep.subr.mxu0 %v656
    %1132 = vmatpush1.msra.mxu0 %v655
    %1133 = vmatprep.subr.mxu0 %v662
    %1134 = vmatpush1.msra.mxu0 %v661
    %1135 = vmatprep.subr.mxu0 %v668
    %1136 = vmatpush1.msra.mxu0 %v667
    %1137 = vmatprep.subr.mxu0 %v674
    %1138 = vmatpush1.msra.mxu0 %v673
    %1139 = vmatprep.subr.mxu0 %v680
    %1140 = vmatpush1.msra.mxu0 %v679
    %1141 = vmatprep.subr.mxu0 %v686
    %1142 = vmatpush1.msra.mxu0 %v685
    %1143 = vmatprep.subr.mxu0 %v692
    %1144 = vmatpush1.msra.mxu0 %v691
    %1145 = vmatprep.subr.mxu0 %v698
    %1146 = vmatpush1.msra.mxu0 %v697
    %1147 = vmatprep.subr.mxu0 %v704
    %1148 = vmatpush1.msra.mxu0 %v703
    %1149 = vmatprep.subr.mxu0 %v710
    %1150 = vmatpush1.msra.mxu0 %v709
    %1151 = vmatprep.subr.mxu0 %v716
    %1152 = vmatpush1.msra.mxu0 %v715
    %1153 = vmatprep.subr.mxu0 %v722
    %1154 = vmatpush1.msra.mxu0 %v721
    %1155 = vmatprep.subr.mxu0 %v728
    %1156 = vmatpush1.msra.mxu0 %v727
    %1157 = vmatprep.subr.mxu0 %v734
    %1158 = vmatpush1.msra.mxu0 %v733
    %1159 = vmatprep.mubr.f32.mxu0 %v1014
    %1160 = vmatmul.mubr.f32.gmra.mrb[0].mxu0 %v1013
    %v1161 = vpop.f32.mrb[0].mxu0
    %v1162 = vadd.f32 0.0, %v1161
    %v1163 = vpop.f32.mrb[0].mxu0
    %v1164 = vadd.f32 0.0, %v1163
    %1165 = vdwg.mxu0
    %1166 = vmatprep.subr.mxu0 %v550
    %1167 = vmatpush1.msra.mxu0 %v549
    %1168 = vmatprep.subr.mxu0 %v556
    %1169 = vmatpush1.msra.mxu0 %v555
    %1170 = vmatprep.subr.mxu0 %v562
    %1171 = vmatpush1.msra.mxu0 %v561
    %1172 = vmatprep.subr.mxu0 %v568
    %1173 = vmatpush1.msra.mxu0 %v567
    %1174 = vmatprep.subr.mxu0 %v574
    %1175 = vmatpush1.msra.mxu0 %v573
    %1176 = vmatprep.subr.mxu0 %v580
    %1177 = vmatpush1.msra.mxu0 %v579
    %1178 = vmatprep.subr.mxu0 %v586
    %1179 = vmatpush1.msra.mxu0 %v585
    %1180 = vmatprep.subr.mxu0 %v592
    %1181 = vmatpush1.msra.mxu0 %v591
    %1182 = vmatprep.subr.mxu0 %v598
    %1183 = vmatpush1.msra.mxu0 %v597
    %1184 = vmatprep.subr.mxu0 %v604
    %1185 = vmatpush1.msra.mxu0 %v603
    %1186 = vmatprep.subr.mxu0 %v610
    %1187 = vmatpush1.msra.mxu0 %v609
    %1188 = vmatprep.subr.mxu0 %v616
    %1189 = vmatpush1.msra.mxu0 %v615
    %1190 = vmatprep.subr.mxu0 %v622
    %1191 = vmatpush1.msra.mxu0 %v621
    %1192 = vmatprep.subr.mxu0 %v628
    %1193 = vmatpush1.msra.mxu0 %v627
    %1194 = vmatprep.subr.mxu0 %v634
    %1195 = vmatpush1.msra.mxu0 %v633
    %1196 = vmatprep.subr.mxu0 %v640
    %1197 = vmatpush1.msra.mxu0 %v639
    %1198 = vmatprep.subr.mxu0 %v646
    %1199 = vmatpush1.msra.mxu0 %v645
    %1200 = vmatprep.subr.mxu0 %v652
    %1201 = vmatpush1.msra.mxu0 %v651
    %1202 = vmatprep.subr.mxu0 %v658
    %1203 = vmatpush1.msra.mxu0 %v657
    %1204 = vmatprep.subr.mxu0 %v664
    %1205 = vmatpush1.msra.mxu0 %v663
    %1206 = vmatprep.subr.mxu0 %v670
    %1207 = vmatpush1.msra.mxu0 %v669
    %1208 = vmatprep.subr.mxu0 %v676
    %1209 = vmatpush1.msra.mxu0 %v675
    %1210 = vmatprep.subr.mxu0 %v682
    %1211 = vmatpush1.msra.mxu0 %v681
    %1212 = vmatprep.subr.mxu0 %v688
    %1213 = vmatpush1.msra.mxu0 %v687
    %1214 = vmatprep.subr.mxu0 %v694
    %1215 = vmatpush1.msra.mxu0 %v693
    %1216 = vmatprep.subr.mxu0 %v700
    %1217 = vmatpush1.msra.mxu0 %v699
    %1218 = vmatprep.subr.mxu0 %v706
    %1219 = vmatpush1.msra.mxu0 %v705
    %1220 = vmatprep.subr.mxu0 %v712
    %1221 = vmatpush1.msra.mxu0 %v711
    %1222 = vmatprep.subr.mxu0 %v718
    %1223 = vmatpush1.msra.mxu0 %v717
    %1224 = vmatprep.subr.mxu0 %v724
    %1225 = vmatpush1.msra.mxu0 %v723
    %1226 = vmatprep.subr.mxu0 %v730
    %1227 = vmatpush1.msra.mxu0 %v729
    %1228 = vmatprep.subr.mxu0 %v736
    %1229 = vmatpush1.msra.mxu0 %v735
    %1230 = vmatprep.mubr.f32.mxu0 %v1014
    %1231 = vmatmul.mubr.f32.gmra.mrb[0].mxu0 %v1013
    %v1232 = vpop.f32.mrb[0].mxu0
    %v1233 = vadd.f32 0.0, %v1232
    %v1234 = vpop.f32.mrb[0].mxu0
    %v1235 = vadd.f32 0.0, %v1234
    %1236 = vdwg.mxu0
    %v1237 = vadd.f32 %v1018, %v1091
    %v1238 = vadd.f32 %v1019, %v1093
    %v1239 = vxor.u32 %v1237, 2147483648
    %v1240 = vxor.u32 %v1238, 2147483648
    %v1241 = vmul.f32 %v1239, 1.442695
    %v1242 = vpow.pop %v1241
    %v1243 = vmul.f32 %v1240, 1.442695
    %v1244 = vpow.pop %v1243
    %v1245 = vadd.f32 %v1242, 1.0
    %v1246 = vadd.f32 %v1244, 1.0
    %v1247 = vrcp.pop %v1245
    %v1248 = vmul.f32 1.0, %v1247
    %v1249 = vrcp.pop %v1246
    %v1250 = vmul.f32 1.0, %v1249
    %v1251 = vadd.f32 %v1020, %v1162
    %v1252 = vadd.f32 %v1021, %v1164
    %v1253 = vxor.u32 %v1251, 2147483648
    %v1254 = vxor.u32 %v1252, 2147483648
    %v1255 = vmul.f32 %v1253, 1.442695
    %v1256 = vpow.pop %v1255
    %v1257 = vmul.f32 %v1254, 1.442695
    %v1258 = vpow.pop %v1257
    %v1259 = vadd.f32 %v1256, 1.0
    %v1260 = vadd.f32 %v1258, 1.0
    %v1261 = vrcp.pop %v1259
    %v1262 = vmul.f32 1.0, %v1261
    %v1263 = vrcp.pop %v1260
    %v1264 = vmul.f32 1.0, %v1263
    %v1265 = vadd.f32 %v1233, %v742
    %v1266 = vadd.f32 %v1235, %v746
    %v1267 = vmul.f32 %v1248, %v1265
    %v1268 = vmul.f32 %v1250, %v1266
    %v1269 = vadd.f32 %v1022, %v1267
    %v1270 = vadd.f32 %v1023, %v1268
    %v1271 = vtanh.pop %v1269
    %v1272 = vtanh.pop %v1270
    %v1273 = vsub.f32 1.0, %v1262
    %v1274 = vsub.f32 1.0, %v1264
    %v1275 = vmul.f32 %v1273, %v1271
    %v1276 = vmul.f32 %v1274, %v1272
    %v1277 = vmul.f32 %v1262, %v1013
    %v1278 = vmul.f32 %v1264, %v1014
    %v1279 = vadd.f32 %v1275, %v1277
    %v1280 = vadd.f32 %v1276, %v1278
    %s1281 = smul.u32 2, 6
    %s1282 = smul.addr %s1281, 8
    %s1283 = scalar_lea.vmem [#allocation2], %s1282
    %v1284 = vld [vmem:[%s1283] sm:$0xff]
    %v1285 = vld [vmem:[%s1283 + $0x8] sm:$0xff]
    %v1286 = vld [vmem:[%s1283 + $0x10] sm:$0xff]
    %v1287 = vld [vmem:[%s1283 + $0x18] sm:$0xff]
    %v1288 = vld [vmem:[%s1283 + $0x20] sm:$0xff]
    %v1289 = vld [vmem:[%s1283 + $0x28] sm:$0xff]
    %1290 = vmatprep.subr.mxu0 %v546
    %1291 = vmatpush1.msra.mxu0 %v545
    %1292 = vmatprep.subr.mxu0 %v552
    %1293 = vmatpush1.msra.mxu0 %v551
    %1294 = vmatprep.subr.mxu0 %v558
    %1295 = vmatpush1.msra.mxu0 %v557
    %1296 = vmatprep.subr.mxu0 %v564
    %1297 = vmatpush1.msra.mxu0 %v563
    %1298 = vmatprep.subr.mxu0 %v570
    %1299 = vmatpush1.msra.mxu0 %v569
    %1300 = vmatprep.subr.mxu0 %v576
    %1301 = vmatpush1.msra.mxu0 %v575
    %1302 = vmatprep.subr.mxu0 %v582
    %1303 = vmatpush1.msra.mxu0 %v581
    %1304 = vmatprep.subr.mxu0 %v588
    %1305 = vmatpush1.msra.mxu0 %v587
    %1306 = vmatprep.subr.mxu0 %v594
    %1307 = vmatpush1.msra.mxu0 %v593
    %1308 = vmatprep.subr.mxu0 %v600
    %1309 = vmatpush1.msra.mxu0 %v599
    %1310 = vmatprep.subr.mxu0 %v606
    %1311 = vmatpush1.msra.mxu0 %v605
    %1312 = vmatprep.subr.mxu0 %v612
    %1313 = vmatpush1.msra.mxu0 %v611
    %1314 = vmatprep.subr.mxu0 %v618
    %1315 = vmatpush1.msra.mxu0 %v617
    %1316 = vmatprep.subr.mxu0 %v624
    %1317 = vmatpush1.msra.mxu0 %v623
    %1318 = vmatprep.subr.mxu0 %v630
    %1319 = vmatpush1.msra.mxu0 %v629
    %1320 = vmatprep.subr.mxu0 %v636
    %1321 = vmatpush1.msra.mxu0 %v635
    %1322 = vmatprep.subr.mxu0 %v642
    %1323 = vmatpush1.msra.mxu0 %v641
    %1324 = vmatprep.subr.mxu0 %v648
    %1325 = vmatpush1.msra.mxu0 %v647
    %1326 = vmatprep.subr.mxu0 %v654
    %1327 = vmatpush1.msra.mxu0 %v653
    %1328 = vmatprep.subr.mxu0 %v660
    %1329 = vmatpush1.msra.mxu0 %v659
    %1330 = vmatprep.subr.mxu0 %v666
    %1331 = vmatpush1.msra.mxu0 %v665
    %1332 = vmatprep.subr.mxu0 %v672
    %1333 = vmatpush1.msra.mxu0 %v671
    %1334 = vmatprep.subr.mxu0 %v678
    %1335 = vmatpush1.msra.mxu0 %v677
    %1336 = vmatprep.subr.mxu0 %v684
    %1337 = vmatpush1.msra.mxu0 %v683
    %1338 = vmatprep.subr.mxu0 %v690
    %1339 = vmatpush1.msra.mxu0 %v689
    %1340 = vmatprep.subr.mxu0 %v696
    %1341 = vmatpush1.msra.mxu0 %v695
    %1342 = vmatprep.subr.mxu0 %v702
    %1343 = vmatpush1.msra.mxu0 %v701
    %1344 = vmatprep.subr.mxu0 %v708
    %1345 = vmatpush1.msra.mxu0 %v707
    %1346 = vmatprep.subr.mxu0 %v714
    %1347 = vmatpush1.msra.mxu0 %v713
    %1348 = vmatprep.subr.mxu0 %v720
    %1349 = vmatpush1.msra.mxu0 %v719
    %1350 = vmatprep.subr.mxu0 %v726
    %1351 = vmatpush1.msra.mxu0 %v725
    %1352 = vmatprep.subr.mxu0 %v732
    %1353 = vmatpush1.msra.mxu0 %v731
    %1354 = vmatprep.mubr.f32.mxu0 %v1280
    %1355 = vmatmul.mubr.f32.gmra.mrb[0].mxu0 %v1279
    %v1356 = vpop.f32.mrb[0].mxu0
    %v1357 = vadd.f32 0.0, %v1356
    %v1358 = vpop.f32.mrb[0].mxu0
    %v1359 = vadd.f32 0.0, %v1358
    %1360 = vdwg.mxu0
    %1361 = vmatprep.subr.mxu0 %v548
    %1362 = vmatpush1.msra.mxu0 %v547
    %1363 = vmatprep.subr.mxu0 %v554
    %1364 = vmatpush1.msra.mxu0 %v553
    %1365 = vmatprep.subr.mxu0 %v560
    %1366 = vmatpush1.msra.mxu0 %v559
    %1367 = vmatprep.subr.mxu0 %v566
    %1368 = vmatpush1.msra.mxu0 %v565
    %1369 = vmatprep.subr.mxu0 %v572
    %1370 = vmatpush1.msra.mxu0 %v571
    %1371 = vmatprep.subr.mxu0 %v578
    %1372 = vmatpush1.msra.mxu0 %v577
    %1373 = vmatprep.subr.mxu0 %v584
    %1374 = vmatpush1.msra.mxu0 %v583
    %1375 = vmatprep.subr.mxu0 %v590
    %1376 = vmatpush1.msra.mxu0 %v589
    %1377 = vmatprep.subr.mxu0 %v596
    %1378 = vmatpush1.msra.mxu0 %v595
    %1379 = vmatprep.subr.mxu0 %v602
    %1380 = vmatpush1.msra.mxu0 %v601
    %1381 = vmatprep.subr.mxu0 %v608
    %1382 = vmatpush1.msra.mxu0 %v607
    %1383 = vmatprep.subr.mxu0 %v614
    %1384 = vmatpush1.msra.mxu0 %v613
    %1385 = vmatprep.subr.mxu0 %v620
    %1386 = vmatpush1.msra.mxu0 %v619
    %1387 = vmatprep.subr.mxu0 %v626
    %1388 = vmatpush1.msra.mxu0 %v625
    %1389 = vmatprep.subr.mxu0 %v632
    %1390 = vmatpush1.msra.mxu0 %v631
    %1391 = vmatprep.subr.mxu0 %v638
    %1392 = vmatpush1.msra.mxu0 %v637
    %1393 = vmatprep.subr.mxu0 %v644
    %1394 = vmatpush1.msra.mxu0 %v643
    %1395 = vmatprep.subr.mxu0 %v650
    %1396 = vmatpush1.msra.mxu0 %v649
    %1397 = vmatprep.subr.mxu0 %v656
    %1398 = vmatpush1.msra.mxu0 %v655
    %1399 = vmatprep.subr.mxu0 %v662
    %1400 = vmatpush1.msra.mxu0 %v661
    %1401 = vmatprep.subr.mxu0 %v668
    %1402 = vmatpush1.msra.mxu0 %v667
    %1403 = vmatprep.subr.mxu0 %v674
    %1404 = vmatpush1.msra.mxu0 %v673
    %1405 = vmatprep.subr.mxu0 %v680
    %1406 = vmatpush1.msra.mxu0 %v679
    %1407 = vmatprep.subr.mxu0 %v686
    %1408 = vmatpush1.msra.mxu0 %v685
    %1409 = vmatprep.subr.mxu0 %v692
    %1410 = vmatpush1.msra.mxu0 %v691
    %1411 = vmatprep.subr.mxu0 %v698
    %1412 = vmatpush1.msra.mxu0 %v697
    %1413 = vmatprep.subr.mxu0 %v704
    %1414 = vmatpush1.msra.mxu0 %v703
    %1415 = vmatprep.subr.mxu0 %v710
    %1416 = vmatpush1.msra.mxu0 %v709
    %1417 = vmatprep.subr.mxu0 %v716
    %1418 = vmatpush1.msra.mxu0 %v715
    %1419 = vmatprep.subr.mxu0 %v722
    %1420 = vmatpush1.msra.mxu0 %v721
    %1421 = vmatprep.subr.mxu0 %v728
    %1422 = vmatpush1.msra.mxu0 %v727
    %1423 = vmatprep.subr.mxu0 %v734
    %1424 = vmatpush1.msra.mxu0 %v733
    %1425 = vmatprep.mubr.f32.mxu0 %v1280
    %1426 = vmatmul.mubr.f32.gmra.mrb[0].mxu0 %v1279
    %v1427 = vpop.f32.mrb[0].mxu0
    %v1428 = vadd.f32 0.0, %v1427
    %v1429 = vpop.f32.mrb[0].mxu0
    %v1430 = vadd.f32 0.0, %v1429
    %1431 = vdwg.mxu0
    %1432 = vmatprep.subr.mxu0 %v550
    %1433 = vmatpush1.msra.mxu0 %v549
    %1434 = vmatprep.subr.mxu0 %v556
    %1435 = vmatpush1.msra.mxu0 %v555
    %1436 = vmatprep.subr.mxu0 %v562
    %1437 = vmatpush1.msra.mxu0 %v561
    %1438 = vmatprep.subr.mxu0 %v568
    %1439 = vmatpush1.msra.mxu0 %v567
    %1440 = vmatprep.subr.mxu0 %v574
    %1441 = vmatpush1.msra.mxu0 %v573
    %1442 = vmatprep.subr.mxu0 %v580
    %1443 = vmatpush1.msra.mxu0 %v579
    %1444 = vmatprep.subr.mxu0 %v586
    %1445 = vmatpush1.msra.mxu0 %v585
    %1446 = vmatprep.subr.mxu0 %v592
    %1447 = vmatpush1.msra.mxu0 %v591
    %1448 = vmatprep.subr.mxu0 %v598
    %1449 = vmatpush1.msra.mxu0 %v597
    %1450 = vmatprep.subr.mxu0 %v604
    %1451 = vmatpush1.msra.mxu0 %v603
    %1452 = vmatprep.subr.mxu0 %v610
    %1453 = vmatpush1.msra.mxu0 %v609
    %1454 = vmatprep.subr.mxu0 %v616
    %1455 = vmatpush1.msra.mxu0 %v615
    %1456 = vmatprep.subr.mxu0 %v622
    %1457 = vmatpush1.msra.mxu0 %v621
    %1458 = vmatprep.subr.mxu0 %v628
    %1459 = vmatpush1.msra.mxu0 %v627
    %1460 = vmatprep.subr.mxu0 %v634
    %1461 = vmatpush1.msra.mxu0 %v633
    %1462 = vmatprep.subr.mxu0 %v640
    %1463 = vmatpush1.msra.mxu0 %v639
    %1464 = vmatprep.subr.mxu0 %v646
    %1465 = vmatpush1.msra.mxu0 %v645
    %1466 = vmatprep.subr.mxu0 %v652
    %1467 = vmatpush1.msra.mxu0 %v651
    %1468 = vmatprep.subr.mxu0 %v658
    %1469 = vmatpush1.msra.mxu0 %v657
    %1470 = vmatprep.subr.mxu0 %v664
    %1471 = vmatpush1.msra.mxu0 %v663
    %1472 = vmatprep.subr.mxu0 %v670
    %1473 = vmatpush1.msra.mxu0 %v669
    %1474 = vmatprep.subr.mxu0 %v676
    %1475 = vmatpush1.msra.mxu0 %v675
    %1476 = vmatprep.subr.mxu0 %v682
    %1477 = vmatpush1.msra.mxu0 %v681
    %1478 = vmatprep.subr.mxu0 %v688
    %1479 = vmatpush1.msra.mxu0 %v687
    %1480 = vmatprep.subr.mxu0 %v694
    %1481 = vmatpush1.msra.mxu0 %v693
    %1482 = vmatprep.subr.mxu0 %v700
    %1483 = vmatpush1.msra.mxu0 %v699
    %1484 = vmatprep.subr.mxu0 %v706
    %1485 = vmatpush1.msra.mxu0 %v705
    %1486 = vmatprep.subr.mxu0 %v712
    %1487 = vmatpush1.msra.mxu0 %v711
    %1488 = vmatprep.subr.mxu0 %v718
    %1489 = vmatpush1.msra.mxu0 %v717
    %1490 = vmatprep.subr.mxu0 %v724
    %1491 = vmatpush1.msra.mxu0 %v723
    %1492 = vmatprep.subr.mxu0 %v730
    %1493 = vmatpush1.msra.mxu0 %v729
    %1494 = vmatprep.subr.mxu0 %v736
    %1495 = vmatpush1.msra.mxu0 %v735
    %1496 = vmatprep.mubr.f32.mxu0 %v1280
    %1497 = vmatmul.mubr.f32.gmra.mrb[0].mxu0 %v1279
    %v1498 = vpop.f32.mrb[0].mxu0
    %v1499 = vadd.f32 0.0, %v1498
    %v1500 = vpop.f32.mrb[0].mxu0
    %v1501 = vadd.f32 0.0, %v1500
    %1502 = vdwg.mxu0
    %v1503 = vadd.f32 %v1284, %v1357
    %v1504 = vadd.f32 %v1285, %v1359
    %v1505 = vxor.u32 %v1503, 2147483648
    %v1506 = vxor.u32 %v1504, 2147483648
    %v1507 = vmul.f32 %v1505, 1.442695
    %v1508 = vpow.pop %v1507
    %v1509 = vmul.f32 %v1506, 1.442695
    %v1510 = vpow.pop %v1509
    %v1511 = vadd.f32 %v1508, 1.0
    %v1512 = vadd.f32 %v1510, 1.0
    %v1513 = vrcp.pop %v1511
    %v1514 = vmul.f32 1.0, %v1513
    %v1515 = vrcp.pop %v1512
    %v1516 = vmul.f32 1.0, %v1515
    %v1517 = vadd.f32 %v1286, %v1428
    %v1518 = vadd.f32 %v1287, %v1430
    %v1519 = vxor.u32 %v1517, 2147483648
    %v1520 = vxor.u32 %v1518, 2147483648
    %v1521 = vmul.f32 %v1519, 1.442695
    %v1522 = vpow.pop %v1521
    %v1523 = vmul.f32 %v1520, 1.442695
    %v1524 = vpow.pop %v1523
    %v1525 = vadd.f32 %v1522, 1.0
    %v1526 = vadd.f32 %v1524, 1.0
    %v1527 = vrcp.pop %v1525
    %v1528 = vmul.f32 1.0, %v1527
    %v1529 = vrcp.pop %v1526
    %v1530 = vmul.f32 1.0, %v1529
    %v1531 = vadd.f32 %v1499, %v742
    %v1532 = vadd.f32 %v1501, %v746
    %v1533 = vmul.f32 %v1514, %v1531
    %v1534 = vmul.f32 %v1516, %v1532
    %v1535 = vadd.f32 %v1288, %v1533
    %v1536 = vadd.f32 %v1289, %v1534
    %v1537 = vtanh.pop %v1535
    %v1538 = vtanh.pop %v1536
    %v1539 = vsub.f32 1.0, %v1528
    %v1540 = vsub.f32 1.0, %v1530
    %v1541 = vmul.f32 %v1539, %v1537
    %v1542 = vmul.f32 %v1540, %v1538
    %v1543 = vmul.f32 %v1528, %v1279
    %v1544 = vmul.f32 %v1530, %v1280
    %v1545 = vadd.f32 %v1541, %v1543
    %v1546 = vadd.f32 %v1542, %v1544
    %s1547 = smul.u32 3, 6
    %s1548 = smul.addr %s1547, 8
    %s1549 = scalar_lea.vmem [#allocation2], %s1548
    %v1550 = vld [vmem:[%s1549] sm:$0xff]
    %v1551 = vld [vmem:[%s1549 + $0x8] sm:$0xff]
    %v1552 = vld [vmem:[%s1549 + $0x10] sm:$0xff]
    %v1553 = vld [vmem:[%s1549 + $0x18] sm:$0xff]
    %v1554 = vld [vmem:[%s1549 + $0x20] sm:$0xff]
    %v1555 = vld [vmem:[%s1549 + $0x28] sm:$0xff]
    %1556 = vmatprep.subr.mxu0 %v546
    %1557 = vmatpush1.msra.mxu0 %v545
    %1558 = vmatprep.subr.mxu0 %v552
    %1559 = vmatpush1.msra.mxu0 %v551
    %1560 = vmatprep.subr.mxu0 %v558
    %1561 = vmatpush1.msra.mxu0 %v557
    %1562 = vmatprep.subr.mxu0 %v564
    %1563 = vmatpush1.msra.mxu0 %v563
    %1564 = vmatprep.subr.mxu0 %v570
    %1565 = vmatpush1.msra.mxu0 %v569
    %1566 = vmatprep.subr.mxu0 %v576
    %1567 = vmatpush1.msra.mxu0 %v575
    %1568 = vmatprep.subr.mxu0 %v582
    %1569 = vmatpush1.msra.mxu0 %v581
    %1570 = vmatprep.subr.mxu0 %v588
    %1571 = vmatpush1.msra.mxu0 %v587
    %1572 = vmatprep.subr.mxu0 %v594
    %1573 = vmatpush1.msra.mxu0 %v593
    %1574 = vmatprep.subr.mxu0 %v600
    %1575 = vmatpush1.msra.mxu0 %v599
    %1576 = vmatprep.subr.mxu0 %v606
    %1577 = vmatpush1.msra.mxu0 %v605
    %1578 = vmatprep.subr.mxu0 %v612
    %1579 = vmatpush1.msra.mxu0 %v611
    %1580 = vmatprep.subr.mxu0 %v618
    %1581 = vmatpush1.msra.mxu0 %v617
    %1582 = vmatprep.subr.mxu0 %v624
    %1583 = vmatpush1.msra.mxu0 %v623
    %1584 = vmatprep.subr.mxu0 %v630
    %1585 = vmatpush1.msra.mxu0 %v629
    %1586 = vmatprep.subr.mxu0 %v636
    %1587 = vmatpush1.msra.mxu0 %v635
    %1588 = vmatprep.subr.mxu0 %v642
    %1589 = vmatpush1.msra.mxu0 %v641
    %1590 = vmatprep.subr.mxu0 %v648
    %1591 = vmatpush1.msra.mxu0 %v647
    %1592 = vmatprep.subr.mxu0 %v654
    %1593 = vmatpush1.msra.mxu0 %v653
    %1594 = vmatprep.subr.mxu0 %v660
    %1595 = vmatpush1.msra.mxu0 %v659
    %1596 = vmatprep.subr.mxu0 %v666
    %1597 = vmatpush1.msra.mxu0 %v665
    %1598 = vmatprep.subr.mxu0 %v672
    %1599 = vmatpush1.msra.mxu0 %v671
    %1600 = vmatprep.subr.mxu0 %v678
    %1601 = vmatpush1.msra.mxu0 %v677
    %1602 = vmatprep.subr.mxu0 %v684
    %1603 = vmatpush1.msra.mxu0 %v683
    %1604 = vmatprep.subr.mxu0 %v690
    %1605 = vmatpush1.msra.mxu0 %v689
    %1606 = vmatprep.subr.mxu0 %v696
    %1607 = vmatpush1.msra.mxu0 %v695
    %1608 = vmatprep.subr.mxu0 %v702
    %1609 = vmatpush1.msra.mxu0 %v701
    %1610 = vmatprep.subr.mxu0 %v708
    %1611 = vmatpush1.msra.mxu0 %v707
    %1612 = vmatprep.subr.mxu0 %v714
    %1613 = vmatpush1.msra.mxu0 %v713
    %1614 = vmatprep.subr.mxu0 %v720
    %1615 = vmatpush1.msra.mxu0 %v719
    %1616 = vmatprep.subr.mxu0 %v726
    %1617 = vmatpush1.msra.mxu0 %v725
    %1618 = vmatprep.subr.mxu0 %v732
    %1619 = vmatpush1.msra.mxu0 %v731
    %1620 = vmatprep.mubr.f32.mxu0 %v1546
    %1621 = vmatmul.mubr.f32.gmra.mrb[0].mxu0 %v1545
    %v1622 = vpop.f32.mrb[0].mxu0
    %v1623 = vadd.f32 0.0, %v1622
    %v1624 = vpop.f32.mrb[0].mxu0
    %v1625 = vadd.f32 0.0, %v1624
    %1626 = vdwg.mxu0
    %1627 = vmatprep.subr.mxu0 %v548
    %1628 = vmatpush1.msra.mxu0 %v547
    %1629 = vmatprep.subr.mxu0 %v554
    %1630 = vmatpush1.msra.mxu0 %v553
    %1631 = vmatprep.subr.mxu0 %v560
    %1632 = vmatpush1.msra.mxu0 %v559
    %1633 = vmatprep.subr.mxu0 %v566
    %1634 = vmatpush1.msra.mxu0 %v565
    %1635 = vmatprep.subr.mxu0 %v572
    %1636 = vmatpush1.msra.mxu0 %v571
    %1637 = vmatprep.subr.mxu0 %v578
    %1638 = vmatpush1.msra.mxu0 %v577
    %1639 = vmatprep.subr.mxu0 %v584
    %1640 = vmatpush1.msra.mxu0 %v583
    %1641 = vmatprep.subr.mxu0 %v590
    %1642 = vmatpush1.msra.mxu0 %v589
    %1643 = vmatprep.subr.mxu0 %v596
    %1644 = vmatpush1.msra.mxu0 %v595
    %1645 = vmatprep.subr.mxu0 %v602
    %1646 = vmatpush1.msra.mxu0 %v601
    %1647 = vmatprep.subr.mxu0 %v608
    %1648 = vmatpush1.msra.mxu0 %v607
    %1649 = vmatprep.subr.mxu0 %v614
    %1650 = vmatpush1.msra.mxu0 %v613
    %1651 = vmatprep.subr.mxu0 %v620
    %1652 = vmatpush1.msra.mxu0 %v619
    %1653 = vmatprep.subr.mxu0 %v626
    %1654 = vmatpush1.msra.mxu0 %v625
    %1655 = vmatprep.subr.mxu0 %v632
    %1656 = vmatpush1.msra.mxu0 %v631
    %1657 = vmatprep.subr.mxu0 %v638
    %1658 = vmatpush1.msra.mxu0 %v637
    %1659 = vmatprep.subr.mxu0 %v644
    %1660 = vmatpush1.msra.mxu0 %v643
    %1661 = vmatprep.subr.mxu0 %v650
    %1662 = vmatpush1.msra.mxu0 %v649
    %1663 = vmatprep.subr.mxu0 %v656
    %1664 = vmatpush1.msra.mxu0 %v655
    %1665 = vmatprep.subr.mxu0 %v662
    %1666 = vmatpush1.msra.mxu0 %v661
    %1667 = vmatprep.subr.mxu0 %v668
    %1668 = vmatpush1.msra.mxu0 %v667
    %1669 = vmatprep.subr.mxu0 %v674
    %1670 = vmatpush1.msra.mxu0 %v673
    %1671 = vmatprep.subr.mxu0 %v680
    %1672 = vmatpush1.msra.mxu0 %v679
    %1673 = vmatprep.subr.mxu0 %v686
    %1674 = vmatpush1.msra.mxu0 %v685
    %1675 = vmatprep.subr.mxu0 %v692
    %1676 = vmatpush1.msra.mxu0 %v691
    %1677 = vmatprep.subr.mxu0 %v698
    %1678 = vmatpush1.msra.mxu0 %v697
    %1679 = vmatprep.subr.mxu0 %v704
    %1680 = vmatpush1.msra.mxu0 %v703
    %1681 = vmatprep.subr.mxu0 %v710
    %1682 = vmatpush1.msra.mxu0 %v709
    %1683 = vmatprep.subr.mxu0 %v716
    %1684 = vmatpush1.msra.mxu0 %v715
    %1685 = vmatprep.subr.mxu0 %v722
    %1686 = vmatpush1.msra.mxu0 %v721
    %1687 = vmatprep.subr.mxu0 %v728
    %1688 = vmatpush1.msra.mxu0 %v727
    %1689 = vmatprep.subr.mxu0 %v734
    %1690 = vmatpush1.msra.mxu0 %v733
    %1691 = vmatprep.mubr.f32.mxu0 %v1546
    %1692 = vmatmul.mubr.f32.gmra.mrb[0].mxu0 %v1545
    %v1693 = vpop.f32.mrb[0].mxu0
    %v1694 = vadd.f32 0.0, %v1693
    %v1695 = vpop.f32.mrb[0].mxu0
    %v1696 = vadd.f32 0.0, %v1695
    %1697 = vdwg.mxu0
    %1698 = vmatprep.subr.mxu0 %v550
    %1699 = vmatpush1.msra.mxu0 %v549
    %1700 = vmatprep.subr.mxu0 %v556
    %1701 = vmatpush1.msra.mxu0 %v555
    %1702 = vmatprep.subr.mxu0 %v562
    %1703 = vmatpush1.msra.mxu0 %v561
    %1704 = vmatprep.subr.mxu0 %v568
    %1705 = vmatpush1.msra.mxu0 %v567
    %1706 = vmatprep.subr.mxu0 %v574
    %1707 = vmatpush1.msra.mxu0 %v573
    %1708 = vmatprep.subr.mxu0 %v580
    %1709 = vmatpush1.msra.mxu0 %v579
    %1710 = vmatprep.subr.mxu0 %v586
    %1711 = vmatpush1.msra.mxu0 %v585
    %1712 = vmatprep.subr.mxu0 %v592
    %1713 = vmatpush1.msra.mxu0 %v591
    %1714 = vmatprep.subr.mxu0 %v598
    %1715 = vmatpush1.msra.mxu0 %v597
    %1716 = vmatprep.subr.mxu0 %v604
    %1717 = vmatpush1.msra.mxu0 %v603
    %1718 = vmatprep.subr.mxu0 %v610
    %1719 = vmatpush1.msra.mxu0 %v609
    %1720 = vmatprep.subr.mxu0 %v616
    %1721 = vmatpush1.msra.mxu0 %v615
    %1722 = vmatprep.subr.mxu0 %v622
    %1723 = vmatpush1.msra.mxu0 %v621
    %1724 = vmatprep.subr.mxu0 %v628
    %1725 = vmatpush1.msra.mxu0 %v627
    %1726 = vmatprep.subr.mxu0 %v634
    %1727 = vmatpush1.msra.mxu0 %v633
    %1728 = vmatprep.subr.mxu0 %v640
    %1729 = vmatpush1.msra.mxu0 %v639
    %1730 = vmatprep.subr.mxu0 %v646
    %1731 = vmatpush1.msra.mxu0 %v645
    %1732 = vmatprep.subr.mxu0 %v652
    %1733 = vmatpush1.msra.mxu0 %v651
    %1734 = vmatprep.subr.mxu0 %v658
    %1735 = vmatpush1.msra.mxu0 %v657
    %1736 = vmatprep.subr.mxu0 %v664
    %1737 = vmatpush1.msra.mxu0 %v663
    %1738 = vmatprep.subr.mxu0 %v670
    %1739 = vmatpush1.msra.mxu0 %v669
    %1740 = vmatprep.subr.mxu0 %v676
    %1741 = vmatpush1.msra.mxu0 %v675
    %1742 = vmatprep.subr.mxu0 %v682
    %1743 = vmatpush1.msra.mxu0 %v681
    %1744 = vmatprep.subr.mxu0 %v688
    %1745 = vmatpush1.msra.mxu0 %v687
    %1746 = vmatprep.subr.mxu0 %v694
    %1747 = vmatpush1.msra.mxu0 %v693
    %1748 = vmatprep.subr.mxu0 %v700
    %1749 = vmatpush1.msra.mxu0 %v699
    %1750 = vmatprep.subr.mxu0 %v706
    %1751 = vmatpush1.msra.mxu0 %v705
    %1752 = vmatprep.subr.mxu0 %v712
    %1753 = vmatpush1.msra.mxu0 %v711
    %1754 = vmatprep.subr.mxu0 %v718
    %1755 = vmatpush1.msra.mxu0 %v717
    %1756 = vmatprep.subr.mxu0 %v724
    %1757 = vmatpush1.msra.mxu0 %v723
    %1758 = vmatprep.subr.mxu0 %v730
    %1759 = vmatpush1.msra.mxu0 %v729
    %1760 = vmatprep.subr.mxu0 %v736
    %1761 = vmatpush1.msra.mxu0 %v735
    %1762 = vmatprep.mubr.f32.mxu0 %v1546
    %1763 = vmatmul.mubr.f32.gmra.mrb[0].mxu0 %v1545
    %v1764 = vpop.f32.mrb[0].mxu0
    %v1765 = vadd.f32 0.0, %v1764
    %v1766 = vpop.f32.mrb[0].mxu0
    %v1767 = vadd.f32 0.0, %v1766
    %1768 = vdwg.mxu0
    %v1769 = vadd.f32 %v1550, %v1623
    %v1770 = vadd.f32 %v1551, %v1625
    %v1771 = vxor.u32 %v1769, 2147483648
    %v1772 = vxor.u32 %v1770, 2147483648
    %v1773 = vmul.f32 %v1771, 1.442695
    %v1774 = vpow.pop %v1773
    %v1775 = vmul.f32 %v1772, 1.442695
    %v1776 = vpow.pop %v1775
    %v1777 = vadd.f32 %v1774, 1.0
    %v1778 = vadd.f32 %v1776, 1.0
    %v1779 = vrcp.pop %v1777
    %v1780 = vmul.f32 1.0, %v1779
    %v1781 = vrcp.pop %v1778
    %v1782 = vmul.f32 1.0, %v1781
    %v1783 = vadd.f32 %v1552, %v1694
    %v1784 = vadd.f32 %v1553, %v1696
    %v1785 = vxor.u32 %v1783, 2147483648
    %v1786 = vxor.u32 %v1784, 2147483648
    %v1787 = vmul.f32 %v1785, 1.442695
    %v1788 = vpow.pop %v1787
    %v1789 = vmul.f32 %v1786, 1.442695
    %v1790 = vpow.pop %v1789
    %v1791 = vadd.f32 %v1788, 1.0
    %v1792 = vadd.f32 %v1790, 1.0
    %v1793 = vrcp.pop %v1791
    %v1794 = vmul.f32 1.0, %v1793
    %v1795 = vrcp.pop %v1792
    %v1796 = vmul.f32 1.0, %v1795
    %v1797 = vadd.f32 %v1765, %v742
    %v1798 = vadd.f32 %v1767, %v746
    %v1799 = vmul.f32 %v1780, %v1797
    %v1800 = vmul.f32 %v1782, %v1798
    %v1801 = vadd.f32 %v1554, %v1799
    %v1802 = vadd.f32 %v1555, %v1800
    %v1803 = vtanh.pop %v1801
    %v1804 = vtanh.pop %v1802
    %v1805 = vsub.f32 1.0, %v1794
    %v1806 = vsub.f32 1.0, %v1796
    %v1807 = vmul.f32 %v1805, %v1803
    %v1808 = vmul.f32 %v1806, %v1804
    %v1809 = vmul.f32 %v1794, %v1545
    %v1810 = vmul.f32 %v1796, %v1546
    %v1811 = vadd.f32 %v1807, %v1809
    %v1812 = vadd.f32 %v1808, %v1810
    %s1813 = smul.u32 4, 6
    %s1814 = smul.addr %s1813, 8
    %s1815 = scalar_lea.vmem [#allocation2], %s1814
    %v1816 = vld [vmem:[%s1815] sm:$0xff]
    %v1817 = vld [vmem:[%s1815 + $0x8] sm:$0xff]
    %v1818 = vld [vmem:[%s1815 + $0x10] sm:$0xff]
    %v1819 = vld [vmem:[%s1815 + $0x18] sm:$0xff]
    %v1820 = vld [vmem:[%s1815 + $0x20] sm:$0xff]
    %v1821 = vld [vmem:[%s1815 + $0x28] sm:$0xff]
    %1822 = vmatprep.subr.mxu0 %v546
    %1823 = vmatpush1.msra.mxu0 %v545
    %1824 = vmatprep.subr.mxu0 %v552
    %1825 = vmatpush1.msra.mxu0 %v551
    %1826 = vmatprep.subr.mxu0 %v558
    %1827 = vmatpush1.msra.mxu0 %v557
    %1828 = vmatprep.subr.mxu0 %v564
    %1829 = vmatpush1.msra.mxu0 %v563
    %1830 = vmatprep.subr.mxu0 %v570
    %1831 = vmatpush1.msra.mxu0 %v569
    %1832 = vmatprep.subr.mxu0 %v576
    %1833 = vmatpush1.msra.mxu0 %v575
    %1834 = vmatprep.subr.mxu0 %v582
    %1835 = vmatpush1.msra.mxu0 %v581
    %1836 = vmatprep.subr.mxu0 %v588
    %1837 = vmatpush1.msra.mxu0 %v587
    %1838 = vmatprep.subr.mxu0 %v594
    %1839 = vmatpush1.msra.mxu0 %v593
    %1840 = vmatprep.subr.mxu0 %v600
    %1841 = vmatpush1.msra.mxu0 %v599
    %1842 = vmatprep.subr.mxu0 %v606
    %1843 = vmatpush1.msra.mxu0 %v605
    %1844 = vmatprep.subr.mxu0 %v612
    %1845 = vmatpush1.msra.mxu0 %v611
    %1846 = vmatprep.subr.mxu0 %v618
    %1847 = vmatpush1.msra.mxu0 %v617
    %1848 = vmatprep.subr.mxu0 %v624
    %1849 = vmatpush1.msra.mxu0 %v623
    %1850 = vmatprep.subr.mxu0 %v630
    %1851 = vmatpush1.msra.mxu0 %v629
    %1852 = vmatprep.subr.mxu0 %v636
    %1853 = vmatpush1.msra.mxu0 %v635
    %1854 = vmatprep.subr.mxu0 %v642
    %1855 = vmatpush1.msra.mxu0 %v641
    %1856 = vmatprep.subr.mxu0 %v648
    %1857 = vmatpush1.msra.mxu0 %v647
    %1858 = vmatprep.subr.mxu0 %v654
    %1859 = vmatpush1.msra.mxu0 %v653
    %1860 = vmatprep.subr.mxu0 %v660
    %1861 = vmatpush1.msra.mxu0 %v659
    %1862 = vmatprep.subr.mxu0 %v666
    %1863 = vmatpush1.msra.mxu0 %v665
    %1864 = vmatprep.subr.mxu0 %v672
    %1865 = vmatpush1.msra.mxu0 %v671
    %1866 = vmatprep.subr.mxu0 %v678
    %1867 = vmatpush1.msra.mxu0 %v677
    %1868 = vmatprep.subr.mxu0 %v684
    %1869 = vmatpush1.msra.mxu0 %v683
    %1870 = vmatprep.subr.mxu0 %v690
    %1871 = vmatpush1.msra.mxu0 %v689
    %1872 = vmatprep.subr.mxu0 %v696
    %1873 = vmatpush1.msra.mxu0 %v695
    %1874 = vmatprep.subr.mxu0 %v702
    %1875 = vmatpush1.msra.mxu0 %v701
    %1876 = vmatprep.subr.mxu0 %v708
    %1877 = vmatpush1.msra.mxu0 %v707
    %1878 = vmatprep.subr.mxu0 %v714
    %1879 = vmatpush1.msra.mxu0 %v713
    %1880 = vmatprep.subr.mxu0 %v720
    %1881 = vmatpush1.msra.mxu0 %v719
    %1882 = vmatprep.subr.mxu0 %v726
    %1883 = vmatpush1.msra.mxu0 %v725
    %1884 = vmatprep.subr.mxu0 %v732
    %1885 = vmatpush1.msra.mxu0 %v731
    %1886 = vmatprep.mubr.f32.mxu0 %v1812
    %1887 = vmatmul.mubr.f32.gmra.mrb[0].mxu0 %v1811
    %v1888 = vpop.f32.mrb[0].mxu0
    %v1889 = vadd.f32 0.0, %v1888
    %v1890 = vpop.f32.mrb[0].mxu0
    %v1891 = vadd.f32 0.0, %v1890
    %1892 = vdwg.mxu0
    %1893 = vmatprep.subr.mxu0 %v548
    %1894 = vmatpush1.msra.mxu0 %v547
    %1895 = vmatprep.subr.mxu0 %v554
    %1896 = vmatpush1.msra.mxu0 %v553
    %1897 = vmatprep.subr.mxu0 %v560
    %1898 = vmatpush1.msra.mxu0 %v559
    %1899 = vmatprep.subr.mxu0 %v566
    %1900 = vmatpush1.msra.mxu0 %v565
    %1901 = vmatprep.subr.mxu0 %v572
    %1902 = vmatpush1.msra.mxu0 %v571
    %1903 = vmatprep.subr.mxu0 %v578
    %1904 = vmatpush1.msra.mxu0 %v577
    %1905 = vmatprep.subr.mxu0 %v584
    %1906 = vmatpush1.msra.mxu0 %v583
    %1907 = vmatprep.subr.mxu0 %v590
    %1908 = vmatpush1.msra.mxu0 %v589
    %1909 = vmatprep.subr.mxu0 %v596
    %1910 = vmatpush1.msra.mxu0 %v595
    %1911 = vmatprep.subr.mxu0 %v602
    %1912 = vmatpush1.msra.mxu0 %v601
    %1913 = vmatprep.subr.mxu0 %v608
    %1914 = vmatpush1.msra.mxu0 %v607
    %1915 = vmatprep.subr.mxu0 %v614
    %1916 = vmatpush1.msra.mxu0 %v613
    %1917 = vmatprep.subr.mxu0 %v620
    %1918 = vmatpush1.msra.mxu0 %v619
    %1919 = vmatprep.subr.mxu0 %v626
    %1920 = vmatpush1.msra.mxu0 %v625
    %1921 = vmatprep.subr.mxu0 %v632
    %1922 = vmatpush1.msra.mxu0 %v631
    %1923 = vmatprep.subr.mxu0 %v638
    %1924 = vmatpush1.msra.mxu0 %v637
    %1925 = vmatprep.subr.mxu0 %v644
    %1926 = vmatpush1.msra.mxu0 %v643
    %1927 = vmatprep.subr.mxu0 %v650
    %1928 = vmatpush1.msra.mxu0 %v649
    %1929 = vmatprep.subr.mxu0 %v656
    %1930 = vmatpush1.msra.mxu0 %v655
    %1931 = vmatprep.subr.mxu0 %v662
    %1932 = vmatpush1.msra.mxu0 %v661
    %1933 = vmatprep.subr.mxu0 %v668
    %1934 = vmatpush1.msra.mxu0 %v667
    %1935 = vmatprep.subr.mxu0 %v674
    %1936 = vmatpush1.msra.mxu0 %v673
    %1937 = vmatprep.subr.mxu0 %v680
    %1938 = vmatpush1.msra.mxu0 %v679
    %1939 = vmatprep.subr.mxu0 %v686
    %1940 = vmatpush1.msra.mxu0 %v685
    %1941 = vmatprep.subr.mxu0 %v692
    %1942 = vmatpush1.msra.mxu0 %v691
    %1943 = vmatprep.subr.mxu0 %v698
    %1944 = vmatpush1.msra.mxu0 %v697
    %1945 = vmatprep.subr.mxu0 %v704
    %1946 = vmatpush1.msra.mxu0 %v703
    %1947 = vmatprep.subr.mxu0 %v710
    %1948 = vmatpush1.msra.mxu0 %v709
    %1949 = vmatprep.subr.mxu0 %v716
    %1950 = vmatpush1.msra.mxu0 %v715
    %1951 = vmatprep.subr.mxu0 %v722
    %1952 = vmatpush1.msra.mxu0 %v721
    %1953 = vmatprep.subr.mxu0 %v728
    %1954 = vmatpush1.msra.mxu0 %v727
    %1955 = vmatprep.subr.mxu0 %v734
    %1956 = vmatpush1.msra.mxu0 %v733
    %1957 = vmatprep.mubr.f32.mxu0 %v1812
    %1958 = vmatmul.mubr.f32.gmra.mrb[0].mxu0 %v1811
    %v1959 = vpop.f32.mrb[0].mxu0
    %v1960 = vadd.f32 0.0, %v1959
    %v1961 = vpop.f32.mrb[0].mxu0
    %v1962 = vadd.f32 0.0, %v1961
    %1963 = vdwg.mxu0
    %1964 = vmatprep.subr.mxu0 %v550
    %1965 = vmatpush1.msra.mxu0 %v549
    %1966 = vmatprep.subr.mxu0 %v556
    %1967 = vmatpush1.msra.mxu0 %v555
    %1968 = vmatprep.subr.mxu0 %v562
    %1969 = vmatpush1.msra.mxu0 %v561
    %1970 = vmatprep.subr.mxu0 %v568
    %1971 = vmatpush1.msra.mxu0 %v567
    %1972 = vmatprep.subr.mxu0 %v574
    %1973 = vmatpush1.msra.mxu0 %v573
    %1974 = vmatprep.subr.mxu0 %v580
    %1975 = vmatpush1.msra.mxu0 %v579
    %1976 = vmatprep.subr.mxu0 %v586
    %1977 = vmatpush1.msra.mxu0 %v585
    %1978 = vmatprep.subr.mxu0 %v592
    %1979 = vmatpush1.msra.mxu0 %v591
    %1980 = vmatprep.subr.mxu0 %v598
    %1981 = vmatpush1.msra.mxu0 %v597
    %1982 = vmatprep.subr.mxu0 %v604
    %1983 = vmatpush1.msra.mxu0 %v603
    %1984 = vmatprep.subr.mxu0 %v610
    %1985 = vmatpush1.msra.mxu0 %v609
    %1986 = vmatprep.subr.mxu0 %v616
    %1987 = vmatpush1.msra.mxu0 %v615
    %1988 = vmatprep.subr.mxu0 %v622
    %1989 = vmatpush1.msra.mxu0 %v621
    %1990 = vmatprep.subr.mxu0 %v628
    %1991 = vmatpush1.msra.mxu0 %v627
    %1992 = vmatprep.subr.mxu0 %v634
    %1993 = vmatpush1.msra.mxu0 %v633
    %1994 = vmatprep.subr.mxu0 %v640
    %1995 = vmatpush1.msra.mxu0 %v639
    %1996 = vmatprep.subr.mxu0 %v646
    %1997 = vmatpush1.msra.mxu0 %v645
    %1998 = vmatprep.subr.mxu0 %v652
    %1999 = vmatpush1.msra.mxu0 %v651
    %2000 = vmatprep.subr.mxu0 %v658
    %2001 = vmatpush1.msra.mxu0 %v657
    %2002 = vmatprep.subr.mxu0 %v664
    %2003 = vmatpush1.msra.mxu0 %v663
    %2004 = vmatprep.subr.mxu0 %v670
    %2005 = vmatpush1.msra.mxu0 %v669
    %2006 = vmatprep.subr.mxu0 %v676
    %2007 = vmatpush1.msra.mxu0 %v675
    %2008 = vmatprep.subr.mxu0 %v682
    %2009 = vmatpush1.msra.mxu0 %v681
    %2010 = vmatprep.subr.mxu0 %v688
    %2011 = vmatpush1.msra.mxu0 %v687
    %2012 = vmatprep.subr.mxu0 %v694
    %2013 = vmatpush1.msra.mxu0 %v693
    %2014 = vmatprep.subr.mxu0 %v700
    %2015 = vmatpush1.msra.mxu0 %v699
    %2016 = vmatprep.subr.mxu0 %v706
    %2017 = vmatpush1.msra.mxu0 %v705
    %2018 = vmatprep.subr.mxu0 %v712
    %2019 = vmatpush1.msra.mxu0 %v711
    %2020 = vmatprep.subr.mxu0 %v718
    %2021 = vmatpush1.msra.mxu0 %v717
    %2022 = vmatprep.subr.mxu0 %v724
    %2023 = vmatpush1.msra.mxu0 %v723
    %2024 = vmatprep.subr.mxu0 %v730
    %2025 = vmatpush1.msra.mxu0 %v729
    %2026 = vmatprep.subr.mxu0 %v736
    %2027 = vmatpush1.msra.mxu0 %v735
    %2028 = vmatprep.mubr.f32.mxu0 %v1812
    %2029 = vmatmul.mubr.f32.gmra.mrb[0].mxu0 %v1811
    %v2030 = vpop.f32.mrb[0].mxu0
    %v2031 = vadd.f32 0.0, %v2030
    %v2032 = vpop.f32.mrb[0].mxu0
    %v2033 = vadd.f32 0.0, %v2032
    %2034 = vdwg.mxu0
    %v2035 = vadd.f32 %v1816, %v1889
    %v2036 = vadd.f32 %v1817, %v1891
    %v2037 = vxor.u32 %v2035, 2147483648
    %v2038 = vxor.u32 %v2036, 2147483648
    %v2039 = vmul.f32 %v2037, 1.442695
    %v2040 = vpow.pop %v2039
    %v2041 = vmul.f32 %v2038, 1.442695
    %v2042 = vpow.pop %v2041
    %v2043 = vadd.f32 %v2040, 1.0
    %v2044 = vadd.f32 %v2042, 1.0
    %v2045 = vrcp.pop %v2043
    %v2046 = vmul.f32 1.0, %v2045
    %v2047 = vrcp.pop %v2044
    %v2048 = vmul.f32 1.0, %v2047
    %v2049 = vadd.f32 %v1818, %v1960
    %v2050 = vadd.f32 %v1819, %v1962
    %v2051 = vxor.u32 %v2049, 2147483648
    %v2052 = vxor.u32 %v2050, 2147483648
    %v2053 = vmul.f32 %v2051, 1.442695
    %v2054 = vpow.pop %v2053
    %v2055 = vmul.f32 %v2052, 1.442695
    %v2056 = vpow.pop %v2055
    %v2057 = vadd.f32 %v2054, 1.0
    %v2058 = vadd.f32 %v2056, 1.0
    %v2059 = vrcp.pop %v2057
    %v2060 = vmul.f32 1.0, %v2059
    %v2061 = vrcp.pop %v2058
    %v2062 = vmul.f32 1.0, %v2061
    %v2063 = vadd.f32 %v2031, %v742
    %v2064 = vadd.f32 %v2033, %v746
    %v2065 = vmul.f32 %v2046, %v2063
    %v2066 = vmul.f32 %v2048, %v2064
    %v2067 = vadd.f32 %v1820, %v2065
    %v2068 = vadd.f32 %v1821, %v2066
    %v2069 = vtanh.pop %v2067
    %v2070 = vtanh.pop %v2068
    %v2071 = vsub.f32 1.0, %v2060
    %v2072 = vsub.f32 1.0, %v2062
    %v2073 = vmul.f32 %v2071, %v2069
    %v2074 = vmul.f32 %v2072, %v2070
    %v2075 = vmul.f32 %v2060, %v1811
    %v2076 = vmul.f32 %v2062, %v1812
    %v2077 = vadd.f32 %v2073, %v2075
    %v2078 = vadd.f32 %v2074, %v2076
    %s2079 = smul.u32 5, 6
    %s2080 = smul.addr %s2079, 8
    %s2081 = scalar_lea.vmem [#allocation2], %s2080
    %v2082 = vld [vmem:[%s2081] sm:$0xff]
    %v2083 = vld [vmem:[%s2081 + $0x8] sm:$0xff]
    %v2084 = vld [vmem:[%s2081 + $0x10] sm:$0xff]
    %v2085 = vld [vmem:[%s2081 + $0x18] sm:$0xff]
    %v2086 = vld [vmem:[%s2081 + $0x20] sm:$0xff]
    %v2087 = vld [vmem:[%s2081 + $0x28] sm:$0xff]
    %2088 = vmatprep.subr.mxu0 %v546
    %2089 = vmatpush1.msra.mxu0 %v545
    %2090 = vmatprep.subr.mxu0 %v552
    %2091 = vmatpush1.msra.mxu0 %v551
    %2092 = vmatprep.subr.mxu0 %v558
    %2093 = vmatpush1.msra.mxu0 %v557
    %2094 = vmatprep.subr.mxu0 %v564
    %2095 = vmatpush1.msra.mxu0 %v563
    %2096 = vmatprep.subr.mxu0 %v570
    %2097 = vmatpush1.msra.mxu0 %v569
    %2098 = vmatprep.subr.mxu0 %v576
    %2099 = vmatpush1.msra.mxu0 %v575
    %2100 = vmatprep.subr.mxu0 %v582
    %2101 = vmatpush1.msra.mxu0 %v581
    %2102 = vmatprep.subr.mxu0 %v588
    %2103 = vmatpush1.msra.mxu0 %v587
    %2104 = vmatprep.subr.mxu0 %v594
    %2105 = vmatpush1.msra.mxu0 %v593
    %2106 = vmatprep.subr.mxu0 %v600
    %2107 = vmatpush1.msra.mxu0 %v599
    %2108 = vmatprep.subr.mxu0 %v606
    %2109 = vmatpush1.msra.mxu0 %v605
    %2110 = vmatprep.subr.mxu0 %v612
    %2111 = vmatpush1.msra.mxu0 %v611
    %2112 = vmatprep.subr.mxu0 %v618
    %2113 = vmatpush1.msra.mxu0 %v617
    %2114 = vmatprep.subr.mxu0 %v624
    %2115 = vmatpush1.msra.mxu0 %v623
    %2116 = vmatprep.subr.mxu0 %v630
    %2117 = vmatpush1.msra.mxu0 %v629
    %2118 = vmatprep.subr.mxu0 %v636
    %2119 = vmatpush1.msra.mxu0 %v635
    %2120 = vmatprep.subr.mxu0 %v642
    %2121 = vmatpush1.msra.mxu0 %v641
    %2122 = vmatprep.subr.mxu0 %v648
    %2123 = vmatpush1.msra.mxu0 %v647
    %2124 = vmatprep.subr.mxu0 %v654
    %2125 = vmatpush1.msra.mxu0 %v653
    %2126 = vmatprep.subr.mxu0 %v660
    %2127 = vmatpush1.msra.mxu0 %v659
    %2128 = vmatprep.subr.mxu0 %v666
    %2129 = vmatpush1.msra.mxu0 %v665
    %2130 = vmatprep.subr.mxu0 %v672
    %2131 = vmatpush1.msra.mxu0 %v671
    %2132 = vmatprep.subr.mxu0 %v678
    %2133 = vmatpush1.msra.mxu0 %v677
    %2134 = vmatprep.subr.mxu0 %v684
    %2135 = vmatpush1.msra.mxu0 %v683
    %2136 = vmatprep.subr.mxu0 %v690
    %2137 = vmatpush1.msra.mxu0 %v689
    %2138 = vmatprep.subr.mxu0 %v696
    %2139 = vmatpush1.msra.mxu0 %v695
    %2140 = vmatprep.subr.mxu0 %v702
    %2141 = vmatpush1.msra.mxu0 %v701
    %2142 = vmatprep.subr.mxu0 %v708
    %2143 = vmatpush1.msra.mxu0 %v707
    %2144 = vmatprep.subr.mxu0 %v714
    %2145 = vmatpush1.msra.mxu0 %v713
    %2146 = vmatprep.subr.mxu0 %v720
    %2147 = vmatpush1.msra.mxu0 %v719
    %2148 = vmatprep.subr.mxu0 %v726
    %2149 = vmatpush1.msra.mxu0 %v725
    %2150 = vmatprep.subr.mxu0 %v732
    %2151 = vmatpush1.msra.mxu0 %v731
    %2152 = vmatprep.mubr.f32.mxu0 %v2078
    %2153 = vmatmul.mubr.f32.gmra.mrb[0].mxu0 %v2077
    %v2154 = vpop.f32.mrb[0].mxu0
    %v2155 = vadd.f32 0.0, %v2154
    %v2156 = vpop.f32.mrb[0].mxu0
    %v2157 = vadd.f32 0.0, %v2156
    %2158 = vdwg.mxu0
    %2159 = vmatprep.subr.mxu0 %v548
    %2160 = vmatpush1.msra.mxu0 %v547
    %2161 = vmatprep.subr.mxu0 %v554
    %2162 = vmatpush1.msra.mxu0 %v553
    %2163 = vmatprep.subr.mxu0 %v560
    %2164 = vmatpush1.msra.mxu0 %v559
    %2165 = vmatprep.subr.mxu0 %v566
    %2166 = vmatpush1.msra.mxu0 %v565
    %2167 = vmatprep.subr.mxu0 %v572
    %2168 = vmatpush1.msra.mxu0 %v571
    %2169 = vmatprep.subr.mxu0 %v578
    %2170 = vmatpush1.msra.mxu0 %v577
    %2171 = vmatprep.subr.mxu0 %v584
    %2172 = vmatpush1.msra.mxu0 %v583
    %2173 = vmatprep.subr.mxu0 %v590
    %2174 = vmatpush1.msra.mxu0 %v589
    %2175 = vmatprep.subr.mxu0 %v596
    %2176 = vmatpush1.msra.mxu0 %v595
    %2177 = vmatprep.subr.mxu0 %v602
    %2178 = vmatpush1.msra.mxu0 %v601
    %2179 = vmatprep.subr.mxu0 %v608
    %2180 = vmatpush1.msra.mxu0 %v607
    %2181 = vmatprep.subr.mxu0 %v614
    %2182 = vmatpush1.msra.mxu0 %v613
    %2183 = vmatprep.subr.mxu0 %v620
    %2184 = vmatpush1.msra.mxu0 %v619
    %2185 = vmatprep.subr.mxu0 %v626
    %2186 = vmatpush1.msra.mxu0 %v625
    %2187 = vmatprep.subr.mxu0 %v632
    %2188 = vmatpush1.msra.mxu0 %v631
    %2189 = vmatprep.subr.mxu0 %v638
    %2190 = vmatpush1.msra.mxu0 %v637
    %2191 = vmatprep.subr.mxu0 %v644
    %2192 = vmatpush1.msra.mxu0 %v643
    %2193 = vmatprep.subr.mxu0 %v650
    %2194 = vmatpush1.msra.mxu0 %v649
    %2195 = vmatprep.subr.mxu0 %v656
    %2196 = vmatpush1.msra.mxu0 %v655
    %2197 = vmatprep.subr.mxu0 %v662
    %2198 = vmatpush1.msra.mxu0 %v661
    %2199 = vmatprep.subr.mxu0 %v668
    %2200 = vmatpush1.msra.mxu0 %v667
    %2201 = vmatprep.subr.mxu0 %v674
    %2202 = vmatpush1.msra.mxu0 %v673
    %2203 = vmatprep.subr.mxu0 %v680
    %2204 = vmatpush1.msra.mxu0 %v679
    %2205 = vmatprep.subr.mxu0 %v686
    %2206 = vmatpush1.msra.mxu0 %v685
    %2207 = vmatprep.subr.mxu0 %v692
    %2208 = vmatpush1.msra.mxu0 %v691
    %2209 = vmatprep.subr.mxu0 %v698
    %2210 = vmatpush1.msra.mxu0 %v697
    %2211 = vmatprep.subr.mxu0 %v704
    %2212 = vmatpush1.msra.mxu0 %v703
    %2213 = vmatprep.subr.mxu0 %v710
    %2214 = vmatpush1.msra.mxu0 %v709
    %2215 = vmatprep.subr.mxu0 %v716
    %2216 = vmatpush1.msra.mxu0 %v715
    %2217 = vmatprep.subr.mxu0 %v722
    %2218 = vmatpush1.msra.mxu0 %v721
    %2219 = vmatprep.subr.mxu0 %v728
    %2220 = vmatpush1.msra.mxu0 %v727
    %2221 = vmatprep.subr.mxu0 %v734
    %2222 = vmatpush1.msra.mxu0 %v733
    %2223 = vmatprep.mubr.f32.mxu0 %v2078
    %2224 = vmatmul.mubr.f32.gmra.mrb[0].mxu0 %v2077
    %v2225 = vpop.f32.mrb[0].mxu0
    %v2226 = vadd.f32 0.0, %v2225
    %v2227 = vpop.f32.mrb[0].mxu0
    %v2228 = vadd.f32 0.0, %v2227
    %2229 = vdwg.mxu0
    %2230 = vmatprep.subr.mxu0 %v550
    %2231 = vmatpush1.msra.mxu0 %v549
    %2232 = vmatprep.subr.mxu0 %v556
    %2233 = vmatpush1.msra.mxu0 %v555
    %2234 = vmatprep.subr.mxu0 %v562
    %2235 = vmatpush1.msra.mxu0 %v561
    %2236 = vmatprep.subr.mxu0 %v568
    %2237 = vmatpush1.msra.mxu0 %v567
    %2238 = vmatprep.subr.mxu0 %v574
    %2239 = vmatpush1.msra.mxu0 %v573
    %2240 = vmatprep.subr.mxu0 %v580
    %2241 = vmatpush1.msra.mxu0 %v579
    %2242 = vmatprep.subr.mxu0 %v586
    %2243 = vmatpush1.msra.mxu0 %v585
    %2244 = vmatprep.subr.mxu0 %v592
    %2245 = vmatpush1.msra.mxu0 %v591
    %2246 = vmatprep.subr.mxu0 %v598
    %2247 = vmatpush1.msra.mxu0 %v597
    %2248 = vmatprep.subr.mxu0 %v604
    %2249 = vmatpush1.msra.mxu0 %v603
    %2250 = vmatprep.subr.mxu0 %v610
    %2251 = vmatpush1.msra.mxu0 %v609
    %2252 = vmatprep.subr.mxu0 %v616
    %2253 = vmatpush1.msra.mxu0 %v615
    %2254 = vmatprep.subr.mxu0 %v622
    %2255 = vmatpush1.msra.mxu0 %v621
    %2256 = vmatprep.subr.mxu0 %v628
    %2257 = vmatpush1.msra.mxu0 %v627
    %2258 = vmatprep.subr.mxu0 %v634
    %2259 = vmatpush1.msra.mxu0 %v633
    %2260 = vmatprep.subr.mxu0 %v640
    %2261 = vmatpush1.msra.mxu0 %v639
    %2262 = vmatprep.subr.mxu0 %v646
    %2263 = vmatpush1.msra.mxu0 %v645
    %2264 = vmatprep.subr.mxu0 %v652
    %2265 = vmatpush1.msra.mxu0 %v651
    %2266 = vmatprep.subr.mxu0 %v658
    %2267 = vmatpush1.msra.mxu0 %v657
    %2268 = vmatprep.subr.mxu0 %v664
    %2269 = vmatpush1.msra.mxu0 %v663
    %2270 = vmatprep.subr.mxu0 %v670
    %2271 = vmatpush1.msra.mxu0 %v669
    %2272 = vmatprep.subr.mxu0 %v676
    %2273 = vmatpush1.msra.mxu0 %v675
    %2274 = vmatprep.subr.mxu0 %v682
    %2275 = vmatpush1.msra.mxu0 %v681
    %2276 = vmatprep.subr.mxu0 %v688
    %2277 = vmatpush1.msra.mxu0 %v687
    %2278 = vmatprep.subr.mxu0 %v694
    %2279 = vmatpush1.msra.mxu0 %v693
    %2280 = vmatprep.subr.mxu0 %v700
    %2281 = vmatpush1.msra.mxu0 %v699
    %2282 = vmatprep.subr.mxu0 %v706
    %2283 = vmatpush1.msra.mxu0 %v705
    %2284 = vmatprep.subr.mxu0 %v712
    %2285 = vmatpush1.msra.mxu0 %v711
    %2286 = vmatprep.subr.mxu0 %v718
    %2287 = vmatpush1.msra.mxu0 %v717
    %2288 = vmatprep.subr.mxu0 %v724
    %2289 = vmatpush1.msra.mxu0 %v723
    %2290 = vmatprep.subr.mxu0 %v730
    %2291 = vmatpush1.msra.mxu0 %v729
    %2292 = vmatprep.subr.mxu0 %v736
    %2293 = vmatpush1.msra.mxu0 %v735
    %2294 = vmatprep.mubr.f32.mxu0 %v2078
    %2295 = vmatmul.mubr.f32.gmra.mrb[0].mxu0 %v2077
    %v2296 = vpop.f32.mrb[0].mxu0
    %v2297 = vadd.f32 0.0, %v2296
    %v2298 = vpop.f32.mrb[0].mxu0
    %v2299 = vadd.f32 0.0, %v2298
    %2300 = vdwg.mxu0
    %v2301 = vadd.f32 %v2082, %v2155
    %v2302 = vadd.f32 %v2083, %v2157
    %v2303 = vxor.u32 %v2301, 2147483648
    %v2304 = vxor.u32 %v2302, 2147483648
    %v2305 = vmul.f32 %v2303, 1.442695
    %v2306 = vpow.pop %v2305
    %v2307 = vmul.f32 %v2304, 1.442695
    %v2308 = vpow.pop %v2307
    %v2309 = vadd.f32 %v2306, 1.0
    %v2310 = vadd.f32 %v2308, 1.0
    %v2311 = vrcp.pop %v2309
    %v2312 = vmul.f32 1.0, %v2311
    %v2313 = vrcp.pop %v2310
    %v2314 = vmul.f32 1.0, %v2313
    %v2315 = vadd.f32 %v2084, %v2226
    %v2316 = vadd.f32 %v2085, %v2228
    %v2317 = vxor.u32 %v2315, 2147483648
    %v2318 = vxor.u32 %v2316, 2147483648
    %v2319 = vmul.f32 %v2317, 1.442695
    %v2320 = vpow.pop %v2319
    %v2321 = vmul.f32 %v2318, 1.442695
    %v2322 = vpow.pop %v2321
    %v2323 = vadd.f32 %v2320, 1.0
    %v2324 = vadd.f32 %v2322, 1.0
    %v2325 = vrcp.pop %v2323
    %v2326 = vmul.f32 1.0, %v2325
    %v2327 = vrcp.pop %v2324
    %v2328 = vmul.f32 1.0, %v2327
    %v2329 = vadd.f32 %v2297, %v742
    %v2330 = vadd.f32 %v2299, %v746
    %v2331 = vmul.f32 %v2312, %v2329
    %v2332 = vmul.f32 %v2314, %v2330
    %v2333 = vadd.f32 %v2086, %v2331
    %v2334 = vadd.f32 %v2087, %v2332
    %v2335 = vtanh.pop %v2333
    %v2336 = vtanh.pop %v2334
    %v2337 = vsub.f32 1.0, %v2326
    %v2338 = vsub.f32 1.0, %v2328
    %v2339 = vmul.f32 %v2337, %v2335
    %v2340 = vmul.f32 %v2338, %v2336
    %v2341 = vmul.f32 %v2326, %v2077
    %v2342 = vmul.f32 %v2328, %v2078
    %v2343 = vadd.f32 %v2339, %v2341
    %v2344 = vadd.f32 %v2340, %v2342
    %s2345 = smul.u32 6, 6
    %s2346 = smul.addr %s2345, 8
    %s2347 = scalar_lea.vmem [#allocation2], %s2346
    %v2348 = vld [vmem:[%s2347] sm:$0xff]
    %v2349 = vld [vmem:[%s2347 + $0x8] sm:$0xff]
    %v2350 = vld [vmem:[%s2347 + $0x10] sm:$0xff]
    %v2351 = vld [vmem:[%s2347 + $0x18] sm:$0xff]
    %v2352 = vld [vmem:[%s2347 + $0x20] sm:$0xff]
    %v2353 = vld [vmem:[%s2347 + $0x28] sm:$0xff]
    %2354 = vmatprep.subr.mxu0 %v546
    %2355 = vmatpush1.msra.mxu0 %v545
    %2356 = vmatprep.subr.mxu0 %v552
    %2357 = vmatpush1.msra.mxu0 %v551
    %2358 = vmatprep.subr.mxu0 %v558
    %2359 = vmatpush1.msra.mxu0 %v557
    %2360 = vmatprep.subr.mxu0 %v564
    %2361 = vmatpush1.msra.mxu0 %v563
    %2362 = vmatprep.subr.mxu0 %v570
    %2363 = vmatpush1.msra.mxu0 %v569
    %2364 = vmatprep.subr.mxu0 %v576
    %2365 = vmatpush1.msra.mxu0 %v575
    %2366 = vmatprep.subr.mxu0 %v582
    %2367 = vmatpush1.msra.mxu0 %v581
    %2368 = vmatprep.subr.mxu0 %v588
    %2369 = vmatpush1.msra.mxu0 %v587
    %2370 = vmatprep.subr.mxu0 %v594
    %2371 = vmatpush1.msra.mxu0 %v593
    %2372 = vmatprep.subr.mxu0 %v600
    %2373 = vmatpush1.msra.mxu0 %v599
    %2374 = vmatprep.subr.mxu0 %v606
    %2375 = vmatpush1.msra.mxu0 %v605
    %2376 = vmatprep.subr.mxu0 %v612
    %2377 = vmatpush1.msra.mxu0 %v611
    %2378 = vmatprep.subr.mxu0 %v618
    %2379 = vmatpush1.msra.mxu0 %v617
    %2380 = vmatprep.subr.mxu0 %v624
    %2381 = vmatpush1.msra.mxu0 %v623
    %2382 = vmatprep.subr.mxu0 %v630
    %2383 = vmatpush1.msra.mxu0 %v629
    %2384 = vmatprep.subr.mxu0 %v636
    %2385 = vmatpush1.msra.mxu0 %v635
    %2386 = vmatprep.subr.mxu0 %v642
    %2387 = vmatpush1.msra.mxu0 %v641
    %2388 = vmatprep.subr.mxu0 %v648
    %2389 = vmatpush1.msra.mxu0 %v647
    %2390 = vmatprep.subr.mxu0 %v654
    %2391 = vmatpush1.msra.mxu0 %v653
    %2392 = vmatprep.subr.mxu0 %v660
    %2393 = vmatpush1.msra.mxu0 %v659
    %2394 = vmatprep.subr.mxu0 %v666
    %2395 = vmatpush1.msra.mxu0 %v665
    %2396 = vmatprep.subr.mxu0 %v672
    %2397 = vmatpush1.msra.mxu0 %v671
    %2398 = vmatprep.subr.mxu0 %v678
    %2399 = vmatpush1.msra.mxu0 %v677
    %2400 = vmatprep.subr.mxu0 %v684
    %2401 = vmatpush1.msra.mxu0 %v683
    %2402 = vmatprep.subr.mxu0 %v690
    %2403 = vmatpush1.msra.mxu0 %v689
    %2404 = vmatprep.subr.mxu0 %v696
    %2405 = vmatpush1.msra.mxu0 %v695
    %2406 = vmatprep.subr.mxu0 %v702
    %2407 = vmatpush1.msra.mxu0 %v701
    %2408 = vmatprep.subr.mxu0 %v708
    %2409 = vmatpush1.msra.mxu0 %v707
    %2410 = vmatprep.subr.mxu0 %v714
    %2411 = vmatpush1.msra.mxu0 %v713
    %2412 = vmatprep.subr.mxu0 %v720
    %2413 = vmatpush1.msra.mxu0 %v719
    %2414 = vmatprep.subr.mxu0 %v726
    %2415 = vmatpush1.msra.mxu0 %v725
    %2416 = vmatprep.subr.mxu0 %v732
    %2417 = vmatpush1.msra.mxu0 %v731
    %2418 = vmatprep.mubr.f32.mxu0 %v2344
    %2419 = vmatmul.mubr.f32.gmra.mrb[0].mxu0 %v2343
    %v2420 = vpop.f32.mrb[0].mxu0
    %v2421 = vadd.f32 0.0, %v2420
    %v2422 = vpop.f32.mrb[0].mxu0
    %v2423 = vadd.f32 0.0, %v2422
    %2424 = vdwg.mxu0
    %2425 = vmatprep.subr.mxu0 %v548
    %2426 = vmatpush1.msra.mxu0 %v547
    %2427 = vmatprep.subr.mxu0 %v554
    %2428 = vmatpush1.msra.mxu0 %v553
    %2429 = vmatprep.subr.mxu0 %v560
    %2430 = vmatpush1.msra.mxu0 %v559
    %2431 = vmatprep.subr.mxu0 %v566
    %2432 = vmatpush1.msra.mxu0 %v565
    %2433 = vmatprep.subr.mxu0 %v572
    %2434 = vmatpush1.msra.mxu0 %v571
    %2435 = vmatprep.subr.mxu0 %v578
    %2436 = vmatpush1.msra.mxu0 %v577
    %2437 = vmatprep.subr.mxu0 %v584
    %2438 = vmatpush1.msra.mxu0 %v583
    %2439 = vmatprep.subr.mxu0 %v590
    %2440 = vmatpush1.msra.mxu0 %v589
    %2441 = vmatprep.subr.mxu0 %v596
    %2442 = vmatpush1.msra.mxu0 %v595
    %2443 = vmatprep.subr.mxu0 %v602
    %2444 = vmatpush1.msra.mxu0 %v601
    %2445 = vmatprep.subr.mxu0 %v608
    %2446 = vmatpush1.msra.mxu0 %v607
    %2447 = vmatprep.subr.mxu0 %v614
    %2448 = vmatpush1.msra.mxu0 %v613
    %2449 = vmatprep.subr.mxu0 %v620
    %2450 = vmatpush1.msra.mxu0 %v619
    %2451 = vmatprep.subr.mxu0 %v626
    %2452 = vmatpush1.msra.mxu0 %v625
    %2453 = vmatprep.subr.mxu0 %v632
    %2454 = vmatpush1.msra.mxu0 %v631
    %2455 = vmatprep.subr.mxu0 %v638
    %2456 = vmatpush1.msra.mxu0 %v637
    %2457 = vmatprep.subr.mxu0 %v644
    %2458 = vmatpush1.msra.mxu0 %v643
    %2459 = vmatprep.subr.mxu0 %v650
    %2460 = vmatpush1.msra.mxu0 %v649
    %2461 = vmatprep.subr.mxu0 %v656
    %2462 = vmatpush1.msra.mxu0 %v655
    %2463 = vmatprep.subr.mxu0 %v662
    %2464 = vmatpush1.msra.mxu0 %v661
    %2465 = vmatprep.subr.mxu0 %v668
    %2466 = vmatpush1.msra.mxu0 %v667
    %2467 = vmatprep.subr.mxu0 %v674
    %2468 = vmatpush1.msra.mxu0 %v673
    %2469 = vmatprep.subr.mxu0 %v680
    %2470 = vmatpush1.msra.mxu0 %v679
    %2471 = vmatprep.subr.mxu0 %v686
    %2472 = vmatpush1.msra.mxu0 %v685
    %2473 = vmatprep.subr.mxu0 %v692
    %2474 = vmatpush1.msra.mxu0 %v691
    %2475 = vmatprep.subr.mxu0 %v698
    %2476 = vmatpush1.msra.mxu0 %v697
    %2477 = vmatprep.subr.mxu0 %v704
    %2478 = vmatpush1.msra.mxu0 %v703
    %2479 = vmatprep.subr.mxu0 %v710
    %2480 = vmatpush1.msra.mxu0 %v709
    %2481 = vmatprep.subr.mxu0 %v716
    %2482 = vmatpush1.msra.mxu0 %v715
    %2483 = vmatprep.subr.mxu0 %v722
    %2484 = vmatpush1.msra.mxu0 %v721
    %2485 = vmatprep.subr.mxu0 %v728
    %2486 = vmatpush1.msra.mxu0 %v727
    %2487 = vmatprep.subr.mxu0 %v734
    %2488 = vmatpush1.msra.mxu0 %v733
    %2489 = vmatprep.mubr.f32.mxu0 %v2344
    %2490 = vmatmul.mubr.f32.gmra.mrb[0].mxu0 %v2343
    %v2491 = vpop.f32.mrb[0].mxu0
    %v2492 = vadd.f32 0.0, %v2491
    %v2493 = vpop.f32.mrb[0].mxu0
    %v2494 = vadd.f32 0.0, %v2493
    %2495 = vdwg.mxu0
    %2496 = vmatprep.subr.mxu0 %v550
    %2497 = vmatpush1.msra.mxu0 %v549
    %2498 = vmatprep.subr.mxu0 %v556
    %2499 = vmatpush1.msra.mxu0 %v555
    %2500 = vmatprep.subr.mxu0 %v562
    %2501 = vmatpush1.msra.mxu0 %v561
    %2502 = vmatprep.subr.mxu0 %v568
    %2503 = vmatpush1.msra.mxu0 %v567
    %2504 = vmatprep.subr.mxu0 %v574
    %2505 = vmatpush1.msra.mxu0 %v573
    %2506 = vmatprep.subr.mxu0 %v580
    %2507 = vmatpush1.msra.mxu0 %v579
    %2508 = vmatprep.subr.mxu0 %v586
    %2509 = vmatpush1.msra.mxu0 %v585
    %2510 = vmatprep.subr.mxu0 %v592
    %2511 = vmatpush1.msra.mxu0 %v591
    %2512 = vmatprep.subr.mxu0 %v598
    %2513 = vmatpush1.msra.mxu0 %v597
    %2514 = vmatprep.subr.mxu0 %v604
    %2515 = vmatpush1.msra.mxu0 %v603
    %2516 = vmatprep.subr.mxu0 %v610
    %2517 = vmatpush1.msra.mxu0 %v609
    %2518 = vmatprep.subr.mxu0 %v616
    %2519 = vmatpush1.msra.mxu0 %v615
    %2520 = vmatprep.subr.mxu0 %v622
    %2521 = vmatpush1.msra.mxu0 %v621
    %2522 = vmatprep.subr.mxu0 %v628
    %2523 = vmatpush1.msra.mxu0 %v627
    %2524 = vmatprep.subr.mxu0 %v634
    %2525 = vmatpush1.msra.mxu0 %v633
    %2526 = vmatprep.subr.mxu0 %v640
    %2527 = vmatpush1.msra.mxu0 %v639
    %2528 = vmatprep.subr.mxu0 %v646
    %2529 = vmatpush1.msra.mxu0 %v645
    %2530 = vmatprep.subr.mxu0 %v652
    %2531 = vmatpush1.msra.mxu0 %v651
    %2532 = vmatprep.subr.mxu0 %v658
    %2533 = vmatpush1.msra.mxu0 %v657
    %2534 = vmatprep.subr.mxu0 %v664
    %2535 = vmatpush1.msra.mxu0 %v663
    %2536 = vmatprep.subr.mxu0 %v670
    %2537 = vmatpush1.msra.mxu0 %v669
    %2538 = vmatprep.subr.mxu0 %v676
    %2539 = vmatpush1.msra.mxu0 %v675
    %2540 = vmatprep.subr.mxu0 %v682
    %2541 = vmatpush1.msra.mxu0 %v681
    %2542 = vmatprep.subr.mxu0 %v688
    %2543 = vmatpush1.msra.mxu0 %v687
    %2544 = vmatprep.subr.mxu0 %v694
    %2545 = vmatpush1.msra.mxu0 %v693
    %2546 = vmatprep.subr.mxu0 %v700
    %2547 = vmatpush1.msra.mxu0 %v699
    %2548 = vmatprep.subr.mxu0 %v706
    %2549 = vmatpush1.msra.mxu0 %v705
    %2550 = vmatprep.subr.mxu0 %v712
    %2551 = vmatpush1.msra.mxu0 %v711
    %2552 = vmatprep.subr.mxu0 %v718
    %2553 = vmatpush1.msra.mxu0 %v717
    %2554 = vmatprep.subr.mxu0 %v724
    %2555 = vmatpush1.msra.mxu0 %v723
    %2556 = vmatprep.subr.mxu0 %v730
    %2557 = vmatpush1.msra.mxu0 %v729
    %2558 = vmatprep.subr.mxu0 %v736
    %2559 = vmatpush1.msra.mxu0 %v735
    %2560 = vmatprep.mubr.f32.mxu0 %v2344
    %2561 = vmatmul.mubr.f32.gmra.mrb[0].mxu0 %v2343
    %v2562 = vpop.f32.mrb[0].mxu0
    %v2563 = vadd.f32 0.0, %v2562
    %v2564 = vpop.f32.mrb[0].mxu0
    %v2565 = vadd.f32 0.0, %v2564
    %2566 = vdwg.mxu0
    %v2567 = vadd.f32 %v2348, %v2421
    %v2568 = vadd.f32 %v2349, %v2423
    %v2569 = vxor.u32 %v2567, 2147483648
    %v2570 = vxor.u32 %v2568, 2147483648
    %v2571 = vmul.f32 %v2569, 1.442695
    %v2572 = vpow.pop %v2571
    %v2573 = vmul.f32 %v2570, 1.442695
    %v2574 = vpow.pop %v2573
    %v2575 = vadd.f32 %v2572, 1.0
    %v2576 = vadd.f32 %v2574, 1.0
    %v2577 = vrcp.pop %v2575
    %v2578 = vmul.f32 1.0, %v2577
    %v2579 = vrcp.pop %v2576
    %v2580 = vmul.f32 1.0, %v2579
    %v2581 = vadd.f32 %v2350, %v2492
    %v2582 = vadd.f32 %v2351, %v2494
    %v2583 = vxor.u32 %v2581, 2147483648
    %v2584 = vxor.u32 %v2582, 2147483648
    %v2585 = vmul.f32 %v2583, 1.442695
    %v2586 = vpow.pop %v2585
    %v2587 = vmul.f32 %v2584, 1.442695
    %v2588 = vpow.pop %v2587
    %v2589 = vadd.f32 %v2586, 1.0
    %v2590 = vadd.f32 %v2588, 1.0
    %v2591 = vrcp.pop %v2589
    %v2592 = vmul.f32 1.0, %v2591
    %v2593 = vrcp.pop %v2590
    %v2594 = vmul.f32 1.0, %v2593
    %v2595 = vadd.f32 %v2563, %v742
    %v2596 = vadd.f32 %v2565, %v746
    %v2597 = vmul.f32 %v2578, %v2595
    %v2598 = vmul.f32 %v2580, %v2596
    %v2599 = vadd.f32 %v2352, %v2597
    %v2600 = vadd.f32 %v2353, %v2598
    %v2601 = vtanh.pop %v2599
    %v2602 = vtanh.pop %v2600
    %v2603 = vsub.f32 1.0, %v2592
    %v2604 = vsub.f32 1.0, %v2594
    %v2605 = vmul.f32 %v2603, %v2601
    %v2606 = vmul.f32 %v2604, %v2602
    %v2607 = vmul.f32 %v2592, %v2343
    %v2608 = vmul.f32 %v2594, %v2344
    %v2609 = vadd.f32 %v2605, %v2607
    %v2610 = vadd.f32 %v2606, %v2608
    %s2611 = smul.u32 7, 6
    %s2612 = smul.addr %s2611, 8
    %s2613 = scalar_lea.vmem [#allocation2], %s2612
    %v2614 = vld [vmem:[%s2613] sm:$0xff]
    %v2615 = vld [vmem:[%s2613 + $0x8] sm:$0xff]
    %v2616 = vld [vmem:[%s2613 + $0x10] sm:$0xff]
    %v2617 = vld [vmem:[%s2613 + $0x18] sm:$0xff]
    %v2618 = vld [vmem:[%s2613 + $0x20] sm:$0xff]
    %v2619 = vld [vmem:[%s2613 + $0x28] sm:$0xff]
    %2620 = vmatprep.subr.mxu0 %v546
    %2621 = vmatpush1.msra.mxu0 %v545
    %2622 = vmatprep.subr.mxu0 %v552
    %2623 = vmatpush1.msra.mxu0 %v551
    %2624 = vmatprep.subr.mxu0 %v558
    %2625 = vmatpush1.msra.mxu0 %v557
    %2626 = vmatprep.subr.mxu0 %v564
    %2627 = vmatpush1.msra.mxu0 %v563
    %2628 = vmatprep.subr.mxu0 %v570
    %2629 = vmatpush1.msra.mxu0 %v569
    %2630 = vmatprep.subr.mxu0 %v576
    %2631 = vmatpush1.msra.mxu0 %v575
    %2632 = vmatprep.subr.mxu0 %v582
    %2633 = vmatpush1.msra.mxu0 %v581
    %2634 = vmatprep.subr.mxu0 %v588
    %2635 = vmatpush1.msra.mxu0 %v587
    %2636 = vmatprep.subr.mxu0 %v594
    %2637 = vmatpush1.msra.mxu0 %v593
    %2638 = vmatprep.subr.mxu0 %v600
    %2639 = vmatpush1.msra.mxu0 %v599
    %2640 = vmatprep.subr.mxu0 %v606
    %2641 = vmatpush1.msra.mxu0 %v605
    %2642 = vmatprep.subr.mxu0 %v612
    %2643 = vmatpush1.msra.mxu0 %v611
    %2644 = vmatprep.subr.mxu0 %v618
    %2645 = vmatpush1.msra.mxu0 %v617
    %2646 = vmatprep.subr.mxu0 %v624
    %2647 = vmatpush1.msra.mxu0 %v623
    %2648 = vmatprep.subr.mxu0 %v630
    %2649 = vmatpush1.msra.mxu0 %v629
    %2650 = vmatprep.subr.mxu0 %v636
    %2651 = vmatpush1.msra.mxu0 %v635
    %2652 = vmatprep.subr.mxu0 %v642
    %2653 = vmatpush1.msra.mxu0 %v641
    %2654 = vmatprep.subr.mxu0 %v648
    %2655 = vmatpush1.msra.mxu0 %v647
    %2656 = vmatprep.subr.mxu0 %v654
    %2657 = vmatpush1.msra.mxu0 %v653
    %2658 = vmatprep.subr.mxu0 %v660
    %2659 = vmatpush1.msra.mxu0 %v659
    %2660 = vmatprep.subr.mxu0 %v666
    %2661 = vmatpush1.msra.mxu0 %v665
    %2662 = vmatprep.subr.mxu0 %v672
    %2663 = vmatpush1.msra.mxu0 %v671
    %2664 = vmatprep.subr.mxu0 %v678
    %2665 = vmatpush1.msra.mxu0 %v677
    %2666 = vmatprep.subr.mxu0 %v684
    %2667 = vmatpush1.msra.mxu0 %v683
    %2668 = vmatprep.subr.mxu0 %v690
    %2669 = vmatpush1.msra.mxu0 %v689
    %2670 = vmatprep.subr.mxu0 %v696
    %2671 = vmatpush1.msra.mxu0 %v695
    %2672 = vmatprep.subr.mxu0 %v702
    %2673 = vmatpush1.msra.mxu0 %v701
    %2674 = vmatprep.subr.mxu0 %v708
    %2675 = vmatpush1.msra.mxu0 %v707
    %2676 = vmatprep.subr.mxu0 %v714
    %2677 = vmatpush1.msra.mxu0 %v713
    %2678 = vmatprep.subr.mxu0 %v720
    %2679 = vmatpush1.msra.mxu0 %v719
    %2680 = vmatprep.subr.mxu0 %v726
    %2681 = vmatpush1.msra.mxu0 %v725
    %2682 = vmatprep.subr.mxu0 %v732
    %2683 = vmatpush1.msra.mxu0 %v731
    %2684 = vmatprep.mubr.f32.mxu0 %v2610
    %2685 = vmatmul.mubr.f32.gmra.mrb[0].mxu0 %v2609
    %v2686 = vpop.f32.mrb[0].mxu0
    %v2687 = vadd.f32 0.0, %v2686
    %v2688 = vpop.f32.mrb[0].mxu0
    %v2689 = vadd.f32 0.0, %v2688
    %2690 = vdwg.mxu0
    %2691 = vmatprep.subr.mxu0 %v548
    %2692 = vmatpush1.msra.mxu0 %v547
    %2693 = vmatprep.subr.mxu0 %v554
    %2694 = vmatpush1.msra.mxu0 %v553
    %2695 = vmatprep.subr.mxu0 %v560
    %2696 = vmatpush1.msra.mxu0 %v559
    %2697 = vmatprep.subr.mxu0 %v566
    %2698 = vmatpush1.msra.mxu0 %v565
    %2699 = vmatprep.subr.mxu0 %v572
    %2700 = vmatpush1.msra.mxu0 %v571
    %2701 = vmatprep.subr.mxu0 %v578
    %2702 = vmatpush1.msra.mxu0 %v577
    %2703 = vmatprep.subr.mxu0 %v584
    %2704 = vmatpush1.msra.mxu0 %v583
    %2705 = vmatprep.subr.mxu0 %v590
    %2706 = vmatpush1.msra.mxu0 %v589
    %2707 = vmatprep.subr.mxu0 %v596
    %2708 = vmatpush1.msra.mxu0 %v595
    %2709 = vmatprep.subr.mxu0 %v602
    %2710 = vmatpush1.msra.mxu0 %v601
    %2711 = vmatprep.subr.mxu0 %v608
    %2712 = vmatpush1.msra.mxu0 %v607
    %2713 = vmatprep.subr.mxu0 %v614
    %2714 = vmatpush1.msra.mxu0 %v613
    %2715 = vmatprep.subr.mxu0 %v620
    %2716 = vmatpush1.msra.mxu0 %v619
    %2717 = vmatprep.subr.mxu0 %v626
    %2718 = vmatpush1.msra.mxu0 %v625
    %2719 = vmatprep.subr.mxu0 %v632
    %2720 = vmatpush1.msra.mxu0 %v631
    %2721 = vmatprep.subr.mxu0 %v638
    %2722 = vmatpush1.msra.mxu0 %v637
    %2723 = vmatprep.subr.mxu0 %v644
    %2724 = vmatpush1.msra.mxu0 %v643
    %2725 = vmatprep.subr.mxu0 %v650
    %2726 = vmatpush1.msra.mxu0 %v649
    %2727 = vmatprep.subr.mxu0 %v656
    %2728 = vmatpush1.msra.mxu0 %v655
    %2729 = vmatprep.subr.mxu0 %v662
    %2730 = vmatpush1.msra.mxu0 %v661
    %2731 = vmatprep.subr.mxu0 %v668
    %2732 = vmatpush1.msra.mxu0 %v667
    %2733 = vmatprep.subr.mxu0 %v674
    %2734 = vmatpush1.msra.mxu0 %v673
    %2735 = vmatprep.subr.mxu0 %v680
    %2736 = vmatpush1.msra.mxu0 %v679
    %2737 = vmatprep.subr.mxu0 %v686
    %2738 = vmatpush1.msra.mxu0 %v685
    %2739 = vmatprep.subr.mxu0 %v692
    %2740 = vmatpush1.msra.mxu0 %v691
    %2741 = vmatprep.subr.mxu0 %v698
    %2742 = vmatpush1.msra.mxu0 %v697
    %2743 = vmatprep.subr.mxu0 %v704
    %2744 = vmatpush1.msra.mxu0 %v703
    %2745 = vmatprep.subr.mxu0 %v710
    %2746 = vmatpush1.msra.mxu0 %v709
    %2747 = vmatprep.subr.mxu0 %v716
    %2748 = vmatpush1.msra.mxu0 %v715
    %2749 = vmatprep.subr.mxu0 %v722
    %2750 = vmatpush1.msra.mxu0 %v721
    %2751 = vmatprep.subr.mxu0 %v728
    %2752 = vmatpush1.msra.mxu0 %v727
    %2753 = vmatprep.subr.mxu0 %v734
    %2754 = vmatpush1.msra.mxu0 %v733
    %2755 = vmatprep.mubr.f32.mxu0 %v2610
    %2756 = vmatmul.mubr.f32.gmra.mrb[0].mxu0 %v2609
    %v2757 = vpop.f32.mrb[0].mxu0
    %v2758 = vadd.f32 0.0, %v2757
    %v2759 = vpop.f32.mrb[0].mxu0
    %v2760 = vadd.f32 0.0, %v2759
    %2761 = vdwg.mxu0
    %2762 = vmatprep.subr.mxu0 %v550
    %2763 = vmatpush1.msra.mxu0 %v549
    %2764 = vmatprep.subr.mxu0 %v556
    %2765 = vmatpush1.msra.mxu0 %v555
    %2766 = vmatprep.subr.mxu0 %v562
    %2767 = vmatpush1.msra.mxu0 %v561
    %2768 = vmatprep.subr.mxu0 %v568
    %2769 = vmatpush1.msra.mxu0 %v567
    %2770 = vmatprep.subr.mxu0 %v574
    %2771 = vmatpush1.msra.mxu0 %v573
    %2772 = vmatprep.subr.mxu0 %v580
    %2773 = vmatpush1.msra.mxu0 %v579
    %2774 = vmatprep.subr.mxu0 %v586
    %2775 = vmatpush1.msra.mxu0 %v585
    %2776 = vmatprep.subr.mxu0 %v592
    %2777 = vmatpush1.msra.mxu0 %v591
    %2778 = vmatprep.subr.mxu0 %v598
    %2779 = vmatpush1.msra.mxu0 %v597
    %2780 = vmatprep.subr.mxu0 %v604
    %2781 = vmatpush1.msra.mxu0 %v603
    %2782 = vmatprep.subr.mxu0 %v610
    %2783 = vmatpush1.msra.mxu0 %v609
    %2784 = vmatprep.subr.mxu0 %v616
    %2785 = vmatpush1.msra.mxu0 %v615
    %2786 = vmatprep.subr.mxu0 %v622
    %2787 = vmatpush1.msra.mxu0 %v621
    %2788 = vmatprep.subr.mxu0 %v628
    %2789 = vmatpush1.msra.mxu0 %v627
    %2790 = vmatprep.subr.mxu0 %v634
    %2791 = vmatpush1.msra.mxu0 %v633
    %2792 = vmatprep.subr.mxu0 %v640
    %2793 = vmatpush1.msra.mxu0 %v639
    %2794 = vmatprep.subr.mxu0 %v646
    %2795 = vmatpush1.msra.mxu0 %v645
    %2796 = vmatprep.subr.mxu0 %v652
    %2797 = vmatpush1.msra.mxu0 %v651
    %2798 = vmatprep.subr.mxu0 %v658
    %2799 = vmatpush1.msra.mxu0 %v657
    %2800 = vmatprep.subr.mxu0 %v664
    %2801 = vmatpush1.msra.mxu0 %v663
    %2802 = vmatprep.subr.mxu0 %v670
    %2803 = vmatpush1.msra.mxu0 %v669
    %2804 = vmatprep.subr.mxu0 %v676
    %2805 = vmatpush1.msra.mxu0 %v675
    %2806 = vmatprep.subr.mxu0 %v682
    %2807 = vmatpush1.msra.mxu0 %v681
    %2808 = vmatprep.subr.mxu0 %v688
    %2809 = vmatpush1.msra.mxu0 %v687
    %2810 = vmatprep.subr.mxu0 %v694
    %2811 = vmatpush1.msra.mxu0 %v693
    %2812 = vmatprep.subr.mxu0 %v700
    %2813 = vmatpush1.msra.mxu0 %v699
    %2814 = vmatprep.subr.mxu0 %v706
    %2815 = vmatpush1.msra.mxu0 %v705
    %2816 = vmatprep.subr.mxu0 %v712
    %2817 = vmatpush1.msra.mxu0 %v711
    %2818 = vmatprep.subr.mxu0 %v718
    %2819 = vmatpush1.msra.mxu0 %v717
    %2820 = vmatprep.subr.mxu0 %v724
    %2821 = vmatpush1.msra.mxu0 %v723
    %2822 = vmatprep.subr.mxu0 %v730
    %2823 = vmatpush1.msra.mxu0 %v729
    %2824 = vmatprep.subr.mxu0 %v736
    %2825 = vmatpush1.msra.mxu0 %v735
    %2826 = vmatprep.mubr.f32.mxu0 %v2610
    %2827 = vmatmul.mubr.f32.gmra.mrb[0].mxu0 %v2609
    %v2828 = vpop.f32.mrb[0].mxu0
    %v2829 = vadd.f32 0.0, %v2828
    %v2830 = vpop.f32.mrb[0].mxu0
    %v2831 = vadd.f32 0.0, %v2830
    %2832 = vdwg.mxu0
    %v2833 = vadd.f32 %v2614, %v2687
    %v2834 = vadd.f32 %v2615, %v2689
    %v2835 = vxor.u32 %v2833, 2147483648
    %v2836 = vxor.u32 %v2834, 2147483648
    %v2837 = vmul.f32 %v2835, 1.442695
    %v2838 = vpow.pop %v2837
    %v2839 = vmul.f32 %v2836, 1.442695
    %v2840 = vpow.pop %v2839
    %v2841 = vadd.f32 %v2838, 1.0
    %v2842 = vadd.f32 %v2840, 1.0
    %v2843 = vrcp.pop %v2841
    %v2844 = vmul.f32 1.0, %v2843
    %v2845 = vrcp.pop %v2842
    %v2846 = vmul.f32 1.0, %v2845
    %v2847 = vadd.f32 %v2616, %v2758
    %v2848 = vadd.f32 %v2617, %v2760
    %v2849 = vxor.u32 %v2847, 2147483648
    %v2850 = vxor.u32 %v2848, 2147483648
    %v2851 = vmul.f32 %v2849, 1.442695
    %v2852 = vpow.pop %v2851
    %v2853 = vmul.f32 %v2850, 1.442695
    %v2854 = vpow.pop %v2853
    %v2855 = vadd.f32 %v2852, 1.0
    %v2856 = vadd.f32 %v2854, 1.0
    %v2857 = vrcp.pop %v2855
    %v2858 = vmul.f32 1.0, %v2857
    %v2859 = vrcp.pop %v2856
    %v2860 = vmul.f32 1.0, %v2859
    %v2861 = vadd.f32 %v2829, %v742
    %v2862 = vadd.f32 %v2831, %v746
    %v2863 = vmul.f32 %v2844, %v2861
    %v2864 = vmul.f32 %v2846, %v2862
    %v2865 = vadd.f32 %v2618, %v2863
    %v2866 = vadd.f32 %v2619, %v2864
    %v2867 = vtanh.pop %v2865
    %v2868 = vtanh.pop %v2866
    %v2869 = vsub.f32 1.0, %v2858
    %v2870 = vsub.f32 1.0, %v2860
    %v2871 = vmul.f32 %v2869, %v2867
    %v2872 = vmul.f32 %v2870, %v2868
    %v2873 = vmul.f32 %v2858, %v2609
    %v2874 = vmul.f32 %v2860, %v2610
    %v2875 = vadd.f32 %v2871, %v2873
    %v2876 = vadd.f32 %v2872, %v2874
    %v2877 = vpack.c.bf16 %v2875, %v2875
    %v2878 = vpack.c.bf16 %v2876, %v2876
    %v2879 = vld [vmem:[#allocation8] sm:$0xf]
    %v2880 = vld [vmem:[#allocation8 + $0x4] sm:$0xf]
    %v2881 = vld [vmem:[#allocation8 + $0x8] sm:$0xf]
    %v2882 = vld [vmem:[#allocation8 + $0xc] sm:$0xf]
    %v2883 = vld [vmem:[#allocation8 + $0x10] sm:$0xf]
    %v2884 = vld [vmem:[#allocation8 + $0x14] sm:$0xf]
    %v2885 = vld [vmem:[#allocation8 + $0x18] sm:$0xf]
    %v2886 = vld [vmem:[#allocation8 + $0x1c] sm:$0xf]
    %v2887 = vld [vmem:[#allocation8 + $0x20] sm:$0xf]
    %v2888 = vld [vmem:[#allocation8 + $0x24] sm:$0xf]
    %v2889 = vld [vmem:[#allocation8 + $0x28] sm:$0xf]
    %v2890 = vld [vmem:[#allocation8 + $0x2c] sm:$0xf]
    %v2891 = vld [vmem:[#allocation8 + $0x30] sm:$0xf]
    %v2892 = vld [vmem:[#allocation8 + $0x34] sm:$0xf]
    %v2893 = vld [vmem:[#allocation8 + $0x38] sm:$0xf]
    %v2894 = vld [vmem:[#allocation8 + $0x3c] sm:$0xf]
    %v2895 = vld [vmem:[#allocation8 + $0x40] sm:$0xf]
    %v2896 = vld [vmem:[#allocation8 + $0x44] sm:$0xf]
    %v2897 = vld [vmem:[#allocation8 + $0x48] sm:$0xf]
    %v2898 = vld [vmem:[#allocation8 + $0x4c] sm:$0xf]
    %v2899 = vld [vmem:[#allocation8 + $0x50] sm:$0xf]
    %v2900 = vld [vmem:[#allocation8 + $0x54] sm:$0xf]
    %v2901 = vld [vmem:[#allocation8 + $0x58] sm:$0xf]
    %v2902 = vld [vmem:[#allocation8 + $0x5c] sm:$0xf]
    %v2903 = vld [vmem:[#allocation8 + $0x60] sm:$0xf]
    %v2904 = vld [vmem:[#allocation8 + $0x64] sm:$0xf]
    %v2905 = vld [vmem:[#allocation8 + $0x68] sm:$0xf]
    %v2906 = vld [vmem:[#allocation8 + $0x6c] sm:$0xf]
    %v2907 = vld [vmem:[#allocation8 + $0x70] sm:$0xf]
    %v2908 = vld [vmem:[#allocation8 + $0x74] sm:$0xf]
    %v2909 = vld [vmem:[#allocation8 + $0x78] sm:$0xf]
    %v2910 = vld [vmem:[#allocation8 + $0x7c] sm:$0xf]
    %v2911 = vld [vmem:[%s6] sm:$0x1]
    %v2913 = vlaneseq
    %v2914 = vshrl.u32 %v2913, 7
    %v2915 = vsub.s32 0, %v2914
    %v2916 = vrot.slane %v2911, %v2915
    %v2950 = vunpack.c.l.b16 %v2879
    %v2951 = vunpack.c.l.b16 %v2880
    %v2952 = vunpack.c.l.b16 %v2881
    %v2953 = vunpack.c.l.b16 %v2882
    %v2954 = vunpack.c.l.b16 %v2883
    %v2955 = vunpack.c.l.b16 %v2884
    %v2956 = vunpack.c.l.b16 %v2885
    %v2957 = vunpack.c.l.b16 %v2886
    %v2958 = vunpack.c.l.b16 %v2887
    %v2959 = vunpack.c.l.b16 %v2888
    %v2960 = vunpack.c.l.b16 %v2889
    %v2961 = vunpack.c.l.b16 %v2890
    %v2962 = vunpack.c.l.b16 %v2891
    %v2963 = vunpack.c.l.b16 %v2892
    %v2964 = vunpack.c.l.b16 %v2893
    %v2965 = vunpack.c.l.b16 %v2894
    %v2966 = vunpack.c.l.b16 %v2895
    %v2967 = vunpack.c.l.b16 %v2896
    %v2968 = vunpack.c.l.b16 %v2897
    %v2969 = vunpack.c.l.b16 %v2898
    %v2970 = vunpack.c.l.b16 %v2899
    %v2971 = vunpack.c.l.b16 %v2900
    %v2972 = vunpack.c.l.b16 %v2901
    %v2973 = vunpack.c.l.b16 %v2902
    %v2974 = vunpack.c.l.b16 %v2903
    %v2975 = vunpack.c.l.b16 %v2904
    %v2976 = vunpack.c.l.b16 %v2905
    %v2977 = vunpack.c.l.b16 %v2906
    %v2978 = vunpack.c.l.b16 %v2907
    %v2979 = vunpack.c.l.b16 %v2908
    %v2980 = vunpack.c.l.b16 %v2909
    %v2981 = vunpack.c.l.b16 %v2910
    %v2982 = vpack.c.b16 %v2951, %v2950
    %v2983 = vpack.c.b16 %v2953, %v2952
    %v2984 = vpack.c.b16 %v2955, %v2954
    %v2985 = vpack.c.b16 %v2957, %v2956
    %v2986 = vpack.c.b16 %v2959, %v2958
    %v2987 = vpack.c.b16 %v2961, %v2960
    %v2988 = vpack.c.b16 %v2963, %v2962
    %v2989 = vpack.c.b16 %v2965, %v2964
    %v2990 = vpack.c.b16 %v2967, %v2966
    %v2991 = vpack.c.b16 %v2969, %v2968
    %v2992 = vpack.c.b16 %v2971, %v2970
    %v2993 = vpack.c.b16 %v2973, %v2972
    %v2994 = vpack.c.b16 %v2975, %v2974
    %v2995 = vpack.c.b16 %v2977, %v2976
    %v2996 = vpack.c.b16 %v2979, %v2978
    %v2997 = vpack.c.b16 %v2981, %v2980
    %3014 = vmatprep.subr.bf16.mxu0 0
    %3015 = vmatpush1.bf16.msra.mxu0 %v2982
    %3016 = vmatprep.subr.bf16.mxu0 0
    %3017 = vmatpush1.bf16.msra.mxu0 %v2983
    %3018 = vmatprep.subr.bf16.mxu0 0
    %3019 = vmatpush1.bf16.msra.mxu0 %v2984
    %3020 = vmatprep.subr.bf16.mxu0 0
    %3021 = vmatpush1.bf16.msra.mxu0 %v2985
    %3022 = vmatprep.subr.bf16.mxu0 0
    %3023 = vmatpush1.bf16.msra.mxu0 %v2986
    %3024 = vmatprep.subr.bf16.mxu0 0
    %3025 = vmatpush1.bf16.msra.mxu0 %v2987
    %3026 = vmatprep.subr.bf16.mxu0 0
    %3027 = vmatpush1.bf16.msra.mxu0 %v2988
    %3028 = vmatprep.subr.bf16.mxu0 0
    %3029 = vmatpush1.bf16.msra.mxu0 %v2989
    %3030 = vmatprep.subr.bf16.mxu0 0
    %3031 = vmatpush1.bf16.msra.mxu0 %v2990
    %3032 = vmatprep.subr.bf16.mxu0 0
    %3033 = vmatpush1.bf16.msra.mxu0 %v2991
    %3034 = vmatprep.subr.bf16.mxu0 0
    %3035 = vmatpush1.bf16.msra.mxu0 %v2992
    %3036 = vmatprep.subr.bf16.mxu0 0
    %3037 = vmatpush1.bf16.msra.mxu0 %v2993
    %3038 = vmatprep.subr.bf16.mxu0 0
    %3039 = vmatpush1.bf16.msra.mxu0 %v2994
    %3040 = vmatprep.subr.bf16.mxu0 0
    %3041 = vmatpush1.bf16.msra.mxu0 %v2995
    %3042 = vmatprep.subr.bf16.mxu0 0
    %3043 = vmatpush1.bf16.msra.mxu0 %v2996
    %3044 = vmatprep.subr.bf16.mxu0 0
    %3045 = vmatpush1.bf16.msra.mxu0 %v2997
    %3046 = vmatprep.mubr.bf16.mxu0 %v2878
    %3047 = vmatmul.mubr.bf16.gmra.mrb[0].mxu0 %v2877
    %v3048 = vpop.f32.mrb[0].mxu0
    %v3049 = vadd.f32 %v2916, %v3048
    %v3050 = vpop.f32.mrb[0].mxu0
    %v3051 = vpop.f32.mrb[0].mxu0
    %v3052 = vpop.f32.mrb[0].mxu0
    %3053 = vdwg.mxu0
    %3054 = vst [vmem:[#allocation9] sm:$0xff] %v3049
    // Predicated region
    $region42: #{tpu_custom_call.1} parent=1 // pred_check
      _
    $region43: #{tpu_custom_call.1} parent=1 // pred_check_branch
      %3056 = sbr.rel (0) target = $region45
    $region44: #{tpu_custom_call.1} parent=1 // pred_region
      %s3058 = ssub.s32 128, 128
      %3059 = vsyncadd [#allocation5], %s3058
      %s3061 = sshll.u32 [#allocation9], 4
      %s3062 = int_to_ptr.vmem [resolvable:$true] %s3061
      %3064 = dma.vmem_to_hbm [thread:$0]  %s3062, 128, %s7, [#allocation5]
    $region45: #{tpu_custom_call.1} parent=1 // pred_fallthru
      _
    // Predicated region
    $region46: #{tpu_custom_call.1} parent=1 // pred_check
      _
    $region47: #{tpu_custom_call.1} parent=1 // pred_check_branch
      %3066 = sbr.rel (0) target = $region49
    $region48: #{tpu_custom_call.1} parent=1 // pred_region
      %3067 = dma.done [#allocation5], 128
    $region49: #{tpu_custom_call.1} parent=1 // pred_fallthru
      _
    %3068 = vsyncpa [#allocation4], 1
    %3069 = vsyncpa [#allocation7], 1
    %3070 = vsyncpa [#allocation5], 1

</llo_original>
